<compile_context>
chip_gen: v5e
topology: v5e:2x2
jax: 0.10.0
libtpu: 0.0.40
codegen_flags: <defaults>
</compile_context>

<pallas_src>
import jax
import jax.numpy as jnp
from jax.experimental import pallas as pl
from jax.experimental.pallas import tpu as pltpu

NEG_SLOPE = 0.1
_LANE = 128


def _leaky_relu(x, slope=NEG_SLOPE):
    return jnp.where(x > 0, x, slope * x)


def _round_up(x, m):
    return ((x + m - 1) // m) * m


def encoder_kernel(
    x_ref,
    w1_ref, b1_ref,
    w2_ref, b2_ref,
    w3_ref, b3_ref,
    w4_ref, b4_ref,
    wh_ref, bh_ref,
    out_ref,
):
    # x tile: [TB, D] f32.  Weights bf16 [in, out]; biases f32 [1, out].
    h = x_ref[...].astype(jnp.bfloat16)

    # Linear(input_dim, 512) + LeakyReLU(0.1)
    h = jnp.dot(h, w1_ref[...], preferred_element_type=jnp.float32) + b1_ref[...]
    h = _leaky_relu(h).astype(jnp.bfloat16)

    # Linear(512, 384) + LeakyReLU(0.1)
    h = jnp.dot(h, w2_ref[...], preferred_element_type=jnp.float32) + b2_ref[...]
    h = _leaky_relu(h).astype(jnp.bfloat16)

    # Dropout(p=0.1): identity in eval mode.
    # TODO(synk): training-mode dropout (random mask) not implemented; eval semantics.

    # Linear(384, 256) + LeakyReLU(0.1)
    h = jnp.dot(h, w3_ref[...], preferred_element_type=jnp.float32) + b3_ref[...]
    h = _leaky_relu(h).astype(jnp.bfloat16)

    # Linear(256, 256) + LeakyReLU(0.1)
    h = jnp.dot(h, w4_ref[...], preferred_element_type=jnp.float32) + b4_ref[...]
    h = _leaky_relu(h).astype(jnp.bfloat16)

    # Fused mu|logvar heads: single [256, latent2_pad] matmul, one lane-dense store.
    out_ref[...] = (
        jnp.dot(h, wh_ref[...], preferred_element_type=jnp.float32) + bh_ref[...]
    )


def encoder_forward(x, params, latent_dim, *, tb=512):
    """x: [B, C, H, W] float32.  Returns (mu, logvar), each [B, latent_dim]."""
    B = x.shape[0]
    x2d = x.reshape(B, -1).astype(jnp.float32)   # same as torch .view(B, -1)
    D = x2d.shape[1]
    latent2 = 2 * latent_dim
    latent2_pad = params["wh"].shape[1]          # zero-padded to a 128-lane multiple

    # ---- batch tile selection (no input padding; ragged last block) ----
    if B <= 8:
        # Block dim equal to the full array dim: always legal, no edge masking.
        tb_eff = B
    else:
        tb_eff = min(tb, _round_up(B, 8))
        # v7x: prefer >= 2 grid steps so both TensorCores get work.
        if pl.cdiv(B, tb_eff) < 2:
            tb_eff = max(8, _round_up(pl.cdiv(B, 2), 8))
    n_tiles = pl.cdiv(B, tb_eff)

    def resident(arr):
        # Full-array block with a constant index_map: DMA'd once, stays in
        # VMEM across all batch tiles.
        return pl.BlockSpec(arr.shape, lambda i: (0, 0))

    in_specs = [
        pl.BlockSpec((tb_eff, D), lambda i: (i, 0)),      # x batch tile
        resident(params["w1"]), resident(params["b1"]),
        resident(params["w2"]), resident(params["b2"]),
        resident(params["w3"]), resident(params["b3"]),
        resident(params["w4"]), resident(params["b4"]),
        resident(params["wh"]), resident(params["bh"]),
    ]
    out_spec = pl.BlockSpec((tb_eff, latent2_pad), lambda i: (i, 0))

    # ---- advisory cost + explicit scoped-VMEM limit (v5e default is 16 MiB) ----
    param_bytes = sum(int(v.size) * int(v.dtype.itemsize) for v in params.values())
    flops = 2 * B * (D * 512 + 512 * 384 + 384 * 256 + 256 * 256
                     + 256 * latent2_pad)
    bytes_accessed = x2d.size * 4 + param_bytes + B * latent2_pad * 4
    vmem_need = (2 * tb_eff * D * 4            # x double buffer (f32)
                 + 2 * param_bytes             # resident weights (double-buffered)
                 + 2 * tb_eff * latent2_pad * 4)  # out double buffer
    vmem_limit = int(min(max(vmem_need + (8 << 20), 32 << 20), 64 << 20))

    fused = pl.pallas_call(
        encoder_kernel,
        out_shape=jax.ShapeDtypeStruct((B, latent2_pad), jnp.float32),
        grid=(n_tiles,),
        in_specs=in_specs,
        out_specs=out_spec,
        compiler_params=pltpu.CompilerParams(
            dimension_semantics=("parallel",),    # v7x: both TensorCores
            vmem_limit_bytes=vmem_limit,
        ),
        cost_estimate=pl.CostEstimate(
            flops=int(flops), transcendentals=0,
            bytes_accessed=int(bytes_accessed)),
    )(
        x2d,
        params["w1"], params["b1"],
        params["w2"], params["b2"],
        params["w3"], params["b3"],
        params["w4"], params["b4"],
        params["wh"], params["bh"],
    )

    mu = fused[:, :latent_dim]
    logvar = fused[:, latent_dim:latent2]
    return mu, logvar


def init_params(key, input_dim, latent_dim):
    """Deterministic synthetic init matching torch.nn.Linear's default scale.
    Weights stored [in, out] (transposed vs torch) in bf16; biases [1, out] f32.
    The two heads are fused into wh=[256, latent2_pad], bh=[1, latent2_pad],
    zero-padded up to a multiple of 128 lanes (extra columns are sliced off)."""
    dims = [
        ("w1", "b1", input_dim, 512),
        ("w2", "b2", 512, 384),
        ("w3", "b3", 384, 256),
        ("w4", "b4", 256, 256),
        ("wmu", "bmu", 256, latent_dim),
        ("wlv", "blv", 256, latent_dim),
    ]
    raw = {}
    for wname, bname, fan_in, fan_out in dims:
        key, kw, kb = jax.random.split(key, 3)
        bound = 1.0 / jnp.sqrt(fan_in)
        raw[wname] = jax.random.uniform(
            kw, (fan_in, fan_out), jnp.float32, -bound, bound)
        raw[bname] = jax.random.uniform(
            kb, (1, fan_out), jnp.float32, -bound, bound)

    latent2 = 2 * latent_dim
    latent2_pad = _round_up(latent2, _LANE)
    wh = jnp.concatenate([raw["wmu"], raw["wlv"]], axis=1)
    bh = jnp.concatenate([raw["bmu"], raw["blv"]], axis=1)
    if latent2_pad != latent2:
        wh = jnp.pad(wh, ((0, 0), (0, latent2_pad - latent2)))
        bh = jnp.pad(bh, ((0, 0), (0, latent2_pad - latent2)))

    params = {
        "w1": raw["w1"].astype(jnp.bfloat16), "b1": raw["b1"],
        "w2": raw["w2"].astype(jnp.bfloat16), "b2": raw["b2"],
        "w3": raw["w3"].astype(jnp.bfloat16), "b3": raw["b3"],
        "w4": raw["w4"].astype(jnp.bfloat16), "b4": raw["b4"],
        "wh": wh.astype(jnp.bfloat16),
        "bh": bh,
    }
    return params


def reference_forward(x, params, latent_dim):
    """Pure-JAX reference mirroring the kernel's bf16/f32 mixed precision."""
    h = x.reshape(x.shape[0], -1).astype(jnp.float32)
    for w, b in [("w1", "b1"), ("w2", "b2"), ("w3", "b3"), ("w4", "b4")]:
        h = jnp.dot(h.astype(jnp.bfloat16), params[w],
                    preferred_element_type=jnp.float32) + params[b]
        h = _leaky_relu(h)
    out = jnp.dot(h.astype(jnp.bfloat16), params["wh"],
                  preferred_element_type=jnp.float32) + params["bh"]
    return out[:, :latent_dim], out[:, latent_dim:2 * latent_dim]


if __name__ == "__main__":
    key = jax.random.PRNGKey(0)
    kx, kp = jax.random.split(key)

    # Small shapes consistent with the module: x [B, C, H, W] flattened.
    B, C, H, W = 2, 4, 16, 16
    input_dim = C * H * W          # 1024
    latent_dim = 32

    x = jax.random.normal(kx, (B, C, H, W), jnp.float32)
    params = init_params(kp, input_dim, latent_dim)

    mu, logvar = encoder_forward(x, params, latent_dim)
    mu = jax.block_until_ready(mu)
    logvar = jax.block_until_ready(logvar)

    # Correctness check against a pure-JAX reference with identical precision.
    mu_ref, lv_ref = reference_forward(x, params, latent_dim)
    assert mu.shape == (B, latent_dim) and logvar.shape == (B, latent_dim)
    assert jnp.allclose(mu, mu_ref, atol=2e-2, rtol=2e-2)
    assert jnp.allclose(logvar, lv_ref, atol=2e-2, rtol=2e-2)

    print("KERNEL_OK")
</pallas_src>

<mosaic_0001>
module attributes {stable_mosaic.version = 11 : i64} {
  func.func @encoder_kernel(%arg0: i32, %arg1: memref<2x1024xf32, #tpu.memory_space<vmem>>, %arg2: memref<1024x512xbf16, #tpu.memory_space<vmem>>, %arg3: memref<1x512xf32, #tpu.memory_space<vmem>>, %arg4: memref<512x384xbf16, #tpu.memory_space<vmem>>, %arg5: memref<1x384xf32, #tpu.memory_space<vmem>>, %arg6: memref<384x256xbf16, #tpu.memory_space<vmem>>, %arg7: memref<1x256xf32, #tpu.memory_space<vmem>>, %arg8: memref<256x256xbf16, #tpu.memory_space<vmem>>, %arg9: memref<1x256xf32, #tpu.memory_space<vmem>>, %arg10: memref<256x128xbf16, #tpu.memory_space<vmem>>, %arg11: memref<1x128xf32, #tpu.memory_space<vmem>>, %arg12: memref<2x128xf32, #tpu.memory_space<vmem>>) attributes {dimension_semantics = [#tpu.dimension_semantics<parallel>], iteration_bounds = array<i64: 1>, scalar_prefetch = 0 : i64, scratch_operands = 0 : i64, tpu.core_type = #tpu.core_type<tc>, window_params = [{transform_indices = @transform_0, window_bounds = array<i64: 2, 1024>}, {pipeline_mode = #tpu.pipeline_mode<synchronous>, transform_indices = @transform_1, window_bounds = array<i64: 1024, 512>}, {pipeline_mode = #tpu.pipeline_mode<synchronous>, transform_indices = @transform_2, window_bounds = array<i64: 1, 512>}, {pipeline_mode = #tpu.pipeline_mode<synchronous>, transform_indices = @transform_3, window_bounds = array<i64: 512, 384>}, {pipeline_mode = #tpu.pipeline_mode<synchronous>, transform_indices = @transform_4, window_bounds = array<i64: 1, 384>}, {pipeline_mode = #tpu.pipeline_mode<synchronous>, transform_indices = @transform_5, window_bounds = array<i64: 384, 256>}, {pipeline_mode = #tpu.pipeline_mode<synchronous>, transform_indices = @transform_6, window_bounds = array<i64: 1, 256>}, {pipeline_mode = #tpu.pipeline_mode<synchronous>, transform_indices = @transform_7, window_bounds = array<i64: 256, 256>}, {pipeline_mode = #tpu.pipeline_mode<synchronous>, transform_indices = @transform_8, window_bounds = array<i64: 1, 256>}, {pipeline_mode = #tpu.pipeline_mode<synchronous>, transform_indices = @transform_9, window_bounds = array<i64: 256, 128>}, {pipeline_mode = #tpu.pipeline_mode<synchronous>, transform_indices = @transform_10, window_bounds = array<i64: 1, 128>}, {transform_indices = @transform_11, window_bounds = array<i64: 2, 128>}]} {
    %c0 = arith.constant 0 : index
    %c0_0 = arith.constant 0 : index
    %0 = vector.load %arg1[%c0, %c0_0] : memref<2x1024xf32, #tpu.memory_space<vmem>>, vector<2x1024xf32>
    %1 = arith.truncf %0 : vector<2x1024xf32> to vector<2x1024xbf16>
    %c0_1 = arith.constant 0 : index
    %c0_2 = arith.constant 0 : index
    %2 = vector.load %arg2[%c0_1, %c0_2] : memref<1024x512xbf16, #tpu.memory_space<vmem>>, vector<1024x512xbf16>
    %cst = arith.constant dense<0.000000e+00> : vector<2x512xf32>
    %3 = tpu.matmul %1, %2, %cst {dimension_numbers = #tpu.dot_dimension_numbers<[1], [0], [0], [1], [0, 0, 1, 1], [], []>} : vector<2x1024xbf16>, vector<1024x512xbf16>, vector<2x512xf32> -> vector<2x512xf32>
    %c0_3 = arith.constant 0 : index
    %c0_4 = arith.constant 0 : index
    %4 = vector.load %arg3[%c0_3, %c0_4] : memref<1x512xf32, #tpu.memory_space<vmem>>, vector<1x512xf32>
    %5 = vector.broadcast %4 : vector<1x512xf32> to vector<2x512xf32>
    %6 = arith.addf %3, %5 : vector<2x512xf32>
    %cst_5 = arith.constant 0.000000e+00 : f32
    %7 = vector.broadcast %cst_5 : f32 to vector<2x512xf32>
    %8 = arith.cmpf ogt, %6, %7 : vector<2x512xf32>
    %cst_6 = arith.constant 1.000000e-01 : f32
    %9 = vector.broadcast %cst_6 : f32 to vector<2x512xf32>
    %10 = arith.mulf %9, %6 : vector<2x512xf32>
    %11 = arith.select %8, %6, %10 : vector<2x512xi1>, vector<2x512xf32>
    %12 = arith.truncf %11 : vector<2x512xf32> to vector<2x512xbf16>
    %c0_7 = arith.constant 0 : index
    %c0_8 = arith.constant 0 : index
    %13 = vector.load %arg4[%c0_7, %c0_8] : memref<512x384xbf16, #tpu.memory_space<vmem>>, vector<512x384xbf16>
    %cst_9 = arith.constant dense<0.000000e+00> : vector<2x384xf32>
    %14 = tpu.matmul %12, %13, %cst_9 {dimension_numbers = #tpu.dot_dimension_numbers<[1], [0], [0], [1], [0, 0, 1, 1], [], []>} : vector<2x512xbf16>, vector<512x384xbf16>, vector<2x384xf32> -> vector<2x384xf32>
    %c0_10 = arith.constant 0 : index
    %c0_11 = arith.constant 0 : index
    %15 = vector.load %arg5[%c0_10, %c0_11] : memref<1x384xf32, #tpu.memory_space<vmem>>, vector<1x384xf32>
    %16 = vector.broadcast %15 : vector<1x384xf32> to vector<2x384xf32>
    %17 = arith.addf %14, %16 : vector<2x384xf32>
    %cst_12 = arith.constant 0.000000e+00 : f32
    %18 = vector.broadcast %cst_12 : f32 to vector<2x384xf32>
    %19 = arith.cmpf ogt, %17, %18 : vector<2x384xf32>
    %cst_13 = arith.constant 1.000000e-01 : f32
    %20 = vector.broadcast %cst_13 : f32 to vector<2x384xf32>
    %21 = arith.mulf %20, %17 : vector<2x384xf32>
    %22 = arith.select %19, %17, %21 : vector<2x384xi1>, vector<2x384xf32>
    %23 = arith.truncf %22 : vector<2x384xf32> to vector<2x384xbf16>
    %c0_14 = arith.constant 0 : index
    %c0_15 = arith.constant 0 : index
    %24 = vector.load %arg6[%c0_14, %c0_15] : memref<384x256xbf16, #tpu.memory_space<vmem>>, vector<384x256xbf16>
    %cst_16 = arith.constant dense<0.000000e+00> : vector<2x256xf32>
    %25 = tpu.matmul %23, %24, %cst_16 {dimension_numbers = #tpu.dot_dimension_numbers<[1], [0], [0], [1], [0, 0, 1, 1], [], []>} : vector<2x384xbf16>, vector<384x256xbf16>, vector<2x256xf32> -> vector<2x256xf32>
    %c0_17 = arith.constant 0 : index
    %c0_18 = arith.constant 0 : index
    %26 = vector.load %arg7[%c0_17, %c0_18] : memref<1x256xf32, #tpu.memory_space<vmem>>, vector<1x256xf32>
    %27 = vector.broadcast %26 : vector<1x256xf32> to vector<2x256xf32>
    %28 = arith.addf %25, %27 : vector<2x256xf32>
    %cst_19 = arith.constant 0.000000e+00 : f32
    %29 = vector.broadcast %cst_19 : f32 to vector<2x256xf32>
    %30 = arith.cmpf ogt, %28, %29 : vector<2x256xf32>
    %cst_20 = arith.constant 1.000000e-01 : f32
    %31 = vector.broadcast %cst_20 : f32 to vector<2x256xf32>
    %32 = arith.mulf %31, %28 : vector<2x256xf32>
    %33 = arith.select %30, %28, %32 : vector<2x256xi1>, vector<2x256xf32>
    %34 = arith.truncf %33 : vector<2x256xf32> to vector<2x256xbf16>
    %c0_21 = arith.constant 0 : index
    %c0_22 = arith.constant 0 : index
    %35 = vector.load %arg8[%c0_21, %c0_22] : memref<256x256xbf16, #tpu.memory_space<vmem>>, vector<256x256xbf16>
    %cst_23 = arith.constant dense<0.000000e+00> : vector<2x256xf32>
    %36 = tpu.matmul %34, %35, %cst_23 {dimension_numbers = #tpu.dot_dimension_numbers<[1], [0], [0], [1], [0, 0, 1, 1], [], []>} : vector<2x256xbf16>, vector<256x256xbf16>, vector<2x256xf32> -> vector<2x256xf32>
    %c0_24 = arith.constant 0 : index
    %c0_25 = arith.constant 0 : index
    %37 = vector.load %arg9[%c0_24, %c0_25] : memref<1x256xf32, #tpu.memory_space<vmem>>, vector<1x256xf32>
    %38 = vector.broadcast %37 : vector<1x256xf32> to vector<2x256xf32>
    %39 = arith.addf %36, %38 : vector<2x256xf32>
    %cst_26 = arith.constant 0.000000e+00 : f32
    %40 = vector.broadcast %cst_26 : f32 to vector<2x256xf32>
    %41 = arith.cmpf ogt, %39, %40 : vector<2x256xf32>
    %cst_27 = arith.constant 1.000000e-01 : f32
    %42 = vector.broadcast %cst_27 : f32 to vector<2x256xf32>
    %43 = arith.mulf %42, %39 : vector<2x256xf32>
    %44 = arith.select %41, %39, %43 : vector<2x256xi1>, vector<2x256xf32>
    %45 = arith.truncf %44 : vector<2x256xf32> to vector<2x256xbf16>
    %c0_28 = arith.constant 0 : index
    %c0_29 = arith.constant 0 : index
    %46 = vector.load %arg10[%c0_28, %c0_29] : memref<256x128xbf16, #tpu.memory_space<vmem>>, vector<256x128xbf16>
    %cst_30 = arith.constant dense<0.000000e+00> : vector<2x128xf32>
    %47 = tpu.matmul %45, %46, %cst_30 {dimension_numbers = #tpu.dot_dimension_numbers<[1], [0], [0], [1], [0, 0, 1, 1], [], []>} : vector<2x256xbf16>, vector<256x128xbf16>, vector<2x128xf32> -> vector<2x128xf32>
    %c0_31 = arith.constant 0 : index
    %c0_32 = arith.constant 0 : index
    %48 = vector.load %arg11[%c0_31, %c0_32] : memref<1x128xf32, #tpu.memory_space<vmem>>, vector<1x128xf32>
    %49 = vector.broadcast %48 : vector<1x128xf32> to vector<2x128xf32>
    %50 = arith.addf %47, %49 : vector<2x128xf32>
    %c0_33 = arith.constant 0 : index
    %c0_34 = arith.constant 0 : index
    %51 = vector.load %arg12[%c0_33, %c0_34] : memref<2x128xf32, #tpu.memory_space<vmem>>, vector<2x128xf32>
    tpu.vector_store %arg12[%c0_33, %c0_34], %50 {strides = array<i32>} : memref<2x128xf32, #tpu.memory_space<vmem>>, vector<2x128xf32>,
    return
  }
  func.func @transform_0(%arg0: i32) -> (i32, i32) {
    %c0_i32 = arith.constant 0 : i32
    %c0_i32_0 = arith.constant 0 : i32
    return %arg0, %c0_i32 : i32, i32
  }
  func.func @transform_1(%arg0: i32) -> (i32, i32) {
    %c0_i32 = arith.constant 0 : i32
    %c0_i32_0 = arith.constant 0 : i32
    %c0_i32_1 = arith.constant 0 : i32
    return %c0_i32, %c0_i32_0 : i32, i32
  }
  func.func @transform_2(%arg0: i32) -> (i32, i32) {
    %c0_i32 = arith.constant 0 : i32
    %c0_i32_0 = arith.constant 0 : i32
    %c0_i32_1 = arith.constant 0 : i32
    return %c0_i32, %c0_i32_0 : i32, i32
  }
  func.func @transform_3(%arg0: i32) -> (i32, i32) {
    %c0_i32 = arith.constant 0 : i32
    %c0_i32_0 = arith.constant 0 : i32
    %c0_i32_1 = arith.constant 0 : i32
    return %c0_i32, %c0_i32_0 : i32, i32
  }
  func.func @transform_4(%arg0: i32) -> (i32, i32) {
    %c0_i32 = arith.constant 0 : i32
    %c0_i32_0 = arith.constant 0 : i32
    %c0_i32_1 = arith.constant 0 : i32
    return %c0_i32, %c0_i32_0 : i32, i32
  }
  func.func @transform_5(%arg0: i32) -> (i32, i32) {
    %c0_i32 = arith.constant 0 : i32
    %c0_i32_0 = arith.constant 0 : i32
    %c0_i32_1 = arith.constant 0 : i32
    return %c0_i32, %c0_i32_0 : i32, i32
  }
  func.func @transform_6(%arg0: i32) -> (i32, i32) {
    %c0_i32 = arith.constant 0 : i32
    %c0_i32_0 = arith.constant 0 : i32
    %c0_i32_1 = arith.constant 0 : i32
    return %c0_i32, %c0_i32_0 : i32, i32
  }
  func.func @transform_7(%arg0: i32) -> (i32, i32) {
    %c0_i32 = arith.constant 0 : i32
    %c0_i32_0 = arith.constant 0 : i32
    %c0_i32_1 = arith.constant 0 : i32
    return %c0_i32, %c0_i32_0 : i32, i32
  }
  func.func @transform_8(%arg0: i32) -> (i32, i32) {
    %c0_i32 = arith.constant 0 : i32
    %c0_i32_0 = arith.constant 0 : i32
    %c0_i32_1 = arith.constant 0 : i32
    return %c0_i32, %c0_i32_0 : i32, i32
  }
  func.func @transform_9(%arg0: i32) -> (i32, i32) {
    %c0_i32 = arith.constant 0 : i32
    %c0_i32_0 = arith.constant 0 : i32
    %c0_i32_1 = arith.constant 0 : i32
    return %c0_i32, %c0_i32_0 : i32, i32
  }
  func.func @transform_10(%arg0: i32) -> (i32, i32) {
    %c0_i32 = arith.constant 0 : i32
    %c0_i32_0 = arith.constant 0 : i32
    %c0_i32_1 = arith.constant 0 : i32
    return %c0_i32, %c0_i32_0 : i32, i32
  }
  func.func @transform_11(%arg0: i32) -> (i32, i32) {
    %c0_i32 = arith.constant 0 : i32
    %c0_i32_0 = arith.constant 0 : i32
    return %arg0, %c0_i32 : i32, i32
  }
}

</mosaic_0001>

<llo_original>
// kernel: tpu_custom_call.1
$region0: #{tpu_custom_call.1}
  #allocation0 [shape = 'u32[]', space=smem, size = 0x4, offset = 0x4, fixed_abs, tag = 'smem constant byte address 0x4 - core index']
  #allocation1 [shape = 'u32[72,128]{1,0:T(1,128)}', space=vmem, size = 0x9000, scoped, tag = 'internal scratch']
  %s0 = inlined_call_operand.hbm [shape: f32[2,1024], index: 0, kind: input, shape index: {}]
  %s1 = inlined_call_operand.hbm [shape: bf16[1024,512], index: 1, kind: input, shape index: {}]
  %s2 = inlined_call_operand.hbm [shape: f32[1,512], index: 2, kind: input, shape index: {}]
  %s3 = inlined_call_operand.hbm [shape: bf16[512,384], index: 3, kind: input, shape index: {}]
  %s4 = inlined_call_operand.vmem [shape: f32[1,384], index: 4, kind: input, shape index: {}]
  %s5 = inlined_call_operand.hbm [shape: bf16[384,256], index: 5, kind: input, shape index: {}]
  %s6 = inlined_call_operand.vmem [shape: f32[1,256], index: 6, kind: input, shape index: {}]
  %s7 = inlined_call_operand.hbm [shape: bf16[256,256], index: 7, kind: input, shape index: {}]
  %s8 = inlined_call_operand.vmem [shape: f32[1,256], index: 8, kind: input, shape index: {}]
  %s9 = inlined_call_operand.hbm [shape: bf16[256,128], index: 9, kind: input, shape index: {}]
  %s10 = inlined_call_operand.vmem [shape: f32[1,128], index: 10, kind: input, shape index: {}]
  %s11 = inlined_call_operand.hbm [shape: f32[2,128], index: 11, kind: output, shape index: {}]
  %s12 = sld [smem:[#allocation0]]
  $region82: #{tpu_custom_call.1} parent=0
    _
  %s14 = ssub.s32 1, %s12
  %s15 = scalar_select 0, %s14, %s12
  $region1: #{tpu_custom_call.1} parent=0
    #allocation2 [shape = 'u8[8192]{0}', space=vmem, size = 0x2000, scoped, tag = 'input window, operand 0, single buffered']
    #allocation3 [shape = 's32[1]{0}', space=sflag, size = 0x4, scoped, tag = 'scoped memory for tpu_custom_call.1']
    #allocation4 [shape = 's32[1]{0}', space=sflag, size = 0x4, scoped, tag = 'scoped memory for tpu_custom_call.1']
    #allocation5 [shape = 'u8[1048576]{0}', space=vmem, size = 0x100000, scoped, tag = 'input window, operand 1, single buffered']
    #allocation6 [shape = 's32[1]{0}', space=sflag, size = 0x4, scoped, tag = 'scoped memory for tpu_custom_call.1']
    #allocation7 [shape = 'u8[2048]{0}', space=vmem, size = 0x800, scoped, tag = 'input window, operand 2, single buffered']
    #allocation8 [shape = 'u8[393216]{0}', space=vmem, size = 0x60000, scoped, tag = 'input window, operand 3, single buffered']
    #allocation9 [shape = 's32[1]{0}', space=sflag, size = 0x4, scoped, tag = 'scoped memory for tpu_custom_call.1']
    #allocation10 [shape = 'u8[196608]{0}', space=vmem, size = 0x30000, scoped, tag = 'input window, operand 5, single buffered']
    #allocation11 [shape = 'u8[131072]{0}', space=vmem, size = 0x20000, scoped, tag = 'input window, operand 7, single buffered']
    #allocation12 [shape = 's32[1]{0}', space=sflag, size = 0x4, scoped, tag = 'scoped memory for tpu_custom_call.1']
    #allocation13 [shape = 'u8[65536]{0}', space=vmem, size = 0x10000, scoped, tag = 'input window, operand 9, single buffered']
    #allocation14 [shape = 'u8[1024]{0}', space=vmem, size = 0x400, scoped, tag = 'output window, operand 0, single buffered']
    %16 = vsyncpa [#allocation3], 0
    %17 = vsyncpa [#allocation6], 0
    %18 = vsyncpa [#allocation9], 0
    %19 = vsyncpa [#allocation12], 0
    %20 = vsyncpa [#allocation4], 0
    // Predicated region
    $region2: #{tpu_custom_call.1} parent=1 // pred_check
      _
    $region3: #{tpu_custom_call.1} parent=1 // pred_check_branch
      %22 = sbr.rel (0) target = $region5
    $region4: #{tpu_custom_call.1} parent=1 // pred_region
      %24 = vsyncadd [#allocation3], 0
      %s26 = sshll.u32 %s0, 4
      %s27 = int_to_ptr.hbm [resolvable:$true] %s26
      %s28 = sshll.u32 [#allocation2], 4
      %s29 = int_to_ptr.vmem [resolvable:$true] %s28
      %31 = dma.hbm_to_vmem [thread:$0]  %s27, 256, %s29, [#allocation3]
    $region5: #{tpu_custom_call.1} parent=1 // pred_fallthru
      _
    // Predicated region
    $region6: #{tpu_custom_call.1} parent=1 // pred_check
      _
    $region7: #{tpu_custom_call.1} parent=1 // pred_check_branch
      %33 = sbr.rel (0) target = $region9
    $region8: #{tpu_custom_call.1} parent=1 // pred_region
      %35 = vsyncadd [#allocation6], 0
      %s36 = sshll.u32 %s1, 4
      %s37 = int_to_ptr.hbm [resolvable:$true] %s36
      %s38 = sshll.u32 [#allocation5], 4
      %s39 = int_to_ptr.vmem [resolvable:$true] %s38
      %44 = dma.hbm_to_vmem [thread:$0]  %s37, 32768, %s39, [#allocation6], 256, 256, 16
    $region9: #{tpu_custom_call.1} parent=1 // pred_fallthru
      _
    // Predicated region
    $region10: #{tpu_custom_call.1} parent=1 // pred_check
      _
    $region11: #{tpu_custom_call.1} parent=1 // pred_check_branch
      %46 = sbr.rel (0) target = $region13
    $region12: #{tpu_custom_call.1} parent=1 // pred_region
      %48 = vsyncadd [#allocation6], 0
      %s50 = sshll.u32 %s2, 4
      %s51 = int_to_ptr.hbm [resolvable:$true] %s50
      %s52 = sshll.u32 [#allocation7], 4
      %s53 = int_to_ptr.vmem [resolvable:$true] %s52
      %55 = dma.hbm_to_vmem [thread:$0]  %s51, 64, %s53, [#allocation6]
    $region13: #{tpu_custom_call.1} parent=1 // pred_fallthru
      _
    // Predicated region
    $region14: #{tpu_custom_call.1} parent=1 // pred_check
      _
    $region15: #{tpu_custom_call.1} parent=1 // pred_check_branch
      %57 = sbr.rel (0) target = $region17
    $region16: #{tpu_custom_call.1} parent=1 // pred_region
      %59 = vsyncadd [#allocation9], 0
      %s60 = sshll.u32 %s3, 4
      %s61 = int_to_ptr.hbm [resolvable:$true] %s60
      %s62 = sshll.u32 [#allocation8], 4
      %s63 = int_to_ptr.vmem [resolvable:$true] %s62
      %68 = dma.hbm_to_vmem [thread:$0]  %s61, 12288, %s63, [#allocation9], 192, 192, 12
    $region17: #{tpu_custom_call.1} parent=1 // pred_fallthru
      _
    // Predicated region
    $region18: #{tpu_custom_call.1} parent=1 // pred_check
      _
    $region19: #{tpu_custom_call.1} parent=1 // pred_check_branch
      %70 = sbr.rel (0) target = $region21
    $region20: #{tpu_custom_call.1} parent=1 // pred_region
      _
    $region21: #{tpu_custom_call.1} parent=1 // pred_fallthru
      _
    // Predicated region
    $region22: #{tpu_custom_call.1} parent=1 // pred_check
      _
    $region23: #{tpu_custom_call.1} parent=1 // pred_check_branch
      %72 = sbr.rel (0) target = $region25
    $region24: #{tpu_custom_call.1} parent=1 // pred_region
      %74 = vsyncadd [#allocation9], 0
      %s75 = sshll.u32 %s5, 4
      %s76 = int_to_ptr.hbm [resolvable:$true] %s75
      %s77 = sshll.u32 [#allocation10], 4
      %s78 = int_to_ptr.vmem [resolvable:$true] %s77
      %83 = dma.hbm_to_vmem [thread:$0]  %s76, 6144, %s78, [#allocation9], 128, 128, 8
    $region25: #{tpu_custom_call.1} parent=1 // pred_fallthru
      _
    // Predicated region
    $region26: #{tpu_custom_call.1} parent=1 // pred_check
      _
    $region27: #{tpu_custom_call.1} parent=1 // pred_check_branch
      %85 = sbr.rel (0) target = $region29
    $region28: #{tpu_custom_call.1} parent=1 // pred_region
      _
    $region29: #{tpu_custom_call.1} parent=1 // pred_fallthru
      _
    // Predicated region
    $region30: #{tpu_custom_call.1} parent=1 // pred_check
      _
    $region31: #{tpu_custom_call.1} parent=1 // pred_check_branch
      %87 = sbr.rel (0) target = $region33
    $region32: #{tpu_custom_call.1} parent=1 // pred_region
      %89 = vsyncadd [#allocation12], 0
      %s90 = sshll.u32 %s7, 4
      %s91 = int_to_ptr.hbm [resolvable:$true] %s90
      %s92 = sshll.u32 [#allocation11], 4
      %s93 = int_to_ptr.vmem [resolvable:$true] %s92
      %98 = dma.hbm_to_vmem [thread:$0]  %s91, 4096, %s93, [#allocation12], 128, 128, 8
    $region33: #{tpu_custom_call.1} parent=1 // pred_fallthru
      _
    // Predicated region
    $region34: #{tpu_custom_call.1} parent=1 // pred_check
      _
    $region35: #{tpu_custom_call.1} parent=1 // pred_check_branch
      %100 = sbr.rel (0) target = $region37
    $region36: #{tpu_custom_call.1} parent=1 // pred_region
      _
    $region37: #{tpu_custom_call.1} parent=1 // pred_fallthru
      _
    // Predicated region
    $region38: #{tpu_custom_call.1} parent=1 // pred_check
      _
    $region39: #{tpu_custom_call.1} parent=1 // pred_check_branch
      %102 = sbr.rel (0) target = $region41
    $region40: #{tpu_custom_call.1} parent=1 // pred_region
      %104 = vsyncadd [#allocation12], 0
      %s105 = sshll.u32 %s9, 4
      %s106 = int_to_ptr.hbm [resolvable:$true] %s105
      %s107 = sshll.u32 [#allocation13], 4
      %s108 = int_to_ptr.vmem [resolvable:$true] %s107
      %113 = dma.hbm_to_vmem [thread:$0]  %s106, 2048, %s108, [#allocation12], 64, 64, 4
    $region41: #{tpu_custom_call.1} parent=1 // pred_fallthru
      _
    // Predicated region
    $region42: #{tpu_custom_call.1} parent=1 // pred_check
      _
    $region43: #{tpu_custom_call.1} parent=1 // pred_check_branch
      %115 = sbr.rel (0) target = $region45
    $region44: #{tpu_custom_call.1} parent=1 // pred_region
      _
    $region45: #{tpu_custom_call.1} parent=1 // pred_fallthru
      _
    // Predicated region
    $region46: #{tpu_custom_call.1} parent=1 // pred_check
      _
    $region47: #{tpu_custom_call.1} parent=1 // pred_check_branch
      %117 = sbr.rel (0) target = $region49
    $region48: #{tpu_custom_call.1} parent=1 // pred_region
      %119 = dma.done [#allocation3], 256
    $region49: #{tpu_custom_call.1} parent=1 // pred_fallthru
      _
    // Predicated region
    $region50: #{tpu_custom_call.1} parent=1 // pred_check
      _
    $region51: #{tpu_custom_call.1} parent=1 // pred_check_branch
      %121 = sbr.rel (0) target = $region53
    $region52: #{tpu_custom_call.1} parent=1 // pred_region
      %123 = dma.done [#allocation6], 32768
    $region53: #{tpu_custom_call.1} parent=1 // pred_fallthru
      _
    // Predicated region
    $region54: #{tpu_custom_call.1} parent=1 // pred_check
      _
    $region55: #{tpu_custom_call.1} parent=1 // pred_check_branch
      %125 = sbr.rel (0) target = $region57
    $region56: #{tpu_custom_call.1} parent=1 // pred_region
      %127 = dma.done [#allocation6], 64
    $region57: #{tpu_custom_call.1} parent=1 // pred_fallthru
      _
    // Predicated region
    $region58: #{tpu_custom_call.1} parent=1 // pred_check
      _
    $region59: #{tpu_custom_call.1} parent=1 // pred_check_branch
      %129 = sbr.rel (0) target = $region61
    $region60: #{tpu_custom_call.1} parent=1 // pred_region
      %131 = dma.done [#allocation9], 12288
    $region61: #{tpu_custom_call.1} parent=1 // pred_fallthru
      _
    // Predicated region
    $region62: #{tpu_custom_call.1} parent=1 // pred_check
      _
    $region63: #{tpu_custom_call.1} parent=1 // pred_check_branch
      %133 = sbr.rel (0) target = $region65
    $region64: #{tpu_custom_call.1} parent=1 // pred_region
      %135 = dma.done [#allocation9], 6144
    $region65: #{tpu_custom_call.1} parent=1 // pred_fallthru
      _
    // Predicated region
    $region66: #{tpu_custom_call.1} parent=1 // pred_check
      _
    $region67: #{tpu_custom_call.1} parent=1 // pred_check_branch
      %137 = sbr.rel (0) target = $region69
    $region68: #{tpu_custom_call.1} parent=1 // pred_region
      %139 = dma.done [#allocation12], 4096
    $region69: #{tpu_custom_call.1} parent=1 // pred_fallthru
      _
    // Predicated region
    $region70: #{tpu_custom_call.1} parent=1 // pred_check
      _
    $region71: #{tpu_custom_call.1} parent=1 // pred_check_branch
      %141 = sbr.rel (0) target = $region73
    $region72: #{tpu_custom_call.1} parent=1 // pred_region
      %143 = dma.done [#allocation12], 2048
    $region73: #{tpu_custom_call.1} parent=1 // pred_fallthru
      _
    %v144 = vld [vmem:[#allocation2] sm:$0xff]
    %v145 = vld [vmem:[#allocation2 + $0x8] sm:$0xff]
    %148 = vst [vmem:[#allocation1] ss:$4 sm:$0xff] %v144
    %s149 = scalar_lea.vmem [#allocation1], 32
    %150 = vst [vmem:[%s149] ss:$4 sm:$0xff] %v145
    %v151 = vld.sshfl [vmem:[#allocation1] sm:$0xff pattern:$0x73625140]
    %v152 = vld.sshfl [vmem:[#allocation1 + $0x8] sm:$0xff pattern:$0x73625140]
    %v153 = vld.sshfl [vmem:[#allocation1 + $0x10] sm:$0xff pattern:$0x73625140]
    %v154 = vld.sshfl [vmem:[#allocation1 + $0x18] sm:$0xff pattern:$0x73625140]
    %v155 = vld.sshfl [vmem:[#allocation1 + $0x20] sm:$0xff pattern:$0x73625140]
    %v156 = vld.sshfl [vmem:[#allocation1 + $0x28] sm:$0xff pattern:$0x73625140]
    %v157 = vld.sshfl [vmem:[#allocation1 + $0x30] sm:$0xff pattern:$0x73625140]
    %v158 = vld.sshfl [vmem:[#allocation1 + $0x38] sm:$0xff pattern:$0x73625140]
    %v167 = vpack.c.bf16 %v151, %v151
    %v168 = vpack.c.bf16 %v152, %v152
    %v169 = vpack.c.bf16 %v153, %v153
    %v170 = vpack.c.bf16 %v154, %v154
    %v171 = vpack.c.bf16 %v155, %v155
    %v172 = vpack.c.bf16 %v156, %v156
    %v173 = vpack.c.bf16 %v157, %v157
    %v174 = vpack.c.bf16 %v158, %v158
    %v175 = vld [vmem:[#allocation5] sm:$0xff]
    %v176 = vld [vmem:[#allocation5 + $0x8] sm:$0xff]
    %v177 = vld [vmem:[#allocation5 + $0x10] sm:$0xff]
    %v178 = vld [vmem:[#allocation5 + $0x18] sm:$0xff]
    %v179 = vld [vmem:[#allocation5 + $0x20] sm:$0xff]
    %v180 = vld [vmem:[#allocation5 + $0x28] sm:$0xff]
    %v181 = vld [vmem:[#allocation5 + $0x30] sm:$0xff]
    %v182 = vld [vmem:[#allocation5 + $0x38] sm:$0xff]
    %v183 = vld [vmem:[#allocation5 + $0x40] sm:$0xff]
    %v184 = vld [vmem:[#allocation5 + $0x48] sm:$0xff]
    %v185 = vld [vmem:[#allocation5 + $0x50] sm:$0xff]
    %v186 = vld [vmem:[#allocation5 + $0x58] sm:$0xff]
    %v187 = vld [vmem:[#allocation5 + $0x60] sm:$0xff]
    %v188 = vld [vmem:[#allocation5 + $0x68] sm:$0xff]
    %v189 = vld [vmem:[#allocation5 + $0x70] sm:$0xff]
    %v190 = vld [vmem:[#allocation5 + $0x78] sm:$0xff]
    %v191 = vld [vmem:[#allocation5 + $0x80] sm:$0xff]
    %v192 = vld [vmem:[#allocation5 + $0x88] sm:$0xff]
    %v193 = vld [vmem:[#allocation5 + $0x90] sm:$0xff]
    %v194 = vld [vmem:[#allocation5 + $0x98] sm:$0xff]
    %v195 = vld [vmem:[#allocation5 + $0xa0] sm:$0xff]
    %v196 = vld [vmem:[#allocation5 + $0xa8] sm:$0xff]
    %v197 = vld [vmem:[#allocation5 + $0xb0] sm:$0xff]
    %v198 = vld [vmem:[#allocation5 + $0xb8] sm:$0xff]
    %v199 = vld [vmem:[#allocation5 + $0xc0] sm:$0xff]
    %v200 = vld [vmem:[#allocation5 + $0xc8] sm:$0xff]
    %v201 = vld [vmem:[#allocation5 + $0xd0] sm:$0xff]
    %v202 = vld [vmem:[#allocation5 + $0xd8] sm:$0xff]
    %v203 = vld [vmem:[#allocation5 + $0xe0] sm:$0xff]
    %v204 = vld [vmem:[#allocation5 + $0xe8] sm:$0xff]
    %v205 = vld [vmem:[#allocation5 + $0xf0] sm:$0xff]
    %v206 = vld [vmem:[#allocation5 + $0xf8] sm:$0xff]
    %v207 = vld [vmem:[#allocation5 + $0x100] sm:$0xff]
    %v208 = vld [vmem:[#allocation5 + $0x108] sm:$0xff]
    %v209 = vld [vmem:[#allocation5 + $0x110] sm:$0xff]
    %v210 = vld [vmem:[#allocation5 + $0x118] sm:$0xff]
    %v211 = vld [vmem:[#allocation5 + $0x120] sm:$0xff]
    %v212 = vld [vmem:[#allocation5 + $0x128] sm:$0xff]
    %v213 = vld [vmem:[#allocation5 + $0x130] sm:$0xff]
    %v214 = vld [vmem:[#allocation5 + $0x138] sm:$0xff]
    %v215 = vld [vmem:[#allocation5 + $0x140] sm:$0xff]
    %v216 = vld [vmem:[#allocation5 + $0x148] sm:$0xff]
    %v217 = vld [vmem:[#allocation5 + $0x150] sm:$0xff]
    %v218 = vld [vmem:[#allocation5 + $0x158] sm:$0xff]
    %v219 = vld [vmem:[#allocation5 + $0x160] sm:$0xff]
    %v220 = vld [vmem:[#allocation5 + $0x168] sm:$0xff]
    %v221 = vld [vmem:[#allocation5 + $0x170] sm:$0xff]
    %v222 = vld [vmem:[#allocation5 + $0x178] sm:$0xff]
    %v223 = vld [vmem:[#allocation5 + $0x180] sm:$0xff]
    %v224 = vld [vmem:[#allocation5 + $0x188] sm:$0xff]
    %v225 = vld [vmem:[#allocation5 + $0x190] sm:$0xff]
    %v226 = vld [vmem:[#allocation5 + $0x198] sm:$0xff]
    %v227 = vld [vmem:[#allocation5 + $0x1a0] sm:$0xff]
    %v228 = vld [vmem:[#allocation5 + $0x1a8] sm:$0xff]
    %v229 = vld [vmem:[#allocation5 + $0x1b0] sm:$0xff]
    %v230 = vld [vmem:[#allocation5 + $0x1b8] sm:$0xff]
    %v231 = vld [vmem:[#allocation5 + $0x1c0] sm:$0xff]
    %v232 = vld [vmem:[#allocation5 + $0x1c8] sm:$0xff]
    %v233 = vld [vmem:[#allocation5 + $0x1d0] sm:$0xff]
    %v234 = vld [vmem:[#allocation5 + $0x1d8] sm:$0xff]
    %v235 = vld [vmem:[#allocation5 + $0x1e0] sm:$0xff]
    %v236 = vld [vmem:[#allocation5 + $0x1e8] sm:$0xff]
    %v237 = vld [vmem:[#allocation5 + $0x1f0] sm:$0xff]
    %v238 = vld [vmem:[#allocation5 + $0x1f8] sm:$0xff]
    %v239 = vld [vmem:[#allocation5 + $0x200] sm:$0xff]
    %v240 = vld [vmem:[#allocation5 + $0x208] sm:$0xff]
    %v241 = vld [vmem:[#allocation5 + $0x210] sm:$0xff]
    %v242 = vld [vmem:[#allocation5 + $0x218] sm:$0xff]
    %v243 = vld [vmem:[#allocation5 + $0x220] sm:$0xff]
    %v244 = vld [vmem:[#allocation5 + $0x228] sm:$0xff]
    %v245 = vld [vmem:[#allocation5 + $0x230] sm:$0xff]
    %v246 = vld [vmem:[#allocation5 + $0x238] sm:$0xff]
    %v247 = vld [vmem:[#allocation5 + $0x240] sm:$0xff]
    %v248 = vld [vmem:[#allocation5 + $0x248] sm:$0xff]
    %v249 = vld [vmem:[#allocation5 + $0x250] sm:$0xff]
    %v250 = vld [vmem:[#allocation5 + $0x258] sm:$0xff]
    %v251 = vld [vmem:[#allocation5 + $0x260] sm:$0xff]
    %v252 = vld [vmem:[#allocation5 + $0x268] sm:$0xff]
    %v253 = vld [vmem:[#allocation5 + $0x270] sm:$0xff]
    %v254 = vld [vmem:[#allocation5 + $0x278] sm:$0xff]
    %v255 = vld [vmem:[#allocation5 + $0x280] sm:$0xff]
    %v256 = vld [vmem:[#allocation5 + $0x288] sm:$0xff]
    %v257 = vld [vmem:[#allocation5 + $0x290] sm:$0xff]
    %v258 = vld [vmem:[#allocation5 + $0x298] sm:$0xff]
    %v259 = vld [vmem:[#allocation5 + $0x2a0] sm:$0xff]
    %v260 = vld [vmem:[#allocation5 + $0x2a8] sm:$0xff]
    %v261 = vld [vmem:[#allocation5 + $0x2b0] sm:$0xff]
    %v262 = vld [vmem:[#allocation5 + $0x2b8] sm:$0xff]
    %v263 = vld [vmem:[#allocation5 + $0x2c0] sm:$0xff]
    %v264 = vld [vmem:[#allocation5 + $0x2c8] sm:$0xff]
    %v265 = vld [vmem:[#allocation5 + $0x2d0] sm:$0xff]
    %v266 = vld [vmem:[#allocation5 + $0x2d8] sm:$0xff]
    %v267 = vld [vmem:[#allocation5 + $0x2e0] sm:$0xff]
    %v268 = vld [vmem:[#allocation5 + $0x2e8] sm:$0xff]
    %v269 = vld [vmem:[#allocation5 + $0x2f0] sm:$0xff]
    %v270 = vld [vmem:[#allocation5 + $0x2f8] sm:$0xff]
    %v271 = vld [vmem:[#allocation5 + $0x300] sm:$0xff]
    %v272 = vld [vmem:[#allocation5 + $0x308] sm:$0xff]
    %v273 = vld [vmem:[#allocation5 + $0x310] sm:$0xff]
    %v274 = vld [vmem:[#allocation5 + $0x318] sm:$0xff]
    %v275 = vld [vmem:[#allocation5 + $0x320] sm:$0xff]
    %v276 = vld [vmem:[#allocation5 + $0x328] sm:$0xff]
    %v277 = vld [vmem:[#allocation5 + $0x330] sm:$0xff]
    %v278 = vld [vmem:[#allocation5 + $0x338] sm:$0xff]
    %v279 = vld [vmem:[#allocation5 + $0x340] sm:$0xff]
    %v280 = vld [vmem:[#allocation5 + $0x348] sm:$0xff]
    %v281 = vld [vmem:[#allocation5 + $0x350] sm:$0xff]
    %v282 = vld [vmem:[#allocation5 + $0x358] sm:$0xff]
    %v283 = vld [vmem:[#allocation5 + $0x360] sm:$0xff]
    %v284 = vld [vmem:[#allocation5 + $0x368] sm:$0xff]
    %v285 = vld [vmem:[#allocation5 + $0x370] sm:$0xff]
    %v286 = vld [vmem:[#allocation5 + $0x378] sm:$0xff]
    %v287 = vld [vmem:[#allocation5 + $0x380] sm:$0xff]
    %v288 = vld [vmem:[#allocation5 + $0x388] sm:$0xff]
    %v289 = vld [vmem:[#allocation5 + $0x390] sm:$0xff]
    %v290 = vld [vmem:[#allocation5 + $0x398] sm:$0xff]
    %v291 = vld [vmem:[#allocation5 + $0x3a0] sm:$0xff]
    %v292 = vld [vmem:[#allocation5 + $0x3a8] sm:$0xff]
    %v293 = vld [vmem:[#allocation5 + $0x3b0] sm:$0xff]
    %v294 = vld [vmem:[#allocation5 + $0x3b8] sm:$0xff]
    %v295 = vld [vmem:[#allocation5 + $0x3c0] sm:$0xff]
    %v296 = vld [vmem:[#allocation5 + $0x3c8] sm:$0xff]
    %v297 = vld [vmem:[#allocation5 + $0x3d0] sm:$0xff]
    %v298 = vld [vmem:[#allocation5 + $0x3d8] sm:$0xff]
    %v299 = vld [vmem:[#allocation5 + $0x3e0] sm:$0xff]
    %v300 = vld [vmem:[#allocation5 + $0x3e8] sm:$0xff]
    %v301 = vld [vmem:[#allocation5 + $0x3f0] sm:$0xff]
    %v302 = vld [vmem:[#allocation5 + $0x3f8] sm:$0xff]
    %v303 = vld [vmem:[#allocation5 + $0x400] sm:$0xff]
    %v304 = vld [vmem:[#allocation5 + $0x408] sm:$0xff]
    %v305 = vld [vmem:[#allocation5 + $0x410] sm:$0xff]
    %v306 = vld [vmem:[#allocation5 + $0x418] sm:$0xff]
    %v307 = vld [vmem:[#allocation5 + $0x420] sm:$0xff]
    %v308 = vld [vmem:[#allocation5 + $0x428] sm:$0xff]
    %v309 = vld [vmem:[#allocation5 + $0x430] sm:$0xff]
    %v310 = vld [vmem:[#allocation5 + $0x438] sm:$0xff]
    %v311 = vld [vmem:[#allocation5 + $0x440] sm:$0xff]
    %v312 = vld [vmem:[#allocation5 + $0x448] sm:$0xff]
    %v313 = vld [vmem:[#allocation5 + $0x450] sm:$0xff]
    %v314 = vld [vmem:[#allocation5 + $0x458] sm:$0xff]
    %v315 = vld [vmem:[#allocation5 + $0x460] sm:$0xff]
    %v316 = vld [vmem:[#allocation5 + $0x468] sm:$0xff]
    %v317 = vld [vmem:[#allocation5 + $0x470] sm:$0xff]
    %v318 = vld [vmem:[#allocation5 + $0x478] sm:$0xff]
    %v319 = vld [vmem:[#allocation5 + $0x480] sm:$0xff]
    %v320 = vld [vmem:[#allocation5 + $0x488] sm:$0xff]
    %v321 = vld [vmem:[#allocation5 + $0x490] sm:$0xff]
    %v322 = vld [vmem:[#allocation5 + $0x498] sm:$0xff]
    %v323 = vld [vmem:[#allocation5 + $0x4a0] sm:$0xff]
    %v324 = vld [vmem:[#allocation5 + $0x4a8] sm:$0xff]
    %v325 = vld [vmem:[#allocation5 + $0x4b0] sm:$0xff]
    %v326 = vld [vmem:[#allocation5 + $0x4b8] sm:$0xff]
    %v327 = vld [vmem:[#allocation5 + $0x4c0] sm:$0xff]
    %v328 = vld [vmem:[#allocation5 + $0x4c8] sm:$0xff]
    %v329 = vld [vmem:[#allocation5 + $0x4d0] sm:$0xff]
    %v330 = vld [vmem:[#allocation5 + $0x4d8] sm:$0xff]
    %v331 = vld [vmem:[#allocation5 + $0x4e0] sm:$0xff]
    %v332 = vld [vmem:[#allocation5 + $0x4e8] sm:$0xff]
    %v333 = vld [vmem:[#allocation5 + $0x4f0] sm:$0xff]
    %v334 = vld [vmem:[#allocation5 + $0x4f8] sm:$0xff]
    %v335 = vld [vmem:[#allocation5 + $0x500] sm:$0xff]
    %v336 = vld [vmem:[#allocation5 + $0x508] sm:$0xff]
    %v337 = vld [vmem:[#allocation5 + $0x510] sm:$0xff]
    %v338 = vld [vmem:[#allocation5 + $0x518] sm:$0xff]
    %v339 = vld [vmem:[#allocation5 + $0x520] sm:$0xff]
    %v340 = vld [vmem:[#allocation5 + $0x528] sm:$0xff]
    %v341 = vld [vmem:[#allocation5 + $0x530] sm:$0xff]
    %v342 = vld [vmem:[#allocation5 + $0x538] sm:$0xff]
    %v343 = vld [vmem:[#allocation5 + $0x540] sm:$0xff]
    %v344 = vld [vmem:[#allocation5 + $0x548] sm:$0xff]
    %v345 = vld [vmem:[#allocation5 + $0x550] sm:$0xff]
    %v346 = vld [vmem:[#allocation5 + $0x558] sm:$0xff]
    %v347 = vld [vmem:[#allocation5 + $0x560] sm:$0xff]
    %v348 = vld [vmem:[#allocation5 + $0x568] sm:$0xff]
    %v349 = vld [vmem:[#allocation5 + $0x570] sm:$0xff]
    %v350 = vld [vmem:[#allocation5 + $0x578] sm:$0xff]
    %v351 = vld [vmem:[#allocation5 + $0x580] sm:$0xff]
    %v352 = vld [vmem:[#allocation5 + $0x588] sm:$0xff]
    %v353 = vld [vmem:[#allocation5 + $0x590] sm:$0xff]
    %v354 = vld [vmem:[#allocation5 + $0x598] sm:$0xff]
    %v355 = vld [vmem:[#allocation5 + $0x5a0] sm:$0xff]
    %v356 = vld [vmem:[#allocation5 + $0x5a8] sm:$0xff]
    %v357 = vld [vmem:[#allocation5 + $0x5b0] sm:$0xff]
    %v358 = vld [vmem:[#allocation5 + $0x5b8] sm:$0xff]
    %v359 = vld [vmem:[#allocation5 + $0x5c0] sm:$0xff]
    %v360 = vld [vmem:[#allocation5 + $0x5c8] sm:$0xff]
    %v361 = vld [vmem:[#allocation5 + $0x5d0] sm:$0xff]
    %v362 = vld [vmem:[#allocation5 + $0x5d8] sm:$0xff]
    %v363 = vld [vmem:[#allocation5 + $0x5e0] sm:$0xff]
    %v364 = vld [vmem:[#allocation5 + $0x5e8] sm:$0xff]
    %v365 = vld [vmem:[#allocation5 + $0x5f0] sm:$0xff]
    %v366 = vld [vmem:[#allocation5 + $0x5f8] sm:$0xff]
    %v367 = vld [vmem:[#allocation5 + $0x600] sm:$0xff]
    %v368 = vld [vmem:[#allocation5 + $0x608] sm:$0xff]
    %v369 = vld [vmem:[#allocation5 + $0x610] sm:$0xff]
    %v370 = vld [vmem:[#allocation5 + $0x618] sm:$0xff]
    %v371 = vld [vmem:[#allocation5 + $0x620] sm:$0xff]
    %v372 = vld [vmem:[#allocation5 + $0x628] sm:$0xff]
    %v373 = vld [vmem:[#allocation5 + $0x630] sm:$0xff]
    %v374 = vld [vmem:[#allocation5 + $0x638] sm:$0xff]
    %v375 = vld [vmem:[#allocation5 + $0x640] sm:$0xff]
    %v376 = vld [vmem:[#allocation5 + $0x648] sm:$0xff]
    %v377 = vld [vmem:[#allocation5 + $0x650] sm:$0xff]
    %v378 = vld [vmem:[#allocation5 + $0x658] sm:$0xff]
    %v379 = vld [vmem:[#allocation5 + $0x660] sm:$0xff]
    %v380 = vld [vmem:[#allocation5 + $0x668] sm:$0xff]
    %v381 = vld [vmem:[#allocation5 + $0x670] sm:$0xff]
    %v382 = vld [vmem:[#allocation5 + $0x678] sm:$0xff]
    %v383 = vld [vmem:[#allocation5 + $0x680] sm:$0xff]
    %v384 = vld [vmem:[#allocation5 + $0x688] sm:$0xff]
    %v385 = vld [vmem:[#allocation5 + $0x690] sm:$0xff]
    %v386 = vld [vmem:[#allocation5 + $0x698] sm:$0xff]
    %v387 = vld [vmem:[#allocation5 + $0x6a0] sm:$0xff]
    %v388 = vld [vmem:[#allocation5 + $0x6a8] sm:$0xff]
    %v389 = vld [vmem:[#allocation5 + $0x6b0] sm:$0xff]
    %v390 = vld [vmem:[#allocation5 + $0x6b8] sm:$0xff]
    %v391 = vld [vmem:[#allocation5 + $0x6c0] sm:$0xff]
    %v392 = vld [vmem:[#allocation5 + $0x6c8] sm:$0xff]
    %v393 = vld [vmem:[#allocation5 + $0x6d0] sm:$0xff]
    %v394 = vld [vmem:[#allocation5 + $0x6d8] sm:$0xff]
    %v395 = vld [vmem:[#allocation5 + $0x6e0] sm:$0xff]
    %v396 = vld [vmem:[#allocation5 + $0x6e8] sm:$0xff]
    %v397 = vld [vmem:[#allocation5 + $0x6f0] sm:$0xff]
    %v398 = vld [vmem:[#allocation5 + $0x6f8] sm:$0xff]
    %v399 = vld [vmem:[#allocation5 + $0x700] sm:$0xff]
    %v400 = vld [vmem:[#allocation5 + $0x708] sm:$0xff]
    %v401 = vld [vmem:[#allocation5 + $0x710] sm:$0xff]
    %v402 = vld [vmem:[#allocation5 + $0x718] sm:$0xff]
    %v403 = vld [vmem:[#allocation5 + $0x720] sm:$0xff]
    %v404 = vld [vmem:[#allocation5 + $0x728] sm:$0xff]
    %v405 = vld [vmem:[#allocation5 + $0x730] sm:$0xff]
    %v406 = vld [vmem:[#allocation5 + $0x738] sm:$0xff]
    %v407 = vld [vmem:[#allocation5 + $0x740] sm:$0xff]
    %v408 = vld [vmem:[#allocation5 + $0x748] sm:$0xff]
    %v409 = vld [vmem:[#allocation5 + $0x750] sm:$0xff]
    %v410 = vld [vmem:[#allocation5 + $0x758] sm:$0xff]
    %v411 = vld [vmem:[#allocation5 + $0x760] sm:$0xff]
    %v412 = vld [vmem:[#allocation5 + $0x768] sm:$0xff]
    %v413 = vld [vmem:[#allocation5 + $0x770] sm:$0xff]
    %v414 = vld [vmem:[#allocation5 + $0x778] sm:$0xff]
    %v415 = vld [vmem:[#allocation5 + $0x780] sm:$0xff]
    %v416 = vld [vmem:[#allocation5 + $0x788] sm:$0xff]
    %v417 = vld [vmem:[#allocation5 + $0x790] sm:$0xff]
    %v418 = vld [vmem:[#allocation5 + $0x798] sm:$0xff]
    %v419 = vld [vmem:[#allocation5 + $0x7a0] sm:$0xff]
    %v420 = vld [vmem:[#allocation5 + $0x7a8] sm:$0xff]
    %v421 = vld [vmem:[#allocation5 + $0x7b0] sm:$0xff]
    %v422 = vld [vmem:[#allocation5 + $0x7b8] sm:$0xff]
    %v423 = vld [vmem:[#allocation5 + $0x7c0] sm:$0xff]
    %v424 = vld [vmem:[#allocation5 + $0x7c8] sm:$0xff]
    %v425 = vld [vmem:[#allocation5 + $0x7d0] sm:$0xff]
    %v426 = vld [vmem:[#allocation5 + $0x7d8] sm:$0xff]
    %v427 = vld [vmem:[#allocation5 + $0x7e0] sm:$0xff]
    %v428 = vld [vmem:[#allocation5 + $0x7e8] sm:$0xff]
    %v429 = vld [vmem:[#allocation5 + $0x7f0] sm:$0xff]
    %v430 = vld [vmem:[#allocation5 + $0x7f8] sm:$0xff]
    %v431 = vld [vmem:[#allocation7] sm:$0xf]
    %v433 = vperm.slane %v431, 0
    %v434 = vperm.slane %v431, 1
    %v435 = vperm.slane %v431, 2
    %v436 = vperm.slane %v431, 3
    %v697 = vunpack.c.l.b16 %v175
    %v698 = vunpack.c.h.b16 %v175
    %v699 = vunpack.c.l.b16 %v176
    %v700 = vunpack.c.h.b16 %v176
    %v701 = vunpack.c.l.b16 %v177
    %v702 = vunpack.c.h.b16 %v177
    %v703 = vunpack.c.l.b16 %v178
    %v704 = vunpack.c.h.b16 %v178
    %v705 = vunpack.c.l.b16 %v179
    %v706 = vunpack.c.h.b16 %v179
    %v707 = vunpack.c.l.b16 %v180
    %v708 = vunpack.c.h.b16 %v180
    %v709 = vunpack.c.l.b16 %v181
    %v710 = vunpack.c.h.b16 %v181
    %v711 = vunpack.c.l.b16 %v182
    %v712 = vunpack.c.h.b16 %v182
    %v713 = vunpack.c.l.b16 %v183
    %v714 = vunpack.c.h.b16 %v183
    %v715 = vunpack.c.l.b16 %v184
    %v716 = vunpack.c.h.b16 %v184
    %v717 = vunpack.c.l.b16 %v185
    %v718 = vunpack.c.h.b16 %v185
    %v719 = vunpack.c.l.b16 %v186
    %v720 = vunpack.c.h.b16 %v186
    %v721 = vunpack.c.l.b16 %v187
    %v722 = vunpack.c.h.b16 %v187
    %v723 = vunpack.c.l.b16 %v188
    %v724 = vunpack.c.h.b16 %v188
    %v725 = vunpack.c.l.b16 %v189
    %v726 = vunpack.c.h.b16 %v189
    %v727 = vunpack.c.l.b16 %v190
    %v728 = vunpack.c.h.b16 %v190
    %v729 = vunpack.c.l.b16 %v191
    %v730 = vunpack.c.h.b16 %v191
    %v731 = vunpack.c.l.b16 %v192
    %v732 = vunpack.c.h.b16 %v192
    %v733 = vunpack.c.l.b16 %v193
    %v734 = vunpack.c.h.b16 %v193
    %v735 = vunpack.c.l.b16 %v194
    %v736 = vunpack.c.h.b16 %v194
    %v737 = vunpack.c.l.b16 %v195
    %v738 = vunpack.c.h.b16 %v195
    %v739 = vunpack.c.l.b16 %v196
    %v740 = vunpack.c.h.b16 %v196
    %v741 = vunpack.c.l.b16 %v197
    %v742 = vunpack.c.h.b16 %v197
    %v743 = vunpack.c.l.b16 %v198
    %v744 = vunpack.c.h.b16 %v198
    %v745 = vunpack.c.l.b16 %v199
    %v746 = vunpack.c.h.b16 %v199
    %v747 = vunpack.c.l.b16 %v200
    %v748 = vunpack.c.h.b16 %v200
    %v749 = vunpack.c.l.b16 %v201
    %v750 = vunpack.c.h.b16 %v201
    %v751 = vunpack.c.l.b16 %v202
    %v752 = vunpack.c.h.b16 %v202
    %v753 = vunpack.c.l.b16 %v203
    %v754 = vunpack.c.h.b16 %v203
    %v755 = vunpack.c.l.b16 %v204
    %v756 = vunpack.c.h.b16 %v204
    %v757 = vunpack.c.l.b16 %v205
    %v758 = vunpack.c.h.b16 %v205
    %v759 = vunpack.c.l.b16 %v206
    %v760 = vunpack.c.h.b16 %v206
    %v761 = vunpack.c.l.b16 %v207
    %v762 = vunpack.c.h.b16 %v207
    %v763 = vunpack.c.l.b16 %v208
    %v764 = vunpack.c.h.b16 %v208
    %v765 = vunpack.c.l.b16 %v209
    %v766 = vunpack.c.h.b16 %v209
    %v767 = vunpack.c.l.b16 %v210
    %v768 = vunpack.c.h.b16 %v210
    %v769 = vunpack.c.l.b16 %v211
    %v770 = vunpack.c.h.b16 %v211
    %v771 = vunpack.c.l.b16 %v212
    %v772 = vunpack.c.h.b16 %v212
    %v773 = vunpack.c.l.b16 %v213
    %v774 = vunpack.c.h.b16 %v213
    %v775 = vunpack.c.l.b16 %v214
    %v776 = vunpack.c.h.b16 %v214
    %v777 = vunpack.c.l.b16 %v215
    %v778 = vunpack.c.h.b16 %v215
    %v779 = vunpack.c.l.b16 %v216
    %v780 = vunpack.c.h.b16 %v216
    %v781 = vunpack.c.l.b16 %v217
    %v782 = vunpack.c.h.b16 %v217
    %v783 = vunpack.c.l.b16 %v218
    %v784 = vunpack.c.h.b16 %v218
    %v785 = vunpack.c.l.b16 %v219
    %v786 = vunpack.c.h.b16 %v219
    %v787 = vunpack.c.l.b16 %v220
    %v788 = vunpack.c.h.b16 %v220
    %v789 = vunpack.c.l.b16 %v221
    %v790 = vunpack.c.h.b16 %v221
    %v791 = vunpack.c.l.b16 %v222
    %v792 = vunpack.c.h.b16 %v222
    %v793 = vunpack.c.l.b16 %v223
    %v794 = vunpack.c.h.b16 %v223
    %v795 = vunpack.c.l.b16 %v224
    %v796 = vunpack.c.h.b16 %v224
    %v797 = vunpack.c.l.b16 %v225
    %v798 = vunpack.c.h.b16 %v225
    %v799 = vunpack.c.l.b16 %v226
    %v800 = vunpack.c.h.b16 %v226
    %v801 = vunpack.c.l.b16 %v227
    %v802 = vunpack.c.h.b16 %v227
    %v803 = vunpack.c.l.b16 %v228
    %v804 = vunpack.c.h.b16 %v228
    %v805 = vunpack.c.l.b16 %v229
    %v806 = vunpack.c.h.b16 %v229
    %v807 = vunpack.c.l.b16 %v230
    %v808 = vunpack.c.h.b16 %v230
    %v809 = vunpack.c.l.b16 %v231
    %v810 = vunpack.c.h.b16 %v231
    %v811 = vunpack.c.l.b16 %v232
    %v812 = vunpack.c.h.b16 %v232
    %v813 = vunpack.c.l.b16 %v233
    %v814 = vunpack.c.h.b16 %v233
    %v815 = vunpack.c.l.b16 %v234
    %v816 = vunpack.c.h.b16 %v234
    %v817 = vunpack.c.l.b16 %v235
    %v818 = vunpack.c.h.b16 %v235
    %v819 = vunpack.c.l.b16 %v236
    %v820 = vunpack.c.h.b16 %v236
    %v821 = vunpack.c.l.b16 %v237
    %v822 = vunpack.c.h.b16 %v237
    %v823 = vunpack.c.l.b16 %v238
    %v824 = vunpack.c.h.b16 %v238
    %v825 = vunpack.c.l.b16 %v239
    %v826 = vunpack.c.h.b16 %v239
    %v827 = vunpack.c.l.b16 %v240
    %v828 = vunpack.c.h.b16 %v240
    %v829 = vunpack.c.l.b16 %v241
    %v830 = vunpack.c.h.b16 %v241
    %v831 = vunpack.c.l.b16 %v242
    %v832 = vunpack.c.h.b16 %v242
    %v833 = vunpack.c.l.b16 %v243
    %v834 = vunpack.c.h.b16 %v243
    %v835 = vunpack.c.l.b16 %v244
    %v836 = vunpack.c.h.b16 %v244
    %v837 = vunpack.c.l.b16 %v245
    %v838 = vunpack.c.h.b16 %v245
    %v839 = vunpack.c.l.b16 %v246
    %v840 = vunpack.c.h.b16 %v246
    %v841 = vunpack.c.l.b16 %v247
    %v842 = vunpack.c.h.b16 %v247
    %v843 = vunpack.c.l.b16 %v248
    %v844 = vunpack.c.h.b16 %v248
    %v845 = vunpack.c.l.b16 %v249
    %v846 = vunpack.c.h.b16 %v249
    %v847 = vunpack.c.l.b16 %v250
    %v848 = vunpack.c.h.b16 %v250
    %v849 = vunpack.c.l.b16 %v251
    %v850 = vunpack.c.h.b16 %v251
    %v851 = vunpack.c.l.b16 %v252
    %v852 = vunpack.c.h.b16 %v252
    %v853 = vunpack.c.l.b16 %v253
    %v854 = vunpack.c.h.b16 %v253
    %v855 = vunpack.c.l.b16 %v254
    %v856 = vunpack.c.h.b16 %v254
    %v857 = vunpack.c.l.b16 %v255
    %v858 = vunpack.c.h.b16 %v255
    %v859 = vunpack.c.l.b16 %v256
    %v860 = vunpack.c.h.b16 %v256
    %v861 = vunpack.c.l.b16 %v257
    %v862 = vunpack.c.h.b16 %v257
    %v863 = vunpack.c.l.b16 %v258
    %v864 = vunpack.c.h.b16 %v258
    %v865 = vunpack.c.l.b16 %v259
    %v866 = vunpack.c.h.b16 %v259
    %v867 = vunpack.c.l.b16 %v260
    %v868 = vunpack.c.h.b16 %v260
    %v869 = vunpack.c.l.b16 %v261
    %v870 = vunpack.c.h.b16 %v261
    %v871 = vunpack.c.l.b16 %v262
    %v872 = vunpack.c.h.b16 %v262
    %v873 = vunpack.c.l.b16 %v263
    %v874 = vunpack.c.h.b16 %v263
    %v875 = vunpack.c.l.b16 %v264
    %v876 = vunpack.c.h.b16 %v264
    %v877 = vunpack.c.l.b16 %v265
    %v878 = vunpack.c.h.b16 %v265
    %v879 = vunpack.c.l.b16 %v266
    %v880 = vunpack.c.h.b16 %v266
    %v881 = vunpack.c.l.b16 %v267
    %v882 = vunpack.c.h.b16 %v267
    %v883 = vunpack.c.l.b16 %v268
    %v884 = vunpack.c.h.b16 %v268
    %v885 = vunpack.c.l.b16 %v269
    %v886 = vunpack.c.h.b16 %v269
    %v887 = vunpack.c.l.b16 %v270
    %v888 = vunpack.c.h.b16 %v270
    %v889 = vunpack.c.l.b16 %v271
    %v890 = vunpack.c.h.b16 %v271
    %v891 = vunpack.c.l.b16 %v272
    %v892 = vunpack.c.h.b16 %v272
    %v893 = vunpack.c.l.b16 %v273
    %v894 = vunpack.c.h.b16 %v273
    %v895 = vunpack.c.l.b16 %v274
    %v896 = vunpack.c.h.b16 %v274
    %v897 = vunpack.c.l.b16 %v275
    %v898 = vunpack.c.h.b16 %v275
    %v899 = vunpack.c.l.b16 %v276
    %v900 = vunpack.c.h.b16 %v276
    %v901 = vunpack.c.l.b16 %v277
    %v902 = vunpack.c.h.b16 %v277
    %v903 = vunpack.c.l.b16 %v278
    %v904 = vunpack.c.h.b16 %v278
    %v905 = vunpack.c.l.b16 %v279
    %v906 = vunpack.c.h.b16 %v279
    %v907 = vunpack.c.l.b16 %v280
    %v908 = vunpack.c.h.b16 %v280
    %v909 = vunpack.c.l.b16 %v281
    %v910 = vunpack.c.h.b16 %v281
    %v911 = vunpack.c.l.b16 %v282
    %v912 = vunpack.c.h.b16 %v282
    %v913 = vunpack.c.l.b16 %v283
    %v914 = vunpack.c.h.b16 %v283
    %v915 = vunpack.c.l.b16 %v284
    %v916 = vunpack.c.h.b16 %v284
    %v917 = vunpack.c.l.b16 %v285
    %v918 = vunpack.c.h.b16 %v285
    %v919 = vunpack.c.l.b16 %v286
    %v920 = vunpack.c.h.b16 %v286
    %v921 = vunpack.c.l.b16 %v287
    %v922 = vunpack.c.h.b16 %v287
    %v923 = vunpack.c.l.b16 %v288
    %v924 = vunpack.c.h.b16 %v288
    %v925 = vunpack.c.l.b16 %v289
    %v926 = vunpack.c.h.b16 %v289
    %v927 = vunpack.c.l.b16 %v290
    %v928 = vunpack.c.h.b16 %v290
    %v929 = vunpack.c.l.b16 %v291
    %v930 = vunpack.c.h.b16 %v291
    %v931 = vunpack.c.l.b16 %v292
    %v932 = vunpack.c.h.b16 %v292
    %v933 = vunpack.c.l.b16 %v293
    %v934 = vunpack.c.h.b16 %v293
    %v935 = vunpack.c.l.b16 %v294
    %v936 = vunpack.c.h.b16 %v294
    %v937 = vunpack.c.l.b16 %v295
    %v938 = vunpack.c.h.b16 %v295
    %v939 = vunpack.c.l.b16 %v296
    %v940 = vunpack.c.h.b16 %v296
    %v941 = vunpack.c.l.b16 %v297
    %v942 = vunpack.c.h.b16 %v297
    %v943 = vunpack.c.l.b16 %v298
    %v944 = vunpack.c.h.b16 %v298
    %v945 = vunpack.c.l.b16 %v299
    %v946 = vunpack.c.h.b16 %v299
    %v947 = vunpack.c.l.b16 %v300
    %v948 = vunpack.c.h.b16 %v300
    %v949 = vunpack.c.l.b16 %v301
    %v950 = vunpack.c.h.b16 %v301
    %v951 = vunpack.c.l.b16 %v302
    %v952 = vunpack.c.h.b16 %v302
    %v953 = vunpack.c.l.b16 %v303
    %v954 = vunpack.c.h.b16 %v303
    %v955 = vunpack.c.l.b16 %v304
    %v956 = vunpack.c.h.b16 %v304
    %v957 = vunpack.c.l.b16 %v305
    %v958 = vunpack.c.h.b16 %v305
    %v959 = vunpack.c.l.b16 %v306
    %v960 = vunpack.c.h.b16 %v306
    %v961 = vunpack.c.l.b16 %v307
    %v962 = vunpack.c.h.b16 %v307
    %v963 = vunpack.c.l.b16 %v308
    %v964 = vunpack.c.h.b16 %v308
    %v965 = vunpack.c.l.b16 %v309
    %v966 = vunpack.c.h.b16 %v309
    %v967 = vunpack.c.l.b16 %v310
    %v968 = vunpack.c.h.b16 %v310
    %v969 = vunpack.c.l.b16 %v311
    %v970 = vunpack.c.h.b16 %v311
    %v971 = vunpack.c.l.b16 %v312
    %v972 = vunpack.c.h.b16 %v312
    %v973 = vunpack.c.l.b16 %v313
    %v974 = vunpack.c.h.b16 %v313
    %v975 = vunpack.c.l.b16 %v314
    %v976 = vunpack.c.h.b16 %v314
    %v977 = vunpack.c.l.b16 %v315
    %v978 = vunpack.c.h.b16 %v315
    %v979 = vunpack.c.l.b16 %v316
    %v980 = vunpack.c.h.b16 %v316
    %v981 = vunpack.c.l.b16 %v317
    %v982 = vunpack.c.h.b16 %v317
    %v983 = vunpack.c.l.b16 %v318
    %v984 = vunpack.c.h.b16 %v318
    %v985 = vunpack.c.l.b16 %v319
    %v986 = vunpack.c.h.b16 %v319
    %v987 = vunpack.c.l.b16 %v320
    %v988 = vunpack.c.h.b16 %v320
    %v989 = vunpack.c.l.b16 %v321
    %v990 = vunpack.c.h.b16 %v321
    %v991 = vunpack.c.l.b16 %v322
    %v992 = vunpack.c.h.b16 %v322
    %v993 = vunpack.c.l.b16 %v323
    %v994 = vunpack.c.h.b16 %v323
    %v995 = vunpack.c.l.b16 %v324
    %v996 = vunpack.c.h.b16 %v324
    %v997 = vunpack.c.l.b16 %v325
    %v998 = vunpack.c.h.b16 %v325
    %v999 = vunpack.c.l.b16 %v326
    %v1000 = vunpack.c.h.b16 %v326
    %v1001 = vunpack.c.l.b16 %v327
    %v1002 = vunpack.c.h.b16 %v327
    %v1003 = vunpack.c.l.b16 %v328
    %v1004 = vunpack.c.h.b16 %v328
    %v1005 = vunpack.c.l.b16 %v329
    %v1006 = vunpack.c.h.b16 %v329
    %v1007 = vunpack.c.l.b16 %v330
    %v1008 = vunpack.c.h.b16 %v330
    %v1009 = vunpack.c.l.b16 %v331
    %v1010 = vunpack.c.h.b16 %v331
    %v1011 = vunpack.c.l.b16 %v332
    %v1012 = vunpack.c.h.b16 %v332
    %v1013 = vunpack.c.l.b16 %v333
    %v1014 = vunpack.c.h.b16 %v333
    %v1015 = vunpack.c.l.b16 %v334
    %v1016 = vunpack.c.h.b16 %v334
    %v1017 = vunpack.c.l.b16 %v335
    %v1018 = vunpack.c.h.b16 %v335
    %v1019 = vunpack.c.l.b16 %v336
    %v1020 = vunpack.c.h.b16 %v336
    %v1021 = vunpack.c.l.b16 %v337
    %v1022 = vunpack.c.h.b16 %v337
    %v1023 = vunpack.c.l.b16 %v338
    %v1024 = vunpack.c.h.b16 %v338
    %v1025 = vunpack.c.l.b16 %v339
    %v1026 = vunpack.c.h.b16 %v339
    %v1027 = vunpack.c.l.b16 %v340
    %v1028 = vunpack.c.h.b16 %v340
    %v1029 = vunpack.c.l.b16 %v341
    %v1030 = vunpack.c.h.b16 %v341
    %v1031 = vunpack.c.l.b16 %v342
    %v1032 = vunpack.c.h.b16 %v342
    %v1033 = vunpack.c.l.b16 %v343
    %v1034 = vunpack.c.h.b16 %v343
    %v1035 = vunpack.c.l.b16 %v344
    %v1036 = vunpack.c.h.b16 %v344
    %v1037 = vunpack.c.l.b16 %v345
    %v1038 = vunpack.c.h.b16 %v345
    %v1039 = vunpack.c.l.b16 %v346
    %v1040 = vunpack.c.h.b16 %v346
    %v1041 = vunpack.c.l.b16 %v347
    %v1042 = vunpack.c.h.b16 %v347
    %v1043 = vunpack.c.l.b16 %v348
    %v1044 = vunpack.c.h.b16 %v348
    %v1045 = vunpack.c.l.b16 %v349
    %v1046 = vunpack.c.h.b16 %v349
    %v1047 = vunpack.c.l.b16 %v350
    %v1048 = vunpack.c.h.b16 %v350
    %v1049 = vunpack.c.l.b16 %v351
    %v1050 = vunpack.c.h.b16 %v351
    %v1051 = vunpack.c.l.b16 %v352
    %v1052 = vunpack.c.h.b16 %v352
    %v1053 = vunpack.c.l.b16 %v353
    %v1054 = vunpack.c.h.b16 %v353
    %v1055 = vunpack.c.l.b16 %v354
    %v1056 = vunpack.c.h.b16 %v354
    %v1057 = vunpack.c.l.b16 %v355
    %v1058 = vunpack.c.h.b16 %v355
    %v1059 = vunpack.c.l.b16 %v356
    %v1060 = vunpack.c.h.b16 %v356
    %v1061 = vunpack.c.l.b16 %v357
    %v1062 = vunpack.c.h.b16 %v357
    %v1063 = vunpack.c.l.b16 %v358
    %v1064 = vunpack.c.h.b16 %v358
    %v1065 = vunpack.c.l.b16 %v359
    %v1066 = vunpack.c.h.b16 %v359
    %v1067 = vunpack.c.l.b16 %v360
    %v1068 = vunpack.c.h.b16 %v360
    %v1069 = vunpack.c.l.b16 %v361
    %v1070 = vunpack.c.h.b16 %v361
    %v1071 = vunpack.c.l.b16 %v362
    %v1072 = vunpack.c.h.b16 %v362
    %v1073 = vunpack.c.l.b16 %v363
    %v1074 = vunpack.c.h.b16 %v363
    %v1075 = vunpack.c.l.b16 %v364
    %v1076 = vunpack.c.h.b16 %v364
    %v1077 = vunpack.c.l.b16 %v365
    %v1078 = vunpack.c.h.b16 %v365
    %v1079 = vunpack.c.l.b16 %v366
    %v1080 = vunpack.c.h.b16 %v366
    %v1081 = vunpack.c.l.b16 %v367
    %v1082 = vunpack.c.h.b16 %v367
    %v1083 = vunpack.c.l.b16 %v368
    %v1084 = vunpack.c.h.b16 %v368
    %v1085 = vunpack.c.l.b16 %v369
    %v1086 = vunpack.c.h.b16 %v369
    %v1087 = vunpack.c.l.b16 %v370
    %v1088 = vunpack.c.h.b16 %v370
    %v1089 = vunpack.c.l.b16 %v371
    %v1090 = vunpack.c.h.b16 %v371
    %v1091 = vunpack.c.l.b16 %v372
    %v1092 = vunpack.c.h.b16 %v372
    %v1093 = vunpack.c.l.b16 %v373
    %v1094 = vunpack.c.h.b16 %v373
    %v1095 = vunpack.c.l.b16 %v374
    %v1096 = vunpack.c.h.b16 %v374
    %v1097 = vunpack.c.l.b16 %v375
    %v1098 = vunpack.c.h.b16 %v375
    %v1099 = vunpack.c.l.b16 %v376
    %v1100 = vunpack.c.h.b16 %v376
    %v1101 = vunpack.c.l.b16 %v377
    %v1102 = vunpack.c.h.b16 %v377
    %v1103 = vunpack.c.l.b16 %v378
    %v1104 = vunpack.c.h.b16 %v378
    %v1105 = vunpack.c.l.b16 %v379
    %v1106 = vunpack.c.h.b16 %v379
    %v1107 = vunpack.c.l.b16 %v380
    %v1108 = vunpack.c.h.b16 %v380
    %v1109 = vunpack.c.l.b16 %v381
    %v1110 = vunpack.c.h.b16 %v381
    %v1111 = vunpack.c.l.b16 %v382
    %v1112 = vunpack.c.h.b16 %v382
    %v1113 = vunpack.c.l.b16 %v383
    %v1114 = vunpack.c.h.b16 %v383
    %v1115 = vunpack.c.l.b16 %v384
    %v1116 = vunpack.c.h.b16 %v384
    %v1117 = vunpack.c.l.b16 %v385
    %v1118 = vunpack.c.h.b16 %v385
    %v1119 = vunpack.c.l.b16 %v386
    %v1120 = vunpack.c.h.b16 %v386
    %v1121 = vunpack.c.l.b16 %v387
    %v1122 = vunpack.c.h.b16 %v387
    %v1123 = vunpack.c.l.b16 %v388
    %v1124 = vunpack.c.h.b16 %v388
    %v1125 = vunpack.c.l.b16 %v389
    %v1126 = vunpack.c.h.b16 %v389
    %v1127 = vunpack.c.l.b16 %v390
    %v1128 = vunpack.c.h.b16 %v390
    %v1129 = vunpack.c.l.b16 %v391
    %v1130 = vunpack.c.h.b16 %v391
    %v1131 = vunpack.c.l.b16 %v392
    %v1132 = vunpack.c.h.b16 %v392
    %v1133 = vunpack.c.l.b16 %v393
    %v1134 = vunpack.c.h.b16 %v393
    %v1135 = vunpack.c.l.b16 %v394
    %v1136 = vunpack.c.h.b16 %v394
    %v1137 = vunpack.c.l.b16 %v395
    %v1138 = vunpack.c.h.b16 %v395
    %v1139 = vunpack.c.l.b16 %v396
    %v1140 = vunpack.c.h.b16 %v396
    %v1141 = vunpack.c.l.b16 %v397
    %v1142 = vunpack.c.h.b16 %v397
    %v1143 = vunpack.c.l.b16 %v398
    %v1144 = vunpack.c.h.b16 %v398
    %v1145 = vunpack.c.l.b16 %v399
    %v1146 = vunpack.c.h.b16 %v399
    %v1147 = vunpack.c.l.b16 %v400
    %v1148 = vunpack.c.h.b16 %v400
    %v1149 = vunpack.c.l.b16 %v401
    %v1150 = vunpack.c.h.b16 %v401
    %v1151 = vunpack.c.l.b16 %v402
    %v1152 = vunpack.c.h.b16 %v402
    %v1153 = vunpack.c.l.b16 %v403
    %v1154 = vunpack.c.h.b16 %v403
    %v1155 = vunpack.c.l.b16 %v404
    %v1156 = vunpack.c.h.b16 %v404
    %v1157 = vunpack.c.l.b16 %v405
    %v1158 = vunpack.c.h.b16 %v405
    %v1159 = vunpack.c.l.b16 %v406
    %v1160 = vunpack.c.h.b16 %v406
    %v1161 = vunpack.c.l.b16 %v407
    %v1162 = vunpack.c.h.b16 %v407
    %v1163 = vunpack.c.l.b16 %v408
    %v1164 = vunpack.c.h.b16 %v408
    %v1165 = vunpack.c.l.b16 %v409
    %v1166 = vunpack.c.h.b16 %v409
    %v1167 = vunpack.c.l.b16 %v410
    %v1168 = vunpack.c.h.b16 %v410
    %v1169 = vunpack.c.l.b16 %v411
    %v1170 = vunpack.c.h.b16 %v411
    %v1171 = vunpack.c.l.b16 %v412
    %v1172 = vunpack.c.h.b16 %v412
    %v1173 = vunpack.c.l.b16 %v413
    %v1174 = vunpack.c.h.b16 %v413
    %v1175 = vunpack.c.l.b16 %v414
    %v1176 = vunpack.c.h.b16 %v414
    %v1177 = vunpack.c.l.b16 %v415
    %v1178 = vunpack.c.h.b16 %v415
    %v1179 = vunpack.c.l.b16 %v416
    %v1180 = vunpack.c.h.b16 %v416
    %v1181 = vunpack.c.l.b16 %v417
    %v1182 = vunpack.c.h.b16 %v417
    %v1183 = vunpack.c.l.b16 %v418
    %v1184 = vunpack.c.h.b16 %v418
    %v1185 = vunpack.c.l.b16 %v419
    %v1186 = vunpack.c.h.b16 %v419
    %v1187 = vunpack.c.l.b16 %v420
    %v1188 = vunpack.c.h.b16 %v420
    %v1189 = vunpack.c.l.b16 %v421
    %v1190 = vunpack.c.h.b16 %v421
    %v1191 = vunpack.c.l.b16 %v422
    %v1192 = vunpack.c.h.b16 %v422
    %v1193 = vunpack.c.l.b16 %v423
    %v1194 = vunpack.c.h.b16 %v423
    %v1195 = vunpack.c.l.b16 %v424
    %v1196 = vunpack.c.h.b16 %v424
    %v1197 = vunpack.c.l.b16 %v425
    %v1198 = vunpack.c.h.b16 %v425
    %v1199 = vunpack.c.l.b16 %v426
    %v1200 = vunpack.c.h.b16 %v426
    %v1201 = vunpack.c.l.b16 %v427
    %v1202 = vunpack.c.h.b16 %v427
    %v1203 = vunpack.c.l.b16 %v428
    %v1204 = vunpack.c.h.b16 %v428
    %v1205 = vunpack.c.l.b16 %v429
    %v1206 = vunpack.c.h.b16 %v429
    %v1207 = vunpack.c.l.b16 %v430
    %v1208 = vunpack.c.h.b16 %v430
    %v1209 = vpack.c.b16 %v701, %v697
    %v1210 = vpack.c.b16 %v702, %v698
    %v1211 = vpack.c.b16 %v703, %v699
    %v1212 = vpack.c.b16 %v704, %v700
    %v1213 = vpack.c.b16 %v709, %v705
    %v1214 = vpack.c.b16 %v710, %v706
    %v1215 = vpack.c.b16 %v711, %v707
    %v1216 = vpack.c.b16 %v712, %v708
    %v1217 = vpack.c.b16 %v717, %v713
    %v1218 = vpack.c.b16 %v718, %v714
    %v1219 = vpack.c.b16 %v719, %v715
    %v1220 = vpack.c.b16 %v720, %v716
    %v1221 = vpack.c.b16 %v725, %v721
    %v1222 = vpack.c.b16 %v726, %v722
    %v1223 = vpack.c.b16 %v727, %v723
    %v1224 = vpack.c.b16 %v728, %v724
    %v1225 = vpack.c.b16 %v733, %v729
    %v1226 = vpack.c.b16 %v734, %v730
    %v1227 = vpack.c.b16 %v735, %v731
    %v1228 = vpack.c.b16 %v736, %v732
    %v1229 = vpack.c.b16 %v741, %v737
    %v1230 = vpack.c.b16 %v742, %v738
    %v1231 = vpack.c.b16 %v743, %v739
    %v1232 = vpack.c.b16 %v744, %v740
    %v1233 = vpack.c.b16 %v749, %v745
    %v1234 = vpack.c.b16 %v750, %v746
    %v1235 = vpack.c.b16 %v751, %v747
    %v1236 = vpack.c.b16 %v752, %v748
    %v1237 = vpack.c.b16 %v757, %v753
    %v1238 = vpack.c.b16 %v758, %v754
    %v1239 = vpack.c.b16 %v759, %v755
    %v1240 = vpack.c.b16 %v760, %v756
    %v1241 = vpack.c.b16 %v765, %v761
    %v1242 = vpack.c.b16 %v766, %v762
    %v1243 = vpack.c.b16 %v767, %v763
    %v1244 = vpack.c.b16 %v768, %v764
    %v1245 = vpack.c.b16 %v773, %v769
    %v1246 = vpack.c.b16 %v774, %v770
    %v1247 = vpack.c.b16 %v775, %v771
    %v1248 = vpack.c.b16 %v776, %v772
    %v1249 = vpack.c.b16 %v781, %v777
    %v1250 = vpack.c.b16 %v782, %v778
    %v1251 = vpack.c.b16 %v783, %v779
    %v1252 = vpack.c.b16 %v784, %v780
    %v1253 = vpack.c.b16 %v789, %v785
    %v1254 = vpack.c.b16 %v790, %v786
    %v1255 = vpack.c.b16 %v791, %v787
    %v1256 = vpack.c.b16 %v792, %v788
    %v1257 = vpack.c.b16 %v797, %v793
    %v1258 = vpack.c.b16 %v798, %v794
    %v1259 = vpack.c.b16 %v799, %v795
    %v1260 = vpack.c.b16 %v800, %v796
    %v1261 = vpack.c.b16 %v805, %v801
    %v1262 = vpack.c.b16 %v806, %v802
    %v1263 = vpack.c.b16 %v807, %v803
    %v1264 = vpack.c.b16 %v808, %v804
    %v1265 = vpack.c.b16 %v813, %v809
    %v1266 = vpack.c.b16 %v814, %v810
    %v1267 = vpack.c.b16 %v815, %v811
    %v1268 = vpack.c.b16 %v816, %v812
    %v1269 = vpack.c.b16 %v821, %v817
    %v1270 = vpack.c.b16 %v822, %v818
    %v1271 = vpack.c.b16 %v823, %v819
    %v1272 = vpack.c.b16 %v824, %v820
    %v1273 = vpack.c.b16 %v829, %v825
    %v1274 = vpack.c.b16 %v830, %v826
    %v1275 = vpack.c.b16 %v831, %v827
    %v1276 = vpack.c.b16 %v832, %v828
    %v1277 = vpack.c.b16 %v837, %v833
    %v1278 = vpack.c.b16 %v838, %v834
    %v1279 = vpack.c.b16 %v839, %v835
    %v1280 = vpack.c.b16 %v840, %v836
    %v1281 = vpack.c.b16 %v845, %v841
    %v1282 = vpack.c.b16 %v846, %v842
    %v1283 = vpack.c.b16 %v847, %v843
    %v1284 = vpack.c.b16 %v848, %v844
    %v1285 = vpack.c.b16 %v853, %v849
    %v1286 = vpack.c.b16 %v854, %v850
    %v1287 = vpack.c.b16 %v855, %v851
    %v1288 = vpack.c.b16 %v856, %v852
    %v1289 = vpack.c.b16 %v861, %v857
    %v1290 = vpack.c.b16 %v862, %v858
    %v1291 = vpack.c.b16 %v863, %v859
    %v1292 = vpack.c.b16 %v864, %v860
    %v1293 = vpack.c.b16 %v869, %v865
    %v1294 = vpack.c.b16 %v870, %v866
    %v1295 = vpack.c.b16 %v871, %v867
    %v1296 = vpack.c.b16 %v872, %v868
    %v1297 = vpack.c.b16 %v877, %v873
    %v1298 = vpack.c.b16 %v878, %v874
    %v1299 = vpack.c.b16 %v879, %v875
    %v1300 = vpack.c.b16 %v880, %v876
    %v1301 = vpack.c.b16 %v885, %v881
    %v1302 = vpack.c.b16 %v886, %v882
    %v1303 = vpack.c.b16 %v887, %v883
    %v1304 = vpack.c.b16 %v888, %v884
    %v1305 = vpack.c.b16 %v893, %v889
    %v1306 = vpack.c.b16 %v894, %v890
    %v1307 = vpack.c.b16 %v895, %v891
    %v1308 = vpack.c.b16 %v896, %v892
    %v1309 = vpack.c.b16 %v901, %v897
    %v1310 = vpack.c.b16 %v902, %v898
    %v1311 = vpack.c.b16 %v903, %v899
    %v1312 = vpack.c.b16 %v904, %v900
    %v1313 = vpack.c.b16 %v909, %v905
    %v1314 = vpack.c.b16 %v910, %v906
    %v1315 = vpack.c.b16 %v911, %v907
    %v1316 = vpack.c.b16 %v912, %v908
    %v1317 = vpack.c.b16 %v917, %v913
    %v1318 = vpack.c.b16 %v918, %v914
    %v1319 = vpack.c.b16 %v919, %v915
    %v1320 = vpack.c.b16 %v920, %v916
    %v1321 = vpack.c.b16 %v925, %v921
    %v1322 = vpack.c.b16 %v926, %v922
    %v1323 = vpack.c.b16 %v927, %v923
    %v1324 = vpack.c.b16 %v928, %v924
    %v1325 = vpack.c.b16 %v933, %v929
    %v1326 = vpack.c.b16 %v934, %v930
    %v1327 = vpack.c.b16 %v935, %v931
    %v1328 = vpack.c.b16 %v936, %v932
    %v1329 = vpack.c.b16 %v941, %v937
    %v1330 = vpack.c.b16 %v942, %v938
    %v1331 = vpack.c.b16 %v943, %v939
    %v1332 = vpack.c.b16 %v944, %v940
    %v1333 = vpack.c.b16 %v949, %v945
    %v1334 = vpack.c.b16 %v950, %v946
    %v1335 = vpack.c.b16 %v951, %v947
    %v1336 = vpack.c.b16 %v952, %v948
    %v1337 = vpack.c.b16 %v957, %v953
    %v1338 = vpack.c.b16 %v958, %v954
    %v1339 = vpack.c.b16 %v959, %v955
    %v1340 = vpack.c.b16 %v960, %v956
    %v1341 = vpack.c.b16 %v965, %v961
    %v1342 = vpack.c.b16 %v966, %v962
    %v1343 = vpack.c.b16 %v967, %v963
    %v1344 = vpack.c.b16 %v968, %v964
    %v1345 = vpack.c.b16 %v973, %v969
    %v1346 = vpack.c.b16 %v974, %v970
    %v1347 = vpack.c.b16 %v975, %v971
    %v1348 = vpack.c.b16 %v976, %v972
    %v1349 = vpack.c.b16 %v981, %v977
    %v1350 = vpack.c.b16 %v982, %v978
    %v1351 = vpack.c.b16 %v983, %v979
    %v1352 = vpack.c.b16 %v984, %v980
    %v1353 = vpack.c.b16 %v989, %v985
    %v1354 = vpack.c.b16 %v990, %v986
    %v1355 = vpack.c.b16 %v991, %v987
    %v1356 = vpack.c.b16 %v992, %v988
    %v1357 = vpack.c.b16 %v997, %v993
    %v1358 = vpack.c.b16 %v998, %v994
    %v1359 = vpack.c.b16 %v999, %v995
    %v1360 = vpack.c.b16 %v1000, %v996
    %v1361 = vpack.c.b16 %v1005, %v1001
    %v1362 = vpack.c.b16 %v1006, %v1002
    %v1363 = vpack.c.b16 %v1007, %v1003
    %v1364 = vpack.c.b16 %v1008, %v1004
    %v1365 = vpack.c.b16 %v1013, %v1009
    %v1366 = vpack.c.b16 %v1014, %v1010
    %v1367 = vpack.c.b16 %v1015, %v1011
    %v1368 = vpack.c.b16 %v1016, %v1012
    %v1369 = vpack.c.b16 %v1021, %v1017
    %v1370 = vpack.c.b16 %v1022, %v1018
    %v1371 = vpack.c.b16 %v1023, %v1019
    %v1372 = vpack.c.b16 %v1024, %v1020
    %v1373 = vpack.c.b16 %v1029, %v1025
    %v1374 = vpack.c.b16 %v1030, %v1026
    %v1375 = vpack.c.b16 %v1031, %v1027
    %v1376 = vpack.c.b16 %v1032, %v1028
    %v1377 = vpack.c.b16 %v1037, %v1033
    %v1378 = vpack.c.b16 %v1038, %v1034
    %v1379 = vpack.c.b16 %v1039, %v1035
    %v1380 = vpack.c.b16 %v1040, %v1036
    %v1381 = vpack.c.b16 %v1045, %v1041
    %v1382 = vpack.c.b16 %v1046, %v1042
    %v1383 = vpack.c.b16 %v1047, %v1043
    %v1384 = vpack.c.b16 %v1048, %v1044
    %v1385 = vpack.c.b16 %v1053, %v1049
    %v1386 = vpack.c.b16 %v1054, %v1050
    %v1387 = vpack.c.b16 %v1055, %v1051
    %v1388 = vpack.c.b16 %v1056, %v1052
    %v1389 = vpack.c.b16 %v1061, %v1057
    %v1390 = vpack.c.b16 %v1062, %v1058
    %v1391 = vpack.c.b16 %v1063, %v1059
    %v1392 = vpack.c.b16 %v1064, %v1060
    %v1393 = vpack.c.b16 %v1069, %v1065
    %v1394 = vpack.c.b16 %v1070, %v1066
    %v1395 = vpack.c.b16 %v1071, %v1067
    %v1396 = vpack.c.b16 %v1072, %v1068
    %v1397 = vpack.c.b16 %v1077, %v1073
    %v1398 = vpack.c.b16 %v1078, %v1074
    %v1399 = vpack.c.b16 %v1079, %v1075
    %v1400 = vpack.c.b16 %v1080, %v1076
    %v1401 = vpack.c.b16 %v1085, %v1081
    %v1402 = vpack.c.b16 %v1086, %v1082
    %v1403 = vpack.c.b16 %v1087, %v1083
    %v1404 = vpack.c.b16 %v1088, %v1084
    %v1405 = vpack.c.b16 %v1093, %v1089
    %v1406 = vpack.c.b16 %v1094, %v1090
    %v1407 = vpack.c.b16 %v1095, %v1091
    %v1408 = vpack.c.b16 %v1096, %v1092
    %v1409 = vpack.c.b16 %v1101, %v1097
    %v1410 = vpack.c.b16 %v1102, %v1098
    %v1411 = vpack.c.b16 %v1103, %v1099
    %v1412 = vpack.c.b16 %v1104, %v1100
    %v1413 = vpack.c.b16 %v1109, %v1105
    %v1414 = vpack.c.b16 %v1110, %v1106
    %v1415 = vpack.c.b16 %v1111, %v1107
    %v1416 = vpack.c.b16 %v1112, %v1108
    %v1417 = vpack.c.b16 %v1117, %v1113
    %v1418 = vpack.c.b16 %v1118, %v1114
    %v1419 = vpack.c.b16 %v1119, %v1115
    %v1420 = vpack.c.b16 %v1120, %v1116
    %v1421 = vpack.c.b16 %v1125, %v1121
    %v1422 = vpack.c.b16 %v1126, %v1122
    %v1423 = vpack.c.b16 %v1127, %v1123
    %v1424 = vpack.c.b16 %v1128, %v1124
    %v1425 = vpack.c.b16 %v1133, %v1129
    %v1426 = vpack.c.b16 %v1134, %v1130
    %v1427 = vpack.c.b16 %v1135, %v1131
    %v1428 = vpack.c.b16 %v1136, %v1132
    %v1429 = vpack.c.b16 %v1141, %v1137
    %v1430 = vpack.c.b16 %v1142, %v1138
    %v1431 = vpack.c.b16 %v1143, %v1139
    %v1432 = vpack.c.b16 %v1144, %v1140
    %v1433 = vpack.c.b16 %v1149, %v1145
    %v1434 = vpack.c.b16 %v1150, %v1146
    %v1435 = vpack.c.b16 %v1151, %v1147
    %v1436 = vpack.c.b16 %v1152, %v1148
    %v1437 = vpack.c.b16 %v1157, %v1153
    %v1438 = vpack.c.b16 %v1158, %v1154
    %v1439 = vpack.c.b16 %v1159, %v1155
    %v1440 = vpack.c.b16 %v1160, %v1156
    %v1441 = vpack.c.b16 %v1165, %v1161
    %v1442 = vpack.c.b16 %v1166, %v1162
    %v1443 = vpack.c.b16 %v1167, %v1163
    %v1444 = vpack.c.b16 %v1168, %v1164
    %v1445 = vpack.c.b16 %v1173, %v1169
    %v1446 = vpack.c.b16 %v1174, %v1170
    %v1447 = vpack.c.b16 %v1175, %v1171
    %v1448 = vpack.c.b16 %v1176, %v1172
    %v1449 = vpack.c.b16 %v1181, %v1177
    %v1450 = vpack.c.b16 %v1182, %v1178
    %v1451 = vpack.c.b16 %v1183, %v1179
    %v1452 = vpack.c.b16 %v1184, %v1180
    %v1453 = vpack.c.b16 %v1189, %v1185
    %v1454 = vpack.c.b16 %v1190, %v1186
    %v1455 = vpack.c.b16 %v1191, %v1187
    %v1456 = vpack.c.b16 %v1192, %v1188
    %v1457 = vpack.c.b16 %v1197, %v1193
    %v1458 = vpack.c.b16 %v1198, %v1194
    %v1459 = vpack.c.b16 %v1199, %v1195
    %v1460 = vpack.c.b16 %v1200, %v1196
    %v1461 = vpack.c.b16 %v1205, %v1201
    %v1462 = vpack.c.b16 %v1206, %v1202
    %v1463 = vpack.c.b16 %v1207, %v1203
    %v1464 = vpack.c.b16 %v1208, %v1204
    %1721 = vmatpush.bf16.msra.mxu0 %v1237
    %1722 = vmatpush.bf16.msra.mxu0 %v1233
    %1723 = vmatpush.bf16.msra.mxu0 %v1229
    %1724 = vmatpush.bf16.msra.mxu0 %v1225
    %1725 = vmatpush.bf16.msra.mxu0 %v1221
    %1726 = vmatpush.bf16.msra.mxu0 %v1217
    %1727 = vmatpush.bf16.msra.mxu0 %v1213
    %1728 = vmatpush.bf16.msra.mxu0 %v1209
    %1729 = vmatmul.bf16.gmra.mxu0 %v167
    %v1730 = vpop.f32.mrf.mxu0
    %v1731 = vadd.f32 %v433, %v1730
    %v1732 = vpop.f32.mrf.mxu0
    %1733 = vdwg.mxu0
    %1734 = vmatpush.bf16.msra.mxu0 %v1269
    %1735 = vmatpush.bf16.msra.mxu0 %v1265
    %1736 = vmatpush.bf16.msra.mxu0 %v1261
    %1737 = vmatpush.bf16.msra.mxu0 %v1257
    %1738 = vmatpush.bf16.msra.mxu0 %v1253
    %1739 = vmatpush.bf16.msra.mxu0 %v1249
    %1740 = vmatpush.bf16.msra.mxu0 %v1245
    %1741 = vmatpush.bf16.msra.mxu0 %v1241
    %1742 = vmatmul.bf16.gmra.mxu0 %v168
    %v1743 = vpop.f32.mrf.mxu0
    %v1744 = vadd.f32 %v1731, %v1743
    %v1745 = vpop.f32.mrf.mxu0
    %1746 = vdwg.mxu0
    %1747 = vmatpush.bf16.msra.mxu0 %v1301
    %1748 = vmatpush.bf16.msra.mxu0 %v1297
    %1749 = vmatpush.bf16.msra.mxu0 %v1293
    %1750 = vmatpush.bf16.msra.mxu0 %v1289
    %1751 = vmatpush.bf16.msra.mxu0 %v1285
    %1752 = vmatpush.bf16.msra.mxu0 %v1281
    %1753 = vmatpush.bf16.msra.mxu0 %v1277
    %1754 = vmatpush.bf16.msra.mxu0 %v1273
    %1755 = vmatmul.bf16.gmra.mxu0 %v169
    %v1756 = vpop.f32.mrf.mxu0
    %v1757 = vadd.f32 %v1744, %v1756
    %v1758 = vpop.f32.mrf.mxu0
    %1759 = vdwg.mxu0
    %1760 = vmatpush.bf16.msra.mxu0 %v1333
    %1761 = vmatpush.bf16.msra.mxu0 %v1329
    %1762 = vmatpush.bf16.msra.mxu0 %v1325
    %1763 = vmatpush.bf16.msra.mxu0 %v1321
    %1764 = vmatpush.bf16.msra.mxu0 %v1317
    %1765 = vmatpush.bf16.msra.mxu0 %v1313
    %1766 = vmatpush.bf16.msra.mxu0 %v1309
    %1767 = vmatpush.bf16.msra.mxu0 %v1305
    %1768 = vmatmul.bf16.gmra.mxu0 %v170
    %v1769 = vpop.f32.mrf.mxu0
    %v1770 = vadd.f32 %v1757, %v1769
    %v1771 = vpop.f32.mrf.mxu0
    %1772 = vdwg.mxu0
    %1773 = vmatpush.bf16.msra.mxu0 %v1365
    %1774 = vmatpush.bf16.msra.mxu0 %v1361
    %1775 = vmatpush.bf16.msra.mxu0 %v1357
    %1776 = vmatpush.bf16.msra.mxu0 %v1353
    %1777 = vmatpush.bf16.msra.mxu0 %v1349
    %1778 = vmatpush.bf16.msra.mxu0 %v1345
    %1779 = vmatpush.bf16.msra.mxu0 %v1341
    %1780 = vmatpush.bf16.msra.mxu0 %v1337
    %1781 = vmatmul.bf16.gmra.mxu0 %v171
    %v1782 = vpop.f32.mrf.mxu0
    %v1783 = vadd.f32 %v1770, %v1782
    %v1784 = vpop.f32.mrf.mxu0
    %1785 = vdwg.mxu0
    %1786 = vmatpush.bf16.msra.mxu0 %v1397
    %1787 = vmatpush.bf16.msra.mxu0 %v1393
    %1788 = vmatpush.bf16.msra.mxu0 %v1389
    %1789 = vmatpush.bf16.msra.mxu0 %v1385
    %1790 = vmatpush.bf16.msra.mxu0 %v1381
    %1791 = vmatpush.bf16.msra.mxu0 %v1377
    %1792 = vmatpush.bf16.msra.mxu0 %v1373
    %1793 = vmatpush.bf16.msra.mxu0 %v1369
    %1794 = vmatmul.bf16.gmra.mxu0 %v172
    %v1795 = vpop.f32.mrf.mxu0
    %v1796 = vadd.f32 %v1783, %v1795
    %v1797 = vpop.f32.mrf.mxu0
    %1798 = vdwg.mxu0
    %1799 = vmatpush.bf16.msra.mxu0 %v1429
    %1800 = vmatpush.bf16.msra.mxu0 %v1425
    %1801 = vmatpush.bf16.msra.mxu0 %v1421
    %1802 = vmatpush.bf16.msra.mxu0 %v1417
    %1803 = vmatpush.bf16.msra.mxu0 %v1413
    %1804 = vmatpush.bf16.msra.mxu0 %v1409
    %1805 = vmatpush.bf16.msra.mxu0 %v1405
    %1806 = vmatpush.bf16.msra.mxu0 %v1401
    %1807 = vmatmul.bf16.gmra.mxu0 %v173
    %v1808 = vpop.f32.mrf.mxu0
    %v1809 = vadd.f32 %v1796, %v1808
    %v1810 = vpop.f32.mrf.mxu0
    %1811 = vdwg.mxu0
    %1812 = vmatpush.bf16.msra.mxu0 %v1461
    %1813 = vmatpush.bf16.msra.mxu0 %v1457
    %1814 = vmatpush.bf16.msra.mxu0 %v1453
    %1815 = vmatpush.bf16.msra.mxu0 %v1449
    %1816 = vmatpush.bf16.msra.mxu0 %v1445
    %1817 = vmatpush.bf16.msra.mxu0 %v1441
    %1818 = vmatpush.bf16.msra.mxu0 %v1437
    %1819 = vmatpush.bf16.msra.mxu0 %v1433
    %1820 = vmatmul.bf16.gmra.mxu0 %v174
    %v1821 = vpop.f32.mrf.mxu0
    %v1822 = vadd.f32 %v1809, %v1821
    %v1823 = vpop.f32.mrf.mxu0
    %1824 = vdwg.mxu0
    %1825 = vmatpush.bf16.msra.mxu0 %v1238
    %1826 = vmatpush.bf16.msra.mxu0 %v1234
    %1827 = vmatpush.bf16.msra.mxu0 %v1230
    %1828 = vmatpush.bf16.msra.mxu0 %v1226
    %1829 = vmatpush.bf16.msra.mxu0 %v1222
    %1830 = vmatpush.bf16.msra.mxu0 %v1218
    %1831 = vmatpush.bf16.msra.mxu0 %v1214
    %1832 = vmatpush.bf16.msra.mxu0 %v1210
    %1833 = vmatmul.bf16.gmra.mxu0 %v167
    %v1834 = vpop.f32.mrf.mxu0
    %v1835 = vadd.f32 %v434, %v1834
    %v1836 = vpop.f32.mrf.mxu0
    %1837 = vdwg.mxu0
    %1838 = vmatpush.bf16.msra.mxu0 %v1270
    %1839 = vmatpush.bf16.msra.mxu0 %v1266
    %1840 = vmatpush.bf16.msra.mxu0 %v1262
    %1841 = vmatpush.bf16.msra.mxu0 %v1258
    %1842 = vmatpush.bf16.msra.mxu0 %v1254
    %1843 = vmatpush.bf16.msra.mxu0 %v1250
    %1844 = vmatpush.bf16.msra.mxu0 %v1246
    %1845 = vmatpush.bf16.msra.mxu0 %v1242
    %1846 = vmatmul.bf16.gmra.mxu0 %v168
    %v1847 = vpop.f32.mrf.mxu0
    %v1848 = vadd.f32 %v1835, %v1847
    %v1849 = vpop.f32.mrf.mxu0
    %1850 = vdwg.mxu0
    %1851 = vmatpush.bf16.msra.mxu0 %v1302
    %1852 = vmatpush.bf16.msra.mxu0 %v1298
    %1853 = vmatpush.bf16.msra.mxu0 %v1294
    %1854 = vmatpush.bf16.msra.mxu0 %v1290
    %1855 = vmatpush.bf16.msra.mxu0 %v1286
    %1856 = vmatpush.bf16.msra.mxu0 %v1282
    %1857 = vmatpush.bf16.msra.mxu0 %v1278
    %1858 = vmatpush.bf16.msra.mxu0 %v1274
    %1859 = vmatmul.bf16.gmra.mxu0 %v169
    %v1860 = vpop.f32.mrf.mxu0
    %v1861 = vadd.f32 %v1848, %v1860
    %v1862 = vpop.f32.mrf.mxu0
    %1863 = vdwg.mxu0
    %1864 = vmatpush.bf16.msra.mxu0 %v1334
    %1865 = vmatpush.bf16.msra.mxu0 %v1330
    %1866 = vmatpush.bf16.msra.mxu0 %v1326
    %1867 = vmatpush.bf16.msra.mxu0 %v1322
    %1868 = vmatpush.bf16.msra.mxu0 %v1318
    %1869 = vmatpush.bf16.msra.mxu0 %v1314
    %1870 = vmatpush.bf16.msra.mxu0 %v1310
    %1871 = vmatpush.bf16.msra.mxu0 %v1306
    %1872 = vmatmul.bf16.gmra.mxu0 %v170
    %v1873 = vpop.f32.mrf.mxu0
    %v1874 = vadd.f32 %v1861, %v1873
    %v1875 = vpop.f32.mrf.mxu0
    %1876 = vdwg.mxu0
    %1877 = vmatpush.bf16.msra.mxu0 %v1366
    %1878 = vmatpush.bf16.msra.mxu0 %v1362
    %1879 = vmatpush.bf16.msra.mxu0 %v1358
    %1880 = vmatpush.bf16.msra.mxu0 %v1354
    %1881 = vmatpush.bf16.msra.mxu0 %v1350
    %1882 = vmatpush.bf16.msra.mxu0 %v1346
    %1883 = vmatpush.bf16.msra.mxu0 %v1342
    %1884 = vmatpush.bf16.msra.mxu0 %v1338
    %1885 = vmatmul.bf16.gmra.mxu0 %v171
    %v1886 = vpop.f32.mrf.mxu0
    %v1887 = vadd.f32 %v1874, %v1886
    %v1888 = vpop.f32.mrf.mxu0
    %1889 = vdwg.mxu0
    %1890 = vmatpush.bf16.msra.mxu0 %v1398
    %1891 = vmatpush.bf16.msra.mxu0 %v1394
    %1892 = vmatpush.bf16.msra.mxu0 %v1390
    %1893 = vmatpush.bf16.msra.mxu0 %v1386
    %1894 = vmatpush.bf16.msra.mxu0 %v1382
    %1895 = vmatpush.bf16.msra.mxu0 %v1378
    %1896 = vmatpush.bf16.msra.mxu0 %v1374
    %1897 = vmatpush.bf16.msra.mxu0 %v1370
    %1898 = vmatmul.bf16.gmra.mxu0 %v172
    %v1899 = vpop.f32.mrf.mxu0
    %v1900 = vadd.f32 %v1887, %v1899
    %v1901 = vpop.f32.mrf.mxu0
    %1902 = vdwg.mxu0
    %1903 = vmatpush.bf16.msra.mxu0 %v1430
    %1904 = vmatpush.bf16.msra.mxu0 %v1426
    %1905 = vmatpush.bf16.msra.mxu0 %v1422
    %1906 = vmatpush.bf16.msra.mxu0 %v1418
    %1907 = vmatpush.bf16.msra.mxu0 %v1414
    %1908 = vmatpush.bf16.msra.mxu0 %v1410
    %1909 = vmatpush.bf16.msra.mxu0 %v1406
    %1910 = vmatpush.bf16.msra.mxu0 %v1402
    %1911 = vmatmul.bf16.gmra.mxu0 %v173
    %v1912 = vpop.f32.mrf.mxu0
    %v1913 = vadd.f32 %v1900, %v1912
    %v1914 = vpop.f32.mrf.mxu0
    %1915 = vdwg.mxu0
    %1916 = vmatpush.bf16.msra.mxu0 %v1462
    %1917 = vmatpush.bf16.msra.mxu0 %v1458
    %1918 = vmatpush.bf16.msra.mxu0 %v1454
    %1919 = vmatpush.bf16.msra.mxu0 %v1450
    %1920 = vmatpush.bf16.msra.mxu0 %v1446
    %1921 = vmatpush.bf16.msra.mxu0 %v1442
    %1922 = vmatpush.bf16.msra.mxu0 %v1438
    %1923 = vmatpush.bf16.msra.mxu0 %v1434
    %1924 = vmatmul.bf16.gmra.mxu0 %v174
    %v1925 = vpop.f32.mrf.mxu0
    %v1926 = vadd.f32 %v1913, %v1925
    %v1927 = vpop.f32.mrf.mxu0
    %1928 = vdwg.mxu0
    %1929 = vmatpush.bf16.msra.mxu0 %v1239
    %1930 = vmatpush.bf16.msra.mxu0 %v1235
    %1931 = vmatpush.bf16.msra.mxu0 %v1231
    %1932 = vmatpush.bf16.msra.mxu0 %v1227
    %1933 = vmatpush.bf16.msra.mxu0 %v1223
    %1934 = vmatpush.bf16.msra.mxu0 %v1219
    %1935 = vmatpush.bf16.msra.mxu0 %v1215
    %1936 = vmatpush.bf16.msra.mxu0 %v1211
    %1937 = vmatmul.bf16.gmra.mxu0 %v167
    %v1938 = vpop.f32.mrf.mxu0
    %v1939 = vadd.f32 %v435, %v1938
    %v1940 = vpop.f32.mrf.mxu0
    %1941 = vdwg.mxu0
    %1942 = vmatpush.bf16.msra.mxu0 %v1271
    %1943 = vmatpush.bf16.msra.mxu0 %v1267
    %1944 = vmatpush.bf16.msra.mxu0 %v1263
    %1945 = vmatpush.bf16.msra.mxu0 %v1259
    %1946 = vmatpush.bf16.msra.mxu0 %v1255
    %1947 = vmatpush.bf16.msra.mxu0 %v1251
    %1948 = vmatpush.bf16.msra.mxu0 %v1247
    %1949 = vmatpush.bf16.msra.mxu0 %v1243
    %1950 = vmatmul.bf16.gmra.mxu0 %v168
    %v1951 = vpop.f32.mrf.mxu0
    %v1952 = vadd.f32 %v1939, %v1951
    %v1953 = vpop.f32.mrf.mxu0
    %1954 = vdwg.mxu0
    %1955 = vmatpush.bf16.msra.mxu0 %v1303
    %1956 = vmatpush.bf16.msra.mxu0 %v1299
    %1957 = vmatpush.bf16.msra.mxu0 %v1295
    %1958 = vmatpush.bf16.msra.mxu0 %v1291
    %1959 = vmatpush.bf16.msra.mxu0 %v1287
    %1960 = vmatpush.bf16.msra.mxu0 %v1283
    %1961 = vmatpush.bf16.msra.mxu0 %v1279
    %1962 = vmatpush.bf16.msra.mxu0 %v1275
    %1963 = vmatmul.bf16.gmra.mxu0 %v169
    %v1964 = vpop.f32.mrf.mxu0
    %v1965 = vadd.f32 %v1952, %v1964
    %v1966 = vpop.f32.mrf.mxu0
    %1967 = vdwg.mxu0
    %1968 = vmatpush.bf16.msra.mxu0 %v1335
    %1969 = vmatpush.bf16.msra.mxu0 %v1331
    %1970 = vmatpush.bf16.msra.mxu0 %v1327
    %1971 = vmatpush.bf16.msra.mxu0 %v1323
    %1972 = vmatpush.bf16.msra.mxu0 %v1319
    %1973 = vmatpush.bf16.msra.mxu0 %v1315
    %1974 = vmatpush.bf16.msra.mxu0 %v1311
    %1975 = vmatpush.bf16.msra.mxu0 %v1307
    %1976 = vmatmul.bf16.gmra.mxu0 %v170
    %v1977 = vpop.f32.mrf.mxu0
    %v1978 = vadd.f32 %v1965, %v1977
    %v1979 = vpop.f32.mrf.mxu0
    %1980 = vdwg.mxu0
    %1981 = vmatpush.bf16.msra.mxu0 %v1367
    %1982 = vmatpush.bf16.msra.mxu0 %v1363
    %1983 = vmatpush.bf16.msra.mxu0 %v1359
    %1984 = vmatpush.bf16.msra.mxu0 %v1355
    %1985 = vmatpush.bf16.msra.mxu0 %v1351
    %1986 = vmatpush.bf16.msra.mxu0 %v1347
    %1987 = vmatpush.bf16.msra.mxu0 %v1343
    %1988 = vmatpush.bf16.msra.mxu0 %v1339
    %1989 = vmatmul.bf16.gmra.mxu0 %v171
    %v1990 = vpop.f32.mrf.mxu0
    %v1991 = vadd.f32 %v1978, %v1990
    %v1992 = vpop.f32.mrf.mxu0
    %1993 = vdwg.mxu0
    %1994 = vmatpush.bf16.msra.mxu0 %v1399
    %1995 = vmatpush.bf16.msra.mxu0 %v1395
    %1996 = vmatpush.bf16.msra.mxu0 %v1391
    %1997 = vmatpush.bf16.msra.mxu0 %v1387
    %1998 = vmatpush.bf16.msra.mxu0 %v1383
    %1999 = vmatpush.bf16.msra.mxu0 %v1379
    %2000 = vmatpush.bf16.msra.mxu0 %v1375
    %2001 = vmatpush.bf16.msra.mxu0 %v1371
    %2002 = vmatmul.bf16.gmra.mxu0 %v172
    %v2003 = vpop.f32.mrf.mxu0
    %v2004 = vadd.f32 %v1991, %v2003
    %v2005 = vpop.f32.mrf.mxu0
    %2006 = vdwg.mxu0
    %2007 = vmatpush.bf16.msra.mxu0 %v1431
    %2008 = vmatpush.bf16.msra.mxu0 %v1427
    %2009 = vmatpush.bf16.msra.mxu0 %v1423
    %2010 = vmatpush.bf16.msra.mxu0 %v1419
    %2011 = vmatpush.bf16.msra.mxu0 %v1415
    %2012 = vmatpush.bf16.msra.mxu0 %v1411
    %2013 = vmatpush.bf16.msra.mxu0 %v1407
    %2014 = vmatpush.bf16.msra.mxu0 %v1403
    %2015 = vmatmul.bf16.gmra.mxu0 %v173
    %v2016 = vpop.f32.mrf.mxu0
    %v2017 = vadd.f32 %v2004, %v2016
    %v2018 = vpop.f32.mrf.mxu0
    %2019 = vdwg.mxu0
    %2020 = vmatpush.bf16.msra.mxu0 %v1463
    %2021 = vmatpush.bf16.msra.mxu0 %v1459
    %2022 = vmatpush.bf16.msra.mxu0 %v1455
    %2023 = vmatpush.bf16.msra.mxu0 %v1451
    %2024 = vmatpush.bf16.msra.mxu0 %v1447
    %2025 = vmatpush.bf16.msra.mxu0 %v1443
    %2026 = vmatpush.bf16.msra.mxu0 %v1439
    %2027 = vmatpush.bf16.msra.mxu0 %v1435
    %2028 = vmatmul.bf16.gmra.mxu0 %v174
    %v2029 = vpop.f32.mrf.mxu0
    %v2030 = vadd.f32 %v2017, %v2029
    %v2031 = vpop.f32.mrf.mxu0
    %2032 = vdwg.mxu0
    %2033 = vmatpush.bf16.msra.mxu0 %v1240
    %2034 = vmatpush.bf16.msra.mxu0 %v1236
    %2035 = vmatpush.bf16.msra.mxu0 %v1232
    %2036 = vmatpush.bf16.msra.mxu0 %v1228
    %2037 = vmatpush.bf16.msra.mxu0 %v1224
    %2038 = vmatpush.bf16.msra.mxu0 %v1220
    %2039 = vmatpush.bf16.msra.mxu0 %v1216
    %2040 = vmatpush.bf16.msra.mxu0 %v1212
    %2041 = vmatmul.bf16.gmra.mxu0 %v167
    %v2042 = vpop.f32.mrf.mxu0
    %v2043 = vadd.f32 %v436, %v2042
    %v2044 = vpop.f32.mrf.mxu0
    %2045 = vdwg.mxu0
    %2046 = vmatpush.bf16.msra.mxu0 %v1272
    %2047 = vmatpush.bf16.msra.mxu0 %v1268
    %2048 = vmatpush.bf16.msra.mxu0 %v1264
    %2049 = vmatpush.bf16.msra.mxu0 %v1260
    %2050 = vmatpush.bf16.msra.mxu0 %v1256
    %2051 = vmatpush.bf16.msra.mxu0 %v1252
    %2052 = vmatpush.bf16.msra.mxu0 %v1248
    %2053 = vmatpush.bf16.msra.mxu0 %v1244
    %2054 = vmatmul.bf16.gmra.mxu0 %v168
    %v2055 = vpop.f32.mrf.mxu0
    %v2056 = vadd.f32 %v2043, %v2055
    %v2057 = vpop.f32.mrf.mxu0
    %2058 = vdwg.mxu0
    %2059 = vmatpush.bf16.msra.mxu0 %v1304
    %2060 = vmatpush.bf16.msra.mxu0 %v1300
    %2061 = vmatpush.bf16.msra.mxu0 %v1296
    %2062 = vmatpush.bf16.msra.mxu0 %v1292
    %2063 = vmatpush.bf16.msra.mxu0 %v1288
    %2064 = vmatpush.bf16.msra.mxu0 %v1284
    %2065 = vmatpush.bf16.msra.mxu0 %v1280
    %2066 = vmatpush.bf16.msra.mxu0 %v1276
    %2067 = vmatmul.bf16.gmra.mxu0 %v169
    %v2068 = vpop.f32.mrf.mxu0
    %v2069 = vadd.f32 %v2056, %v2068
    %v2070 = vpop.f32.mrf.mxu0
    %2071 = vdwg.mxu0
    %2072 = vmatpush.bf16.msra.mxu0 %v1336
    %2073 = vmatpush.bf16.msra.mxu0 %v1332
    %2074 = vmatpush.bf16.msra.mxu0 %v1328
    %2075 = vmatpush.bf16.msra.mxu0 %v1324
    %2076 = vmatpush.bf16.msra.mxu0 %v1320
    %2077 = vmatpush.bf16.msra.mxu0 %v1316
    %2078 = vmatpush.bf16.msra.mxu0 %v1312
    %2079 = vmatpush.bf16.msra.mxu0 %v1308
    %2080 = vmatmul.bf16.gmra.mxu0 %v170
    %v2081 = vpop.f32.mrf.mxu0
    %v2082 = vadd.f32 %v2069, %v2081
    %v2083 = vpop.f32.mrf.mxu0
    %2084 = vdwg.mxu0
    %2085 = vmatpush.bf16.msra.mxu0 %v1368
    %2086 = vmatpush.bf16.msra.mxu0 %v1364
    %2087 = vmatpush.bf16.msra.mxu0 %v1360
    %2088 = vmatpush.bf16.msra.mxu0 %v1356
    %2089 = vmatpush.bf16.msra.mxu0 %v1352
    %2090 = vmatpush.bf16.msra.mxu0 %v1348
    %2091 = vmatpush.bf16.msra.mxu0 %v1344
    %2092 = vmatpush.bf16.msra.mxu0 %v1340
    %2093 = vmatmul.bf16.gmra.mxu0 %v171
    %v2094 = vpop.f32.mrf.mxu0
    %v2095 = vadd.f32 %v2082, %v2094
    %v2096 = vpop.f32.mrf.mxu0
    %2097 = vdwg.mxu0
    %2098 = vmatpush.bf16.msra.mxu0 %v1400
    %2099 = vmatpush.bf16.msra.mxu0 %v1396
    %2100 = vmatpush.bf16.msra.mxu0 %v1392
    %2101 = vmatpush.bf16.msra.mxu0 %v1388
    %2102 = vmatpush.bf16.msra.mxu0 %v1384
    %2103 = vmatpush.bf16.msra.mxu0 %v1380
    %2104 = vmatpush.bf16.msra.mxu0 %v1376
    %2105 = vmatpush.bf16.msra.mxu0 %v1372
    %2106 = vmatmul.bf16.gmra.mxu0 %v172
    %v2107 = vpop.f32.mrf.mxu0
    %v2108 = vadd.f32 %v2095, %v2107
    %v2109 = vpop.f32.mrf.mxu0
    %2110 = vdwg.mxu0
    %2111 = vmatpush.bf16.msra.mxu0 %v1432
    %2112 = vmatpush.bf16.msra.mxu0 %v1428
    %2113 = vmatpush.bf16.msra.mxu0 %v1424
    %2114 = vmatpush.bf16.msra.mxu0 %v1420
    %2115 = vmatpush.bf16.msra.mxu0 %v1416
    %2116 = vmatpush.bf16.msra.mxu0 %v1412
    %2117 = vmatpush.bf16.msra.mxu0 %v1408
    %2118 = vmatpush.bf16.msra.mxu0 %v1404
    %2119 = vmatmul.bf16.gmra.mxu0 %v173
    %v2120 = vpop.f32.mrf.mxu0
    %v2121 = vadd.f32 %v2108, %v2120
    %v2122 = vpop.f32.mrf.mxu0
    %2123 = vdwg.mxu0
    %2124 = vmatpush.bf16.msra.mxu0 %v1464
    %2125 = vmatpush.bf16.msra.mxu0 %v1460
    %2126 = vmatpush.bf16.msra.mxu0 %v1456
    %2127 = vmatpush.bf16.msra.mxu0 %v1452
    %2128 = vmatpush.bf16.msra.mxu0 %v1448
    %2129 = vmatpush.bf16.msra.mxu0 %v1444
    %2130 = vmatpush.bf16.msra.mxu0 %v1440
    %2131 = vmatpush.bf16.msra.mxu0 %v1436
    %2132 = vmatmul.bf16.gmra.mxu0 %v174
    %v2133 = vpop.f32.mrf.mxu0
    %v2134 = vadd.f32 %v2121, %v2133
    %v2135 = vpop.f32.mrf.mxu0
    %2136 = vdwg.mxu0
    %vm2137 = vcmp.gt.f32.partialorder %v1822, 0.0
    %vm2138 = vcmp.gt.f32.partialorder %v1926, 0.0
    %vm2139 = vcmp.gt.f32.partialorder %v2030, 0.0
    %vm2140 = vcmp.gt.f32.partialorder %v2134, 0.0
    %v2141 = vmul.f32 %v1822, 0.1
    %v2142 = vmul.f32 %v1926, 0.1
    %v2143 = vmul.f32 %v2030, 0.1
    %v2144 = vmul.f32 %v2134, 0.1
    %v2145 = vsel %vm2137, %v1822, %v2141
    %v2146 = vsel %vm2138, %v1926, %v2142
    %v2147 = vsel %vm2139, %v2030, %v2143
    %v2148 = vsel %vm2140, %v2134, %v2144
    %v2149 = vpack.c.bf16 %v2145, %v2145
    %v2150 = vpack.c.bf16 %v2146, %v2146
    %v2151 = vpack.c.bf16 %v2147, %v2147
    %v2152 = vpack.c.bf16 %v2148, %v2148
    %v2153 = vld [vmem:[#allocation8] sm:$0xff]
    %v2154 = vld [vmem:[#allocation8 + $0x8] sm:$0xf]
    %v2155 = vld [vmem:[#allocation8 + $0xc] sm:$0xff]
    %v2156 = vld [vmem:[#allocation8 + $0x14] sm:$0xf]
    %v2157 = vld [vmem:[#allocation8 + $0x18] sm:$0xff]
    %v2158 = vld [vmem:[#allocation8 + $0x20] sm:$0xf]
    %v2159 = vld [vmem:[#allocation8 + $0x24] sm:$0xff]
    %v2160 = vld [vmem:[#allocation8 + $0x2c] sm:$0xf]
    %v2161 = vld [vmem:[#allocation8 + $0x30] sm:$0xff]
    %v2162 = vld [vmem:[#allocation8 + $0x38] sm:$0xf]
    %v2163 = vld [vmem:[#allocation8 + $0x3c] sm:$0xff]
    %v2164 = vld [vmem:[#allocation8 + $0x44] sm:$0xf]
    %v2165 = vld [vmem:[#allocation8 + $0x48] sm:$0xff]
    %v2166 = vld [vmem:[#allocation8 + $0x50] sm:$0xf]
    %v2167 = vld [vmem:[#allocation8 + $0x54] sm:$0xff]
    %v2168 = vld [vmem:[#allocation8 + $0x5c] sm:$0xf]
    %v2169 = vld [vmem:[#allocation8 + $0x60] sm:$0xff]
    %v2170 = vld [vmem:[#allocation8 + $0x68] sm:$0xf]
    %v2171 = vld [vmem:[#allocation8 + $0x6c] sm:$0xff]
    %v2172 = vld [vmem:[#allocation8 + $0x74] sm:$0xf]
    %v2173 = vld [vmem:[#allocation8 + $0x78] sm:$0xff]
    %v2174 = vld [vmem:[#allocation8 + $0x80] sm:$0xf]
    %v2175 = vld [vmem:[#allocation8 + $0x84] sm:$0xff]
    %v2176 = vld [vmem:[#allocation8 + $0x8c] sm:$0xf]
    %v2177 = vld [vmem:[#allocation8 + $0x90] sm:$0xff]
    %v2178 = vld [vmem:[#allocation8 + $0x98] sm:$0xf]
    %v2179 = vld [vmem:[#allocation8 + $0x9c] sm:$0xff]
    %v2180 = vld [vmem:[#allocation8 + $0xa4] sm:$0xf]
    %v2181 = vld [vmem:[#allocation8 + $0xa8] sm:$0xff]
    %v2182 = vld [vmem:[#allocation8 + $0xb0] sm:$0xf]
    %v2183 = vld [vmem:[#allocation8 + $0xb4] sm:$0xff]
    %v2184 = vld [vmem:[#allocation8 + $0xbc] sm:$0xf]
    %v2185 = vld [vmem:[#allocation8 + $0xc0] sm:$0xff]
    %v2186 = vld [vmem:[#allocation8 + $0xc8] sm:$0xf]
    %v2187 = vld [vmem:[#allocation8 + $0xcc] sm:$0xff]
    %v2188 = vld [vmem:[#allocation8 + $0xd4] sm:$0xf]
    %v2189 = vld [vmem:[#allocation8 + $0xd8] sm:$0xff]
    %v2190 = vld [vmem:[#allocation8 + $0xe0] sm:$0xf]
    %v2191 = vld [vmem:[#allocation8 + $0xe4] sm:$0xff]
    %v2192 = vld [vmem:[#allocation8 + $0xec] sm:$0xf]
    %v2193 = vld [vmem:[#allocation8 + $0xf0] sm:$0xff]
    %v2194 = vld [vmem:[#allocation8 + $0xf8] sm:$0xf]
    %v2195 = vld [vmem:[#allocation8 + $0xfc] sm:$0xff]
    %v2196 = vld [vmem:[#allocation8 + $0x104] sm:$0xf]
    %v2197 = vld [vmem:[#allocation8 + $0x108] sm:$0xff]
    %v2198 = vld [vmem:[#allocation8 + $0x110] sm:$0xf]
    %v2199 = vld [vmem:[#allocation8 + $0x114] sm:$0xff]
    %v2200 = vld [vmem:[#allocation8 + $0x11c] sm:$0xf]
    %v2201 = vld [vmem:[#allocation8 + $0x120] sm:$0xff]
    %v2202 = vld [vmem:[#allocation8 + $0x128] sm:$0xf]
    %v2203 = vld [vmem:[#allocation8 + $0x12c] sm:$0xff]
    %v2204 = vld [vmem:[#allocation8 + $0x134] sm:$0xf]
    %v2205 = vld [vmem:[#allocation8 + $0x138] sm:$0xff]
    %v2206 = vld [vmem:[#allocation8 + $0x140] sm:$0xf]
    %v2207 = vld [vmem:[#allocation8 + $0x144] sm:$0xff]
    %v2208 = vld [vmem:[#allocation8 + $0x14c] sm:$0xf]
    %v2209 = vld [vmem:[#allocation8 + $0x150] sm:$0xff]
    %v2210 = vld [vmem:[#allocation8 + $0x158] sm:$0xf]
    %v2211 = vld [vmem:[#allocation8 + $0x15c] sm:$0xff]
    %v2212 = vld [vmem:[#allocation8 + $0x164] sm:$0xf]
    %v2213 = vld [vmem:[#allocation8 + $0x168] sm:$0xff]
    %v2214 = vld [vmem:[#allocation8 + $0x170] sm:$0xf]
    %v2215 = vld [vmem:[#allocation8 + $0x174] sm:$0xff]
    %v2216 = vld [vmem:[#allocation8 + $0x17c] sm:$0xf]
    %v2217 = vld [vmem:[#allocation8 + $0x180] sm:$0xff]
    %v2218 = vld [vmem:[#allocation8 + $0x188] sm:$0xf]
    %v2219 = vld [vmem:[#allocation8 + $0x18c] sm:$0xff]
    %v2220 = vld [vmem:[#allocation8 + $0x194] sm:$0xf]
    %v2221 = vld [vmem:[#allocation8 + $0x198] sm:$0xff]
    %v2222 = vld [vmem:[#allocation8 + $0x1a0] sm:$0xf]
    %v2223 = vld [vmem:[#allocation8 + $0x1a4] sm:$0xff]
    %v2224 = vld [vmem:[#allocation8 + $0x1ac] sm:$0xf]
    %v2225 = vld [vmem:[#allocation8 + $0x1b0] sm:$0xff]
    %v2226 = vld [vmem:[#allocation8 + $0x1b8] sm:$0xf]
    %v2227 = vld [vmem:[#allocation8 + $0x1bc] sm:$0xff]
    %v2228 = vld [vmem:[#allocation8 + $0x1c4] sm:$0xf]
    %v2229 = vld [vmem:[#allocation8 + $0x1c8] sm:$0xff]
    %v2230 = vld [vmem:[#allocation8 + $0x1d0] sm:$0xf]
    %v2231 = vld [vmem:[#allocation8 + $0x1d4] sm:$0xff]
    %v2232 = vld [vmem:[#allocation8 + $0x1dc] sm:$0xf]
    %v2233 = vld [vmem:[#allocation8 + $0x1e0] sm:$0xff]
    %v2234 = vld [vmem:[#allocation8 + $0x1e8] sm:$0xf]
    %v2235 = vld [vmem:[#allocation8 + $0x1ec] sm:$0xff]
    %v2236 = vld [vmem:[#allocation8 + $0x1f4] sm:$0xf]
    %v2237 = vld [vmem:[#allocation8 + $0x1f8] sm:$0xff]
    %v2238 = vld [vmem:[#allocation8 + $0x200] sm:$0xf]
    %v2239 = vld [vmem:[#allocation8 + $0x204] sm:$0xff]
    %v2240 = vld [vmem:[#allocation8 + $0x20c] sm:$0xf]
    %v2241 = vld [vmem:[#allocation8 + $0x210] sm:$0xff]
    %v2242 = vld [vmem:[#allocation8 + $0x218] sm:$0xf]
    %v2243 = vld [vmem:[#allocation8 + $0x21c] sm:$0xff]
    %v2244 = vld [vmem:[#allocation8 + $0x224] sm:$0xf]
    %v2245 = vld [vmem:[#allocation8 + $0x228] sm:$0xff]
    %v2246 = vld [vmem:[#allocation8 + $0x230] sm:$0xf]
    %v2247 = vld [vmem:[#allocation8 + $0x234] sm:$0xff]
    %v2248 = vld [vmem:[#allocation8 + $0x23c] sm:$0xf]
    %v2249 = vld [vmem:[#allocation8 + $0x240] sm:$0xff]
    %v2250 = vld [vmem:[#allocation8 + $0x248] sm:$0xf]
    %v2251 = vld [vmem:[#allocation8 + $0x24c] sm:$0xff]
    %v2252 = vld [vmem:[#allocation8 + $0x254] sm:$0xf]
    %v2253 = vld [vmem:[#allocation8 + $0x258] sm:$0xff]
    %v2254 = vld [vmem:[#allocation8 + $0x260] sm:$0xf]
    %v2255 = vld [vmem:[#allocation8 + $0x264] sm:$0xff]
    %v2256 = vld [vmem:[#allocation8 + $0x26c] sm:$0xf]
    %v2257 = vld [vmem:[#allocation8 + $0x270] sm:$0xff]
    %v2258 = vld [vmem:[#allocation8 + $0x278] sm:$0xf]
    %v2259 = vld [vmem:[#allocation8 + $0x27c] sm:$0xff]
    %v2260 = vld [vmem:[#allocation8 + $0x284] sm:$0xf]
    %v2261 = vld [vmem:[#allocation8 + $0x288] sm:$0xff]
    %v2262 = vld [vmem:[#allocation8 + $0x290] sm:$0xf]
    %v2263 = vld [vmem:[#allocation8 + $0x294] sm:$0xff]
    %v2264 = vld [vmem:[#allocation8 + $0x29c] sm:$0xf]
    %v2265 = vld [vmem:[#allocation8 + $0x2a0] sm:$0xff]
    %v2266 = vld [vmem:[#allocation8 + $0x2a8] sm:$0xf]
    %v2267 = vld [vmem:[#allocation8 + $0x2ac] sm:$0xff]
    %v2268 = vld [vmem:[#allocation8 + $0x2b4] sm:$0xf]
    %v2269 = vld [vmem:[#allocation8 + $0x2b8] sm:$0xff]
    %v2270 = vld [vmem:[#allocation8 + $0x2c0] sm:$0xf]
    %v2271 = vld [vmem:[#allocation8 + $0x2c4] sm:$0xff]
    %v2272 = vld [vmem:[#allocation8 + $0x2cc] sm:$0xf]
    %v2273 = vld [vmem:[#allocation8 + $0x2d0] sm:$0xff]
    %v2274 = vld [vmem:[#allocation8 + $0x2d8] sm:$0xf]
    %v2275 = vld [vmem:[#allocation8 + $0x2dc] sm:$0xff]
    %v2276 = vld [vmem:[#allocation8 + $0x2e4] sm:$0xf]
    %v2277 = vld [vmem:[#allocation8 + $0x2e8] sm:$0xff]
    %v2278 = vld [vmem:[#allocation8 + $0x2f0] sm:$0xf]
    %v2279 = vld [vmem:[#allocation8 + $0x2f4] sm:$0xff]
    %v2280 = vld [vmem:[#allocation8 + $0x2fc] sm:$0xf]
    %v2281 = vld [vmem:[%s4] sm:$0x7]
    %v2283 = vperm.slane %v2281, 0
    %v2284 = vperm.slane %v2281, 1
    %v2285 = vperm.slane %v2281, 2
    %v2417 = vunpack.c.l.b16 %v2153
    %v2418 = vunpack.c.h.b16 %v2153
    %v2419 = vunpack.c.l.b16 %v2154
    %v2420 = vunpack.c.l.b16 %v2155
    %v2421 = vunpack.c.h.b16 %v2155
    %v2422 = vunpack.c.l.b16 %v2156
    %v2423 = vunpack.c.l.b16 %v2157
    %v2424 = vunpack.c.h.b16 %v2157
    %v2425 = vunpack.c.l.b16 %v2158
    %v2426 = vunpack.c.l.b16 %v2159
    %v2427 = vunpack.c.h.b16 %v2159
    %v2428 = vunpack.c.l.b16 %v2160
    %v2429 = vunpack.c.l.b16 %v2161
    %v2430 = vunpack.c.h.b16 %v2161
    %v2431 = vunpack.c.l.b16 %v2162
    %v2432 = vunpack.c.l.b16 %v2163
    %v2433 = vunpack.c.h.b16 %v2163
    %v2434 = vunpack.c.l.b16 %v2164
    %v2435 = vunpack.c.l.b16 %v2165
    %v2436 = vunpack.c.h.b16 %v2165
    %v2437 = vunpack.c.l.b16 %v2166
    %v2438 = vunpack.c.l.b16 %v2167
    %v2439 = vunpack.c.h.b16 %v2167
    %v2440 = vunpack.c.l.b16 %v2168
    %v2441 = vunpack.c.l.b16 %v2169
    %v2442 = vunpack.c.h.b16 %v2169
    %v2443 = vunpack.c.l.b16 %v2170
    %v2444 = vunpack.c.l.b16 %v2171
    %v2445 = vunpack.c.h.b16 %v2171
    %v2446 = vunpack.c.l.b16 %v2172
    %v2447 = vunpack.c.l.b16 %v2173
    %v2448 = vunpack.c.h.b16 %v2173
    %v2449 = vunpack.c.l.b16 %v2174
    %v2450 = vunpack.c.l.b16 %v2175
    %v2451 = vunpack.c.h.b16 %v2175
    %v2452 = vunpack.c.l.b16 %v2176
    %v2453 = vunpack.c.l.b16 %v2177
    %v2454 = vunpack.c.h.b16 %v2177
    %v2455 = vunpack.c.l.b16 %v2178
    %v2456 = vunpack.c.l.b16 %v2179
    %v2457 = vunpack.c.h.b16 %v2179
    %v2458 = vunpack.c.l.b16 %v2180
    %v2459 = vunpack.c.l.b16 %v2181
    %v2460 = vunpack.c.h.b16 %v2181
    %v2461 = vunpack.c.l.b16 %v2182
    %v2462 = vunpack.c.l.b16 %v2183
    %v2463 = vunpack.c.h.b16 %v2183
    %v2464 = vunpack.c.l.b16 %v2184
    %v2465 = vunpack.c.l.b16 %v2185
    %v2466 = vunpack.c.h.b16 %v2185
    %v2467 = vunpack.c.l.b16 %v2186
    %v2468 = vunpack.c.l.b16 %v2187
    %v2469 = vunpack.c.h.b16 %v2187
    %v2470 = vunpack.c.l.b16 %v2188
    %v2471 = vunpack.c.l.b16 %v2189
    %v2472 = vunpack.c.h.b16 %v2189
    %v2473 = vunpack.c.l.b16 %v2190
    %v2474 = vunpack.c.l.b16 %v2191
    %v2475 = vunpack.c.h.b16 %v2191
    %v2476 = vunpack.c.l.b16 %v2192
    %v2477 = vunpack.c.l.b16 %v2193
    %v2478 = vunpack.c.h.b16 %v2193
    %v2479 = vunpack.c.l.b16 %v2194
    %v2480 = vunpack.c.l.b16 %v2195
    %v2481 = vunpack.c.h.b16 %v2195
    %v2482 = vunpack.c.l.b16 %v2196
    %v2483 = vunpack.c.l.b16 %v2197
    %v2484 = vunpack.c.h.b16 %v2197
    %v2485 = vunpack.c.l.b16 %v2198
    %v2486 = vunpack.c.l.b16 %v2199
    %v2487 = vunpack.c.h.b16 %v2199
    %v2488 = vunpack.c.l.b16 %v2200
    %v2489 = vunpack.c.l.b16 %v2201
    %v2490 = vunpack.c.h.b16 %v2201
    %v2491 = vunpack.c.l.b16 %v2202
    %v2492 = vunpack.c.l.b16 %v2203
    %v2493 = vunpack.c.h.b16 %v2203
    %v2494 = vunpack.c.l.b16 %v2204
    %v2495 = vunpack.c.l.b16 %v2205
    %v2496 = vunpack.c.h.b16 %v2205
    %v2497 = vunpack.c.l.b16 %v2206
    %v2498 = vunpack.c.l.b16 %v2207
    %v2499 = vunpack.c.h.b16 %v2207
    %v2500 = vunpack.c.l.b16 %v2208
    %v2501 = vunpack.c.l.b16 %v2209
    %v2502 = vunpack.c.h.b16 %v2209
    %v2503 = vunpack.c.l.b16 %v2210
    %v2504 = vunpack.c.l.b16 %v2211
    %v2505 = vunpack.c.h.b16 %v2211
    %v2506 = vunpack.c.l.b16 %v2212
    %v2507 = vunpack.c.l.b16 %v2213
    %v2508 = vunpack.c.h.b16 %v2213
    %v2509 = vunpack.c.l.b16 %v2214
    %v2510 = vunpack.c.l.b16 %v2215
    %v2511 = vunpack.c.h.b16 %v2215
    %v2512 = vunpack.c.l.b16 %v2216
    %v2513 = vunpack.c.l.b16 %v2217
    %v2514 = vunpack.c.h.b16 %v2217
    %v2515 = vunpack.c.l.b16 %v2218
    %v2516 = vunpack.c.l.b16 %v2219
    %v2517 = vunpack.c.h.b16 %v2219
    %v2518 = vunpack.c.l.b16 %v2220
    %v2519 = vunpack.c.l.b16 %v2221
    %v2520 = vunpack.c.h.b16 %v2221
    %v2521 = vunpack.c.l.b16 %v2222
    %v2522 = vunpack.c.l.b16 %v2223
    %v2523 = vunpack.c.h.b16 %v2223
    %v2524 = vunpack.c.l.b16 %v2224
    %v2525 = vunpack.c.l.b16 %v2225
    %v2526 = vunpack.c.h.b16 %v2225
    %v2527 = vunpack.c.l.b16 %v2226
    %v2528 = vunpack.c.l.b16 %v2227
    %v2529 = vunpack.c.h.b16 %v2227
    %v2530 = vunpack.c.l.b16 %v2228
    %v2531 = vunpack.c.l.b16 %v2229
    %v2532 = vunpack.c.h.b16 %v2229
    %v2533 = vunpack.c.l.b16 %v2230
    %v2534 = vunpack.c.l.b16 %v2231
    %v2535 = vunpack.c.h.b16 %v2231
    %v2536 = vunpack.c.l.b16 %v2232
    %v2537 = vunpack.c.l.b16 %v2233
    %v2538 = vunpack.c.h.b16 %v2233
    %v2539 = vunpack.c.l.b16 %v2234
    %v2540 = vunpack.c.l.b16 %v2235
    %v2541 = vunpack.c.h.b16 %v2235
    %v2542 = vunpack.c.l.b16 %v2236
    %v2543 = vunpack.c.l.b16 %v2237
    %v2544 = vunpack.c.h.b16 %v2237
    %v2545 = vunpack.c.l.b16 %v2238
    %v2546 = vunpack.c.l.b16 %v2239
    %v2547 = vunpack.c.h.b16 %v2239
    %v2548 = vunpack.c.l.b16 %v2240
    %v2549 = vunpack.c.l.b16 %v2241
    %v2550 = vunpack.c.h.b16 %v2241
    %v2551 = vunpack.c.l.b16 %v2242
    %v2552 = vunpack.c.l.b16 %v2243
    %v2553 = vunpack.c.h.b16 %v2243
    %v2554 = vunpack.c.l.b16 %v2244
    %v2555 = vunpack.c.l.b16 %v2245
    %v2556 = vunpack.c.h.b16 %v2245
    %v2557 = vunpack.c.l.b16 %v2246
    %v2558 = vunpack.c.l.b16 %v2247
    %v2559 = vunpack.c.h.b16 %v2247
    %v2560 = vunpack.c.l.b16 %v2248
    %v2561 = vunpack.c.l.b16 %v2249
    %v2562 = vunpack.c.h.b16 %v2249
    %v2563 = vunpack.c.l.b16 %v2250
    %v2564 = vunpack.c.l.b16 %v2251
    %v2565 = vunpack.c.h.b16 %v2251
    %v2566 = vunpack.c.l.b16 %v2252
    %v2567 = vunpack.c.l.b16 %v2253
    %v2568 = vunpack.c.h.b16 %v2253
    %v2569 = vunpack.c.l.b16 %v2254
    %v2570 = vunpack.c.l.b16 %v2255
    %v2571 = vunpack.c.h.b16 %v2255
    %v2572 = vunpack.c.l.b16 %v2256
    %v2573 = vunpack.c.l.b16 %v2257
    %v2574 = vunpack.c.h.b16 %v2257
    %v2575 = vunpack.c.l.b16 %v2258
    %v2576 = vunpack.c.l.b16 %v2259
    %v2577 = vunpack.c.h.b16 %v2259
    %v2578 = vunpack.c.l.b16 %v2260
    %v2579 = vunpack.c.l.b16 %v2261
    %v2580 = vunpack.c.h.b16 %v2261
    %v2581 = vunpack.c.l.b16 %v2262
    %v2582 = vunpack.c.l.b16 %v2263
    %v2583 = vunpack.c.h.b16 %v2263
    %v2584 = vunpack.c.l.b16 %v2264
    %v2585 = vunpack.c.l.b16 %v2265
    %v2586 = vunpack.c.h.b16 %v2265
    %v2587 = vunpack.c.l.b16 %v2266
    %v2588 = vunpack.c.l.b16 %v2267
    %v2589 = vunpack.c.h.b16 %v2267
    %v2590 = vunpack.c.l.b16 %v2268
    %v2591 = vunpack.c.l.b16 %v2269
    %v2592 = vunpack.c.h.b16 %v2269
    %v2593 = vunpack.c.l.b16 %v2270
    %v2594 = vunpack.c.l.b16 %v2271
    %v2595 = vunpack.c.h.b16 %v2271
    %v2596 = vunpack.c.l.b16 %v2272
    %v2597 = vunpack.c.l.b16 %v2273
    %v2598 = vunpack.c.h.b16 %v2273
    %v2599 = vunpack.c.l.b16 %v2274
    %v2600 = vunpack.c.l.b16 %v2275
    %v2601 = vunpack.c.h.b16 %v2275
    %v2602 = vunpack.c.l.b16 %v2276
    %v2603 = vunpack.c.l.b16 %v2277
    %v2604 = vunpack.c.h.b16 %v2277
    %v2605 = vunpack.c.l.b16 %v2278
    %v2606 = vunpack.c.l.b16 %v2279
    %v2607 = vunpack.c.h.b16 %v2279
    %v2608 = vunpack.c.l.b16 %v2280
    %v2609 = vpack.c.b16 %v2420, %v2417
    %v2610 = vpack.c.b16 %v2421, %v2418
    %v2611 = vpack.c.b16 %v2422, %v2419
    %v2612 = vpack.c.b16 %v2426, %v2423
    %v2613 = vpack.c.b16 %v2427, %v2424
    %v2614 = vpack.c.b16 %v2428, %v2425
    %v2615 = vpack.c.b16 %v2432, %v2429
    %v2616 = vpack.c.b16 %v2433, %v2430
    %v2617 = vpack.c.b16 %v2434, %v2431
    %v2618 = vpack.c.b16 %v2438, %v2435
    %v2619 = vpack.c.b16 %v2439, %v2436
    %v2620 = vpack.c.b16 %v2440, %v2437
    %v2621 = vpack.c.b16 %v2444, %v2441
    %v2622 = vpack.c.b16 %v2445, %v2442
    %v2623 = vpack.c.b16 %v2446, %v2443
    %v2624 = vpack.c.b16 %v2450, %v2447
    %v2625 = vpack.c.b16 %v2451, %v2448
    %v2626 = vpack.c.b16 %v2452, %v2449
    %v2627 = vpack.c.b16 %v2456, %v2453
    %v2628 = vpack.c.b16 %v2457, %v2454
    %v2629 = vpack.c.b16 %v2458, %v2455
    %v2630 = vpack.c.b16 %v2462, %v2459
    %v2631 = vpack.c.b16 %v2463, %v2460
    %v2632 = vpack.c.b16 %v2464, %v2461
    %v2633 = vpack.c.b16 %v2468, %v2465
    %v2634 = vpack.c.b16 %v2469, %v2466
    %v2635 = vpack.c.b16 %v2470, %v2467
    %v2636 = vpack.c.b16 %v2474, %v2471
    %v2637 = vpack.c.b16 %v2475, %v2472
    %v2638 = vpack.c.b16 %v2476, %v2473
    %v2639 = vpack.c.b16 %v2480, %v2477
    %v2640 = vpack.c.b16 %v2481, %v2478
    %v2641 = vpack.c.b16 %v2482, %v2479
    %v2642 = vpack.c.b16 %v2486, %v2483
    %v2643 = vpack.c.b16 %v2487, %v2484
    %v2644 = vpack.c.b16 %v2488, %v2485
    %v2645 = vpack.c.b16 %v2492, %v2489
    %v2646 = vpack.c.b16 %v2493, %v2490
    %v2647 = vpack.c.b16 %v2494, %v2491
    %v2648 = vpack.c.b16 %v2498, %v2495
    %v2649 = vpack.c.b16 %v2499, %v2496
    %v2650 = vpack.c.b16 %v2500, %v2497
    %v2651 = vpack.c.b16 %v2504, %v2501
    %v2652 = vpack.c.b16 %v2505, %v2502
    %v2653 = vpack.c.b16 %v2506, %v2503
    %v2654 = vpack.c.b16 %v2510, %v2507
    %v2655 = vpack.c.b16 %v2511, %v2508
    %v2656 = vpack.c.b16 %v2512, %v2509
    %v2657 = vpack.c.b16 %v2516, %v2513
    %v2658 = vpack.c.b16 %v2517, %v2514
    %v2659 = vpack.c.b16 %v2518, %v2515
    %v2660 = vpack.c.b16 %v2522, %v2519
    %v2661 = vpack.c.b16 %v2523, %v2520
    %v2662 = vpack.c.b16 %v2524, %v2521
    %v2663 = vpack.c.b16 %v2528, %v2525
    %v2664 = vpack.c.b16 %v2529, %v2526
    %v2665 = vpack.c.b16 %v2530, %v2527
    %v2666 = vpack.c.b16 %v2534, %v2531
    %v2667 = vpack.c.b16 %v2535, %v2532
    %v2668 = vpack.c.b16 %v2536, %v2533
    %v2669 = vpack.c.b16 %v2540, %v2537
    %v2670 = vpack.c.b16 %v2541, %v2538
    %v2671 = vpack.c.b16 %v2542, %v2539
    %v2672 = vpack.c.b16 %v2546, %v2543
    %v2673 = vpack.c.b16 %v2547, %v2544
    %v2674 = vpack.c.b16 %v2548, %v2545
    %v2675 = vpack.c.b16 %v2552, %v2549
    %v2676 = vpack.c.b16 %v2553, %v2550
    %v2677 = vpack.c.b16 %v2554, %v2551
    %v2678 = vpack.c.b16 %v2558, %v2555
    %v2679 = vpack.c.b16 %v2559, %v2556
    %v2680 = vpack.c.b16 %v2560, %v2557
    %v2681 = vpack.c.b16 %v2564, %v2561
    %v2682 = vpack.c.b16 %v2565, %v2562
    %v2683 = vpack.c.b16 %v2566, %v2563
    %v2684 = vpack.c.b16 %v2570, %v2567
    %v2685 = vpack.c.b16 %v2571, %v2568
    %v2686 = vpack.c.b16 %v2572, %v2569
    %v2687 = vpack.c.b16 %v2576, %v2573
    %v2688 = vpack.c.b16 %v2577, %v2574
    %v2689 = vpack.c.b16 %v2578, %v2575
    %v2690 = vpack.c.b16 %v2582, %v2579
    %v2691 = vpack.c.b16 %v2583, %v2580
    %v2692 = vpack.c.b16 %v2584, %v2581
    %v2693 = vpack.c.b16 %v2588, %v2585
    %v2694 = vpack.c.b16 %v2589, %v2586
    %v2695 = vpack.c.b16 %v2590, %v2587
    %v2696 = vpack.c.b16 %v2594, %v2591
    %v2697 = vpack.c.b16 %v2595, %v2592
    %v2698 = vpack.c.b16 %v2596, %v2593
    %v2699 = vpack.c.b16 %v2600, %v2597
    %v2700 = vpack.c.b16 %v2601, %v2598
    %v2701 = vpack.c.b16 %v2602, %v2599
    %v2702 = vpack.c.b16 %v2606, %v2603
    %v2703 = vpack.c.b16 %v2607, %v2604
    %v2704 = vpack.c.b16 %v2608, %v2605
    %2801 = vmatpush.bf16.msra.mxu0 %v2630
    %2802 = vmatpush.bf16.msra.mxu0 %v2627
    %2803 = vmatpush.bf16.msra.mxu0 %v2624
    %2804 = vmatpush.bf16.msra.mxu0 %v2621
    %2805 = vmatpush.bf16.msra.mxu0 %v2618
    %2806 = vmatpush.bf16.msra.mxu0 %v2615
    %2807 = vmatpush.bf16.msra.mxu0 %v2612
    %2808 = vmatpush.bf16.msra.mxu0 %v2609
    %2809 = vmatmul.bf16.gmra.mxu0 %v2149
    %v2810 = vpop.f32.mrf.mxu0
    %v2811 = vadd.f32 %v2283, %v2810
    %v2812 = vpop.f32.mrf.mxu0
    %2813 = vdwg.mxu0
    %2814 = vmatpush.bf16.msra.mxu0 %v2654
    %2815 = vmatpush.bf16.msra.mxu0 %v2651
    %2816 = vmatpush.bf16.msra.mxu0 %v2648
    %2817 = vmatpush.bf16.msra.mxu0 %v2645
    %2818 = vmatpush.bf16.msra.mxu0 %v2642
    %2819 = vmatpush.bf16.msra.mxu0 %v2639
    %2820 = vmatpush.bf16.msra.mxu0 %v2636
    %2821 = vmatpush.bf16.msra.mxu0 %v2633
    %2822 = vmatmul.bf16.gmra.mxu0 %v2150
    %v2823 = vpop.f32.mrf.mxu0
    %v2824 = vadd.f32 %v2811, %v2823
    %v2825 = vpop.f32.mrf.mxu0
    %2826 = vdwg.mxu0
    %2827 = vmatpush.bf16.msra.mxu0 %v2678
    %2828 = vmatpush.bf16.msra.mxu0 %v2675
    %2829 = vmatpush.bf16.msra.mxu0 %v2672
    %2830 = vmatpush.bf16.msra.mxu0 %v2669
    %2831 = vmatpush.bf16.msra.mxu0 %v2666
    %2832 = vmatpush.bf16.msra.mxu0 %v2663
    %2833 = vmatpush.bf16.msra.mxu0 %v2660
    %2834 = vmatpush.bf16.msra.mxu0 %v2657
    %2835 = vmatmul.bf16.gmra.mxu0 %v2151
    %v2836 = vpop.f32.mrf.mxu0
    %v2837 = vadd.f32 %v2824, %v2836
    %v2838 = vpop.f32.mrf.mxu0
    %2839 = vdwg.mxu0
    %2840 = vmatpush.bf16.msra.mxu0 %v2702
    %2841 = vmatpush.bf16.msra.mxu0 %v2699
    %2842 = vmatpush.bf16.msra.mxu0 %v2696
    %2843 = vmatpush.bf16.msra.mxu0 %v2693
    %2844 = vmatpush.bf16.msra.mxu0 %v2690
    %2845 = vmatpush.bf16.msra.mxu0 %v2687
    %2846 = vmatpush.bf16.msra.mxu0 %v2684
    %2847 = vmatpush.bf16.msra.mxu0 %v2681
    %2848 = vmatmul.bf16.gmra.mxu0 %v2152
    %v2849 = vpop.f32.mrf.mxu0
    %v2850 = vadd.f32 %v2837, %v2849
    %v2851 = vpop.f32.mrf.mxu0
    %2852 = vdwg.mxu0
    %2853 = vmatpush.bf16.msra.mxu0 %v2631
    %2854 = vmatpush.bf16.msra.mxu0 %v2628
    %2855 = vmatpush.bf16.msra.mxu0 %v2625
    %2856 = vmatpush.bf16.msra.mxu0 %v2622
    %2857 = vmatpush.bf16.msra.mxu0 %v2619
    %2858 = vmatpush.bf16.msra.mxu0 %v2616
    %2859 = vmatpush.bf16.msra.mxu0 %v2613
    %2860 = vmatpush.bf16.msra.mxu0 %v2610
    %2861 = vmatmul.bf16.gmra.mxu0 %v2149
    %v2862 = vpop.f32.mrf.mxu0
    %v2863 = vadd.f32 %v2284, %v2862
    %v2864 = vpop.f32.mrf.mxu0
    %2865 = vdwg.mxu0
    %2866 = vmatpush.bf16.msra.mxu0 %v2655
    %2867 = vmatpush.bf16.msra.mxu0 %v2652
    %2868 = vmatpush.bf16.msra.mxu0 %v2649
    %2869 = vmatpush.bf16.msra.mxu0 %v2646
    %2870 = vmatpush.bf16.msra.mxu0 %v2643
    %2871 = vmatpush.bf16.msra.mxu0 %v2640
    %2872 = vmatpush.bf16.msra.mxu0 %v2637
    %2873 = vmatpush.bf16.msra.mxu0 %v2634
    %2874 = vmatmul.bf16.gmra.mxu0 %v2150
    %v2875 = vpop.f32.mrf.mxu0
    %v2876 = vadd.f32 %v2863, %v2875
    %v2877 = vpop.f32.mrf.mxu0
    %2878 = vdwg.mxu0
    %2879 = vmatpush.bf16.msra.mxu0 %v2679
    %2880 = vmatpush.bf16.msra.mxu0 %v2676
    %2881 = vmatpush.bf16.msra.mxu0 %v2673
    %2882 = vmatpush.bf16.msra.mxu0 %v2670
    %2883 = vmatpush.bf16.msra.mxu0 %v2667
    %2884 = vmatpush.bf16.msra.mxu0 %v2664
    %2885 = vmatpush.bf16.msra.mxu0 %v2661
    %2886 = vmatpush.bf16.msra.mxu0 %v2658
    %2887 = vmatmul.bf16.gmra.mxu0 %v2151
    %v2888 = vpop.f32.mrf.mxu0
    %v2889 = vadd.f32 %v2876, %v2888
    %v2890 = vpop.f32.mrf.mxu0
    %2891 = vdwg.mxu0
    %2892 = vmatpush.bf16.msra.mxu0 %v2703
    %2893 = vmatpush.bf16.msra.mxu0 %v2700
    %2894 = vmatpush.bf16.msra.mxu0 %v2697
    %2895 = vmatpush.bf16.msra.mxu0 %v2694
    %2896 = vmatpush.bf16.msra.mxu0 %v2691
    %2897 = vmatpush.bf16.msra.mxu0 %v2688
    %2898 = vmatpush.bf16.msra.mxu0 %v2685
    %2899 = vmatpush.bf16.msra.mxu0 %v2682
    %2900 = vmatmul.bf16.gmra.mxu0 %v2152
    %v2901 = vpop.f32.mrf.mxu0
    %v2902 = vadd.f32 %v2889, %v2901
    %v2903 = vpop.f32.mrf.mxu0
    %2904 = vdwg.mxu0
    %2905 = vmatpush.bf16.msra.mxu0 %v2632
    %2906 = vmatpush.bf16.msra.mxu0 %v2629
    %2907 = vmatpush.bf16.msra.mxu0 %v2626
    %2908 = vmatpush.bf16.msra.mxu0 %v2623
    %2909 = vmatpush.bf16.msra.mxu0 %v2620
    %2910 = vmatpush.bf16.msra.mxu0 %v2617
    %2911 = vmatpush.bf16.msra.mxu0 %v2614
    %2912 = vmatpush.bf16.msra.mxu0 %v2611
    %2913 = vmatmul.bf16.gmra.mxu0 %v2149
    %v2914 = vpop.f32.mrf.mxu0
    %v2915 = vadd.f32 %v2285, %v2914
    %v2916 = vpop.f32.mrf.mxu0
    %2917 = vdwg.mxu0
    %2918 = vmatpush.bf16.msra.mxu0 %v2656
    %2919 = vmatpush.bf16.msra.mxu0 %v2653
    %2920 = vmatpush.bf16.msra.mxu0 %v2650
    %2921 = vmatpush.bf16.msra.mxu0 %v2647
    %2922 = vmatpush.bf16.msra.mxu0 %v2644
    %2923 = vmatpush.bf16.msra.mxu0 %v2641
    %2924 = vmatpush.bf16.msra.mxu0 %v2638
    %2925 = vmatpush.bf16.msra.mxu0 %v2635
    %2926 = vmatmul.bf16.gmra.mxu0 %v2150
    %v2927 = vpop.f32.mrf.mxu0
    %v2928 = vadd.f32 %v2915, %v2927
    %v2929 = vpop.f32.mrf.mxu0
    %2930 = vdwg.mxu0
    %2931 = vmatpush.bf16.msra.mxu0 %v2680
    %2932 = vmatpush.bf16.msra.mxu0 %v2677
    %2933 = vmatpush.bf16.msra.mxu0 %v2674
    %2934 = vmatpush.bf16.msra.mxu0 %v2671
    %2935 = vmatpush.bf16.msra.mxu0 %v2668
    %2936 = vmatpush.bf16.msra.mxu0 %v2665
    %2937 = vmatpush.bf16.msra.mxu0 %v2662
    %2938 = vmatpush.bf16.msra.mxu0 %v2659
    %2939 = vmatmul.bf16.gmra.mxu0 %v2151
    %v2940 = vpop.f32.mrf.mxu0
    %v2941 = vadd.f32 %v2928, %v2940
    %v2942 = vpop.f32.mrf.mxu0
    %2943 = vdwg.mxu0
    %2944 = vmatpush.bf16.msra.mxu0 %v2704
    %2945 = vmatpush.bf16.msra.mxu0 %v2701
    %2946 = vmatpush.bf16.msra.mxu0 %v2698
    %2947 = vmatpush.bf16.msra.mxu0 %v2695
    %2948 = vmatpush.bf16.msra.mxu0 %v2692
    %2949 = vmatpush.bf16.msra.mxu0 %v2689
    %2950 = vmatpush.bf16.msra.mxu0 %v2686
    %2951 = vmatpush.bf16.msra.mxu0 %v2683
    %2952 = vmatmul.bf16.gmra.mxu0 %v2152
    %v2953 = vpop.f32.mrf.mxu0
    %v2954 = vadd.f32 %v2941, %v2953
    %v2955 = vpop.f32.mrf.mxu0
    %2956 = vdwg.mxu0
    %vm2957 = vcmp.gt.f32.partialorder %v2850, 0.0
    %vm2958 = vcmp.gt.f32.partialorder %v2902, 0.0
    %vm2959 = vcmp.gt.f32.partialorder %v2954, 0.0
    %v2960 = vmul.f32 %v2850, 0.1
    %v2961 = vmul.f32 %v2902, 0.1
    %v2962 = vmul.f32 %v2954, 0.1
    %v2963 = vsel %vm2957, %v2850, %v2960
    %v2964 = vsel %vm2958, %v2902, %v2961
    %v2965 = vsel %vm2959, %v2954, %v2962
    %v2966 = vpack.c.bf16 %v2963, %v2963
    %v2967 = vpack.c.bf16 %v2964, %v2964
    %v2968 = vpack.c.bf16 %v2965, %v2965
    %v2969 = vld [vmem:[#allocation10] sm:$0xff]
    %v2970 = vld [vmem:[#allocation10 + $0x8] sm:$0xff]
    %v2971 = vld [vmem:[#allocation10 + $0x10] sm:$0xff]
    %v2972 = vld [vmem:[#allocation10 + $0x18] sm:$0xff]
    %v2973 = vld [vmem:[#allocation10 + $0x20] sm:$0xff]
    %v2974 = vld [vmem:[#allocation10 + $0x28] sm:$0xff]
    %v2975 = vld [vmem:[#allocation10 + $0x30] sm:$0xff]
    %v2976 = vld [vmem:[#allocation10 + $0x38] sm:$0xff]
    %v2977 = vld [vmem:[#allocation10 + $0x40] sm:$0xff]
    %v2978 = vld [vmem:[#allocation10 + $0x48] sm:$0xff]
    %v2979 = vld [vmem:[#allocation10 + $0x50] sm:$0xff]
    %v2980 = vld [vmem:[#allocation10 + $0x58] sm:$0xff]
    %v2981 = vld [vmem:[#allocation10 + $0x60] sm:$0xff]
    %v2982 = vld [vmem:[#allocation10 + $0x68] sm:$0xff]
    %v2983 = vld [vmem:[#allocation10 + $0x70] sm:$0xff]
    %v2984 = vld [vmem:[#allocation10 + $0x78] sm:$0xff]
    %v2985 = vld [vmem:[#allocation10 + $0x80] sm:$0xff]
    %v2986 = vld [vmem:[#allocation10 + $0x88] sm:$0xff]
    %v2987 = vld [vmem:[#allocation10 + $0x90] sm:$0xff]
    %v2988 = vld [vmem:[#allocation10 + $0x98] sm:$0xff]
    %v2989 = vld [vmem:[#allocation10 + $0xa0] sm:$0xff]
    %v2990 = vld [vmem:[#allocation10 + $0xa8] sm:$0xff]
    %v2991 = vld [vmem:[#allocation10 + $0xb0] sm:$0xff]
    %v2992 = vld [vmem:[#allocation10 + $0xb8] sm:$0xff]
    %v2993 = vld [vmem:[#allocation10 + $0xc0] sm:$0xff]
    %v2994 = vld [vmem:[#allocation10 + $0xc8] sm:$0xff]
    %v2995 = vld [vmem:[#allocation10 + $0xd0] sm:$0xff]
    %v2996 = vld [vmem:[#allocation10 + $0xd8] sm:$0xff]
    %v2997 = vld [vmem:[#allocation10 + $0xe0] sm:$0xff]
    %v2998 = vld [vmem:[#allocation10 + $0xe8] sm:$0xff]
    %v2999 = vld [vmem:[#allocation10 + $0xf0] sm:$0xff]
    %v3000 = vld [vmem:[#allocation10 + $0xf8] sm:$0xff]
    %v3001 = vld [vmem:[#allocation10 + $0x100] sm:$0xff]
    %v3002 = vld [vmem:[#allocation10 + $0x108] sm:$0xff]
    %v3003 = vld [vmem:[#allocation10 + $0x110] sm:$0xff]
    %v3004 = vld [vmem:[#allocation10 + $0x118] sm:$0xff]
    %v3005 = vld [vmem:[#allocation10 + $0x120] sm:$0xff]
    %v3006 = vld [vmem:[#allocation10 + $0x128] sm:$0xff]
    %v3007 = vld [vmem:[#allocation10 + $0x130] sm:$0xff]
    %v3008 = vld [vmem:[#allocation10 + $0x138] sm:$0xff]
    %v3009 = vld [vmem:[#allocation10 + $0x140] sm:$0xff]
    %v3010 = vld [vmem:[#allocation10 + $0x148] sm:$0xff]
    %v3011 = vld [vmem:[#allocation10 + $0x150] sm:$0xff]
    %v3012 = vld [vmem:[#allocation10 + $0x158] sm:$0xff]
    %v3013 = vld [vmem:[#allocation10 + $0x160] sm:$0xff]
    %v3014 = vld [vmem:[#allocation10 + $0x168] sm:$0xff]
    %v3015 = vld [vmem:[#allocation10 + $0x170] sm:$0xff]
    %v3016 = vld [vmem:[#allocation10 + $0x178] sm:$0xff]
    %v3017 = vld [vmem:[%s6] sm:$0x3]
    %v3019 = vperm.slane %v3017, 0
    %v3020 = vperm.slane %v3017, 1
    %v3071 = vunpack.c.l.b16 %v2969
    %v3072 = vunpack.c.h.b16 %v2969
    %v3073 = vunpack.c.l.b16 %v2970
    %v3074 = vunpack.c.h.b16 %v2970
    %v3075 = vunpack.c.l.b16 %v2971
    %v3076 = vunpack.c.h.b16 %v2971
    %v3077 = vunpack.c.l.b16 %v2972
    %v3078 = vunpack.c.h.b16 %v2972
    %v3079 = vunpack.c.l.b16 %v2973
    %v3080 = vunpack.c.h.b16 %v2973
    %v3081 = vunpack.c.l.b16 %v2974
    %v3082 = vunpack.c.h.b16 %v2974
    %v3083 = vunpack.c.l.b16 %v2975
    %v3084 = vunpack.c.h.b16 %v2975
    %v3085 = vunpack.c.l.b16 %v2976
    %v3086 = vunpack.c.h.b16 %v2976
    %v3087 = vunpack.c.l.b16 %v2977
    %v3088 = vunpack.c.h.b16 %v2977
    %v3089 = vunpack.c.l.b16 %v2978
    %v3090 = vunpack.c.h.b16 %v2978
    %v3091 = vunpack.c.l.b16 %v2979
    %v3092 = vunpack.c.h.b16 %v2979
    %v3093 = vunpack.c.l.b16 %v2980
    %v3094 = vunpack.c.h.b16 %v2980
    %v3095 = vunpack.c.l.b16 %v2981
    %v3096 = vunpack.c.h.b16 %v2981
    %v3097 = vunpack.c.l.b16 %v2982
    %v3098 = vunpack.c.h.b16 %v2982
    %v3099 = vunpack.c.l.b16 %v2983
    %v3100 = vunpack.c.h.b16 %v2983
    %v3101 = vunpack.c.l.b16 %v2984
    %v3102 = vunpack.c.h.b16 %v2984
    %v3103 = vunpack.c.l.b16 %v2985
    %v3104 = vunpack.c.h.b16 %v2985
    %v3105 = vunpack.c.l.b16 %v2986
    %v3106 = vunpack.c.h.b16 %v2986
    %v3107 = vunpack.c.l.b16 %v2987
    %v3108 = vunpack.c.h.b16 %v2987
    %v3109 = vunpack.c.l.b16 %v2988
    %v3110 = vunpack.c.h.b16 %v2988
    %v3111 = vunpack.c.l.b16 %v2989
    %v3112 = vunpack.c.h.b16 %v2989
    %v3113 = vunpack.c.l.b16 %v2990
    %v3114 = vunpack.c.h.b16 %v2990
    %v3115 = vunpack.c.l.b16 %v2991
    %v3116 = vunpack.c.h.b16 %v2991
    %v3117 = vunpack.c.l.b16 %v2992
    %v3118 = vunpack.c.h.b16 %v2992
    %v3119 = vunpack.c.l.b16 %v2993
    %v3120 = vunpack.c.h.b16 %v2993
    %v3121 = vunpack.c.l.b16 %v2994
    %v3122 = vunpack.c.h.b16 %v2994
    %v3123 = vunpack.c.l.b16 %v2995
    %v3124 = vunpack.c.h.b16 %v2995
    %v3125 = vunpack.c.l.b16 %v2996
    %v3126 = vunpack.c.h.b16 %v2996
    %v3127 = vunpack.c.l.b16 %v2997
    %v3128 = vunpack.c.h.b16 %v2997
    %v3129 = vunpack.c.l.b16 %v2998
    %v3130 = vunpack.c.h.b16 %v2998
    %v3131 = vunpack.c.l.b16 %v2999
    %v3132 = vunpack.c.h.b16 %v2999
    %v3133 = vunpack.c.l.b16 %v3000
    %v3134 = vunpack.c.h.b16 %v3000
    %v3135 = vunpack.c.l.b16 %v3001
    %v3136 = vunpack.c.h.b16 %v3001
    %v3137 = vunpack.c.l.b16 %v3002
    %v3138 = vunpack.c.h.b16 %v3002
    %v3139 = vunpack.c.l.b16 %v3003
    %v3140 = vunpack.c.h.b16 %v3003
    %v3141 = vunpack.c.l.b16 %v3004
    %v3142 = vunpack.c.h.b16 %v3004
    %v3143 = vunpack.c.l.b16 %v3005
    %v3144 = vunpack.c.h.b16 %v3005
    %v3145 = vunpack.c.l.b16 %v3006
    %v3146 = vunpack.c.h.b16 %v3006
    %v3147 = vunpack.c.l.b16 %v3007
    %v3148 = vunpack.c.h.b16 %v3007
    %v3149 = vunpack.c.l.b16 %v3008
    %v3150 = vunpack.c.h.b16 %v3008
    %v3151 = vunpack.c.l.b16 %v3009
    %v3152 = vunpack.c.h.b16 %v3009
    %v3153 = vunpack.c.l.b16 %v3010
    %v3154 = vunpack.c.h.b16 %v3010
    %v3155 = vunpack.c.l.b16 %v3011
    %v3156 = vunpack.c.h.b16 %v3011
    %v3157 = vunpack.c.l.b16 %v3012
    %v3158 = vunpack.c.h.b16 %v3012
    %v3159 = vunpack.c.l.b16 %v3013
    %v3160 = vunpack.c.h.b16 %v3013
    %v3161 = vunpack.c.l.b16 %v3014
    %v3162 = vunpack.c.h.b16 %v3014
    %v3163 = vunpack.c.l.b16 %v3015
    %v3164 = vunpack.c.h.b16 %v3015
    %v3165 = vunpack.c.l.b16 %v3016
    %v3166 = vunpack.c.h.b16 %v3016
    %v3167 = vpack.c.b16 %v3073, %v3071
    %v3168 = vpack.c.b16 %v3074, %v3072
    %v3169 = vpack.c.b16 %v3077, %v3075
    %v3170 = vpack.c.b16 %v3078, %v3076
    %v3171 = vpack.c.b16 %v3081, %v3079
    %v3172 = vpack.c.b16 %v3082, %v3080
    %v3173 = vpack.c.b16 %v3085, %v3083
    %v3174 = vpack.c.b16 %v3086, %v3084
    %v3175 = vpack.c.b16 %v3089, %v3087
    %v3176 = vpack.c.b16 %v3090, %v3088
    %v3177 = vpack.c.b16 %v3093, %v3091
    %v3178 = vpack.c.b16 %v3094, %v3092
    %v3179 = vpack.c.b16 %v3097, %v3095
    %v3180 = vpack.c.b16 %v3098, %v3096
    %v3181 = vpack.c.b16 %v3101, %v3099
    %v3182 = vpack.c.b16 %v3102, %v3100
    %v3183 = vpack.c.b16 %v3105, %v3103
    %v3184 = vpack.c.b16 %v3106, %v3104
    %v3185 = vpack.c.b16 %v3109, %v3107
    %v3186 = vpack.c.b16 %v3110, %v3108
    %v3187 = vpack.c.b16 %v3113, %v3111
    %v3188 = vpack.c.b16 %v3114, %v3112
    %v3189 = vpack.c.b16 %v3117, %v3115
    %v3190 = vpack.c.b16 %v3118, %v3116
    %v3191 = vpack.c.b16 %v3121, %v3119
    %v3192 = vpack.c.b16 %v3122, %v3120
    %v3193 = vpack.c.b16 %v3125, %v3123
    %v3194 = vpack.c.b16 %v3126, %v3124
    %v3195 = vpack.c.b16 %v3129, %v3127
    %v3196 = vpack.c.b16 %v3130, %v3128
    %v3197 = vpack.c.b16 %v3133, %v3131
    %v3198 = vpack.c.b16 %v3134, %v3132
    %v3199 = vpack.c.b16 %v3137, %v3135
    %v3200 = vpack.c.b16 %v3138, %v3136
    %v3201 = vpack.c.b16 %v3141, %v3139
    %v3202 = vpack.c.b16 %v3142, %v3140
    %v3203 = vpack.c.b16 %v3145, %v3143
    %v3204 = vpack.c.b16 %v3146, %v3144
    %v3205 = vpack.c.b16 %v3149, %v3147
    %v3206 = vpack.c.b16 %v3150, %v3148
    %v3207 = vpack.c.b16 %v3153, %v3151
    %v3208 = vpack.c.b16 %v3154, %v3152
    %v3209 = vpack.c.b16 %v3157, %v3155
    %v3210 = vpack.c.b16 %v3158, %v3156
    %v3211 = vpack.c.b16 %v3161, %v3159
    %v3212 = vpack.c.b16 %v3162, %v3160
    %v3213 = vpack.c.b16 %v3165, %v3163
    %v3214 = vpack.c.b16 %v3166, %v3164
    %3263 = vmatpush.bf16.msra.mxu0 %v3181
    %3264 = vmatpush.bf16.msra.mxu0 %v3179
    %3265 = vmatpush.bf16.msra.mxu0 %v3177
    %3266 = vmatpush.bf16.msra.mxu0 %v3175
    %3267 = vmatpush.bf16.msra.mxu0 %v3173
    %3268 = vmatpush.bf16.msra.mxu0 %v3171
    %3269 = vmatpush.bf16.msra.mxu0 %v3169
    %3270 = vmatpush.bf16.msra.mxu0 %v3167
    %3271 = vmatmul.bf16.gmra.mxu0 %v2966
    %v3272 = vpop.f32.mrf.mxu0
    %v3273 = vadd.f32 %v3019, %v3272
    %v3274 = vpop.f32.mrf.mxu0
    %3275 = vdwg.mxu0
    %3276 = vmatpush.bf16.msra.mxu0 %v3197
    %3277 = vmatpush.bf16.msra.mxu0 %v3195
    %3278 = vmatpush.bf16.msra.mxu0 %v3193
    %3279 = vmatpush.bf16.msra.mxu0 %v3191
    %3280 = vmatpush.bf16.msra.mxu0 %v3189
    %3281 = vmatpush.bf16.msra.mxu0 %v3187
    %3282 = vmatpush.bf16.msra.mxu0 %v3185
    %3283 = vmatpush.bf16.msra.mxu0 %v3183
    %3284 = vmatmul.bf16.gmra.mxu0 %v2967
    %v3285 = vpop.f32.mrf.mxu0
    %v3286 = vadd.f32 %v3273, %v3285
    %v3287 = vpop.f32.mrf.mxu0
    %3288 = vdwg.mxu0
    %3289 = vmatpush.bf16.msra.mxu0 %v3213
    %3290 = vmatpush.bf16.msra.mxu0 %v3211
    %3291 = vmatpush.bf16.msra.mxu0 %v3209
    %3292 = vmatpush.bf16.msra.mxu0 %v3207
    %3293 = vmatpush.bf16.msra.mxu0 %v3205
    %3294 = vmatpush.bf16.msra.mxu0 %v3203
    %3295 = vmatpush.bf16.msra.mxu0 %v3201
    %3296 = vmatpush.bf16.msra.mxu0 %v3199
    %3297 = vmatmul.bf16.gmra.mxu0 %v2968
    %v3298 = vpop.f32.mrf.mxu0
    %v3299 = vadd.f32 %v3286, %v3298
    %v3300 = vpop.f32.mrf.mxu0
    %3301 = vdwg.mxu0
    %3302 = vmatpush.bf16.msra.mxu0 %v3182
    %3303 = vmatpush.bf16.msra.mxu0 %v3180
    %3304 = vmatpush.bf16.msra.mxu0 %v3178
    %3305 = vmatpush.bf16.msra.mxu0 %v3176
    %3306 = vmatpush.bf16.msra.mxu0 %v3174
    %3307 = vmatpush.bf16.msra.mxu0 %v3172
    %3308 = vmatpush.bf16.msra.mxu0 %v3170
    %3309 = vmatpush.bf16.msra.mxu0 %v3168
    %3310 = vmatmul.bf16.gmra.mxu0 %v2966
    %v3311 = vpop.f32.mrf.mxu0
    %v3312 = vadd.f32 %v3020, %v3311
    %v3313 = vpop.f32.mrf.mxu0
    %3314 = vdwg.mxu0
    %3315 = vmatpush.bf16.msra.mxu0 %v3198
    %3316 = vmatpush.bf16.msra.mxu0 %v3196
    %3317 = vmatpush.bf16.msra.mxu0 %v3194
    %3318 = vmatpush.bf16.msra.mxu0 %v3192
    %3319 = vmatpush.bf16.msra.mxu0 %v3190
    %3320 = vmatpush.bf16.msra.mxu0 %v3188
    %3321 = vmatpush.bf16.msra.mxu0 %v3186
    %3322 = vmatpush.bf16.msra.mxu0 %v3184
    %3323 = vmatmul.bf16.gmra.mxu0 %v2967
    %v3324 = vpop.f32.mrf.mxu0
    %v3325 = vadd.f32 %v3312, %v3324
    %v3326 = vpop.f32.mrf.mxu0
    %3327 = vdwg.mxu0
    %3328 = vmatpush.bf16.msra.mxu0 %v3214
    %3329 = vmatpush.bf16.msra.mxu0 %v3212
    %3330 = vmatpush.bf16.msra.mxu0 %v3210
    %3331 = vmatpush.bf16.msra.mxu0 %v3208
    %3332 = vmatpush.bf16.msra.mxu0 %v3206
    %3333 = vmatpush.bf16.msra.mxu0 %v3204
    %3334 = vmatpush.bf16.msra.mxu0 %v3202
    %3335 = vmatpush.bf16.msra.mxu0 %v3200
    %3336 = vmatmul.bf16.gmra.mxu0 %v2968
    %v3337 = vpop.f32.mrf.mxu0
    %v3338 = vadd.f32 %v3325, %v3337
    %v3339 = vpop.f32.mrf.mxu0
    %3340 = vdwg.mxu0
    %vm3341 = vcmp.gt.f32.partialorder %v3299, 0.0
    %vm3342 = vcmp.gt.f32.partialorder %v3338, 0.0
    %v3343 = vmul.f32 %v3299, 0.1
    %v3344 = vmul.f32 %v3338, 0.1
    %v3345 = vsel %vm3341, %v3299, %v3343
    %v3346 = vsel %vm3342, %v3338, %v3344
    %v3347 = vpack.c.bf16 %v3345, %v3345
    %v3348 = vpack.c.bf16 %v3346, %v3346
    %v3349 = vld [vmem:[#allocation11] sm:$0xff]
    %v3350 = vld [vmem:[#allocation11 + $0x8] sm:$0xff]
    %v3351 = vld [vmem:[#allocation11 + $0x10] sm:$0xff]
    %v3352 = vld [vmem:[#allocation11 + $0x18] sm:$0xff]
    %v3353 = vld [vmem:[#allocation11 + $0x20] sm:$0xff]
    %v3354 = vld [vmem:[#allocation11 + $0x28] sm:$0xff]
    %v3355 = vld [vmem:[#allocation11 + $0x30] sm:$0xff]
    %v3356 = vld [vmem:[#allocation11 + $0x38] sm:$0xff]
    %v3357 = vld [vmem:[#allocation11 + $0x40] sm:$0xff]
    %v3358 = vld [vmem:[#allocation11 + $0x48] sm:$0xff]
    %v3359 = vld [vmem:[#allocation11 + $0x50] sm:$0xff]
    %v3360 = vld [vmem:[#allocation11 + $0x58] sm:$0xff]
    %v3361 = vld [vmem:[#allocation11 + $0x60] sm:$0xff]
    %v3362 = vld [vmem:[#allocation11 + $0x68] sm:$0xff]
    %v3363 = vld [vmem:[#allocation11 + $0x70] sm:$0xff]
    %v3364 = vld [vmem:[#allocation11 + $0x78] sm:$0xff]
    %v3365 = vld [vmem:[#allocation11 + $0x80] sm:$0xff]
    %v3366 = vld [vmem:[#allocation11 + $0x88] sm:$0xff]
    %v3367 = vld [vmem:[#allocation11 + $0x90] sm:$0xff]
    %v3368 = vld [vmem:[#allocation11 + $0x98] sm:$0xff]
    %v3369 = vld [vmem:[#allocation11 + $0xa0] sm:$0xff]
    %v3370 = vld [vmem:[#allocation11 + $0xa8] sm:$0xff]
    %v3371 = vld [vmem:[#allocation11 + $0xb0] sm:$0xff]
    %v3372 = vld [vmem:[#allocation11 + $0xb8] sm:$0xff]
    %v3373 = vld [vmem:[#allocation11 + $0xc0] sm:$0xff]
    %v3374 = vld [vmem:[#allocation11 + $0xc8] sm:$0xff]
    %v3375 = vld [vmem:[#allocation11 + $0xd0] sm:$0xff]
    %v3376 = vld [vmem:[#allocation11 + $0xd8] sm:$0xff]
    %v3377 = vld [vmem:[#allocation11 + $0xe0] sm:$0xff]
    %v3378 = vld [vmem:[#allocation11 + $0xe8] sm:$0xff]
    %v3379 = vld [vmem:[#allocation11 + $0xf0] sm:$0xff]
    %v3380 = vld [vmem:[#allocation11 + $0xf8] sm:$0xff]
    %v3381 = vld [vmem:[%s8] sm:$0x3]
    %v3383 = vperm.slane %v3381, 0
    %v3384 = vperm.slane %v3381, 1
    %v3419 = vunpack.c.l.b16 %v3349
    %v3420 = vunpack.c.h.b16 %v3349
    %v3421 = vunpack.c.l.b16 %v3350
    %v3422 = vunpack.c.h.b16 %v3350
    %v3423 = vunpack.c.l.b16 %v3351
    %v3424 = vunpack.c.h.b16 %v3351
    %v3425 = vunpack.c.l.b16 %v3352
    %v3426 = vunpack.c.h.b16 %v3352
    %v3427 = vunpack.c.l.b16 %v3353
    %v3428 = vunpack.c.h.b16 %v3353
    %v3429 = vunpack.c.l.b16 %v3354
    %v3430 = vunpack.c.h.b16 %v3354
    %v3431 = vunpack.c.l.b16 %v3355
    %v3432 = vunpack.c.h.b16 %v3355
    %v3433 = vunpack.c.l.b16 %v3356
    %v3434 = vunpack.c.h.b16 %v3356
    %v3435 = vunpack.c.l.b16 %v3357
    %v3436 = vunpack.c.h.b16 %v3357
    %v3437 = vunpack.c.l.b16 %v3358
    %v3438 = vunpack.c.h.b16 %v3358
    %v3439 = vunpack.c.l.b16 %v3359
    %v3440 = vunpack.c.h.b16 %v3359
    %v3441 = vunpack.c.l.b16 %v3360
    %v3442 = vunpack.c.h.b16 %v3360
    %v3443 = vunpack.c.l.b16 %v3361
    %v3444 = vunpack.c.h.b16 %v3361
    %v3445 = vunpack.c.l.b16 %v3362
    %v3446 = vunpack.c.h.b16 %v3362
    %v3447 = vunpack.c.l.b16 %v3363
    %v3448 = vunpack.c.h.b16 %v3363
    %v3449 = vunpack.c.l.b16 %v3364
    %v3450 = vunpack.c.h.b16 %v3364
    %v3451 = vunpack.c.l.b16 %v3365
    %v3452 = vunpack.c.h.b16 %v3365
    %v3453 = vunpack.c.l.b16 %v3366
    %v3454 = vunpack.c.h.b16 %v3366
    %v3455 = vunpack.c.l.b16 %v3367
    %v3456 = vunpack.c.h.b16 %v3367
    %v3457 = vunpack.c.l.b16 %v3368
    %v3458 = vunpack.c.h.b16 %v3368
    %v3459 = vunpack.c.l.b16 %v3369
    %v3460 = vunpack.c.h.b16 %v3369
    %v3461 = vunpack.c.l.b16 %v3370
    %v3462 = vunpack.c.h.b16 %v3370
    %v3463 = vunpack.c.l.b16 %v3371
    %v3464 = vunpack.c.h.b16 %v3371
    %v3465 = vunpack.c.l.b16 %v3372
    %v3466 = vunpack.c.h.b16 %v3372
    %v3467 = vunpack.c.l.b16 %v3373
    %v3468 = vunpack.c.h.b16 %v3373
    %v3469 = vunpack.c.l.b16 %v3374
    %v3470 = vunpack.c.h.b16 %v3374
    %v3471 = vunpack.c.l.b16 %v3375
    %v3472 = vunpack.c.h.b16 %v3375
    %v3473 = vunpack.c.l.b16 %v3376
    %v3474 = vunpack.c.h.b16 %v3376
    %v3475 = vunpack.c.l.b16 %v3377
    %v3476 = vunpack.c.h.b16 %v3377
    %v3477 = vunpack.c.l.b16 %v3378
    %v3478 = vunpack.c.h.b16 %v3378
    %v3479 = vunpack.c.l.b16 %v3379
    %v3480 = vunpack.c.h.b16 %v3379
    %v3481 = vunpack.c.l.b16 %v3380
    %v3482 = vunpack.c.h.b16 %v3380
    %v3483 = vpack.c.b16 %v3421, %v3419
    %v3484 = vpack.c.b16 %v3422, %v3420
    %v3485 = vpack.c.b16 %v3425, %v3423
    %v3486 = vpack.c.b16 %v3426, %v3424
    %v3487 = vpack.c.b16 %v3429, %v3427
    %v3488 = vpack.c.b16 %v3430, %v3428
    %v3489 = vpack.c.b16 %v3433, %v3431
    %v3490 = vpack.c.b16 %v3434, %v3432
    %v3491 = vpack.c.b16 %v3437, %v3435
    %v3492 = vpack.c.b16 %v3438, %v3436
    %v3493 = vpack.c.b16 %v3441, %v3439
    %v3494 = vpack.c.b16 %v3442, %v3440
    %v3495 = vpack.c.b16 %v3445, %v3443
    %v3496 = vpack.c.b16 %v3446, %v3444
    %v3497 = vpack.c.b16 %v3449, %v3447
    %v3498 = vpack.c.b16 %v3450, %v3448
    %v3499 = vpack.c.b16 %v3453, %v3451
    %v3500 = vpack.c.b16 %v3454, %v3452
    %v3501 = vpack.c.b16 %v3457, %v3455
    %v3502 = vpack.c.b16 %v3458, %v3456
    %v3503 = vpack.c.b16 %v3461, %v3459
    %v3504 = vpack.c.b16 %v3462, %v3460
    %v3505 = vpack.c.b16 %v3465, %v3463
    %v3506 = vpack.c.b16 %v3466, %v3464
    %v3507 = vpack.c.b16 %v3469, %v3467
    %v3508 = vpack.c.b16 %v3470, %v3468
    %v3509 = vpack.c.b16 %v3473, %v3471
    %v3510 = vpack.c.b16 %v3474, %v3472
    %v3511 = vpack.c.b16 %v3477, %v3475
    %v3512 = vpack.c.b16 %v3478, %v3476
    %v3513 = vpack.c.b16 %v3481, %v3479
    %v3514 = vpack.c.b16 %v3482, %v3480
    %3547 = vmatpush.bf16.msra.mxu0 %v3497
    %3548 = vmatpush.bf16.msra.mxu0 %v3495
    %3549 = vmatpush.bf16.msra.mxu0 %v3493
    %3550 = vmatpush.bf16.msra.mxu0 %v3491
    %3551 = vmatpush.bf16.msra.mxu0 %v3489
    %3552 = vmatpush.bf16.msra.mxu0 %v3487
    %3553 = vmatpush.bf16.msra.mxu0 %v3485
    %3554 = vmatpush.bf16.msra.mxu0 %v3483
    %3555 = vmatmul.bf16.gmra.mxu0 %v3347
    %v3556 = vpop.f32.mrf.mxu0
    %v3557 = vadd.f32 %v3383, %v3556
    %v3558 = vpop.f32.mrf.mxu0
    %3559 = vdwg.mxu0
    %3560 = vmatpush.bf16.msra.mxu0 %v3513
    %3561 = vmatpush.bf16.msra.mxu0 %v3511
    %3562 = vmatpush.bf16.msra.mxu0 %v3509
    %3563 = vmatpush.bf16.msra.mxu0 %v3507
    %3564 = vmatpush.bf16.msra.mxu0 %v3505
    %3565 = vmatpush.bf16.msra.mxu0 %v3503
    %3566 = vmatpush.bf16.msra.mxu0 %v3501
    %3567 = vmatpush.bf16.msra.mxu0 %v3499
    %3568 = vmatmul.bf16.gmra.mxu0 %v3348
    %v3569 = vpop.f32.mrf.mxu0
    %v3570 = vadd.f32 %v3557, %v3569
    %v3571 = vpop.f32.mrf.mxu0
    %3572 = vdwg.mxu0
    %3573 = vmatpush.bf16.msra.mxu0 %v3498
    %3574 = vmatpush.bf16.msra.mxu0 %v3496
    %3575 = vmatpush.bf16.msra.mxu0 %v3494
    %3576 = vmatpush.bf16.msra.mxu0 %v3492
    %3577 = vmatpush.bf16.msra.mxu0 %v3490
    %3578 = vmatpush.bf16.msra.mxu0 %v3488
    %3579 = vmatpush.bf16.msra.mxu0 %v3486
    %3580 = vmatpush.bf16.msra.mxu0 %v3484
    %3581 = vmatmul.bf16.gmra.mxu0 %v3347
    %v3582 = vpop.f32.mrf.mxu0
    %v3583 = vadd.f32 %v3384, %v3582
    %v3584 = vpop.f32.mrf.mxu0
    %3585 = vdwg.mxu0
    %3586 = vmatpush.bf16.msra.mxu0 %v3514
    %3587 = vmatpush.bf16.msra.mxu0 %v3512
    %3588 = vmatpush.bf16.msra.mxu0 %v3510
    %3589 = vmatpush.bf16.msra.mxu0 %v3508
    %3590 = vmatpush.bf16.msra.mxu0 %v3506
    %3591 = vmatpush.bf16.msra.mxu0 %v3504
    %3592 = vmatpush.bf16.msra.mxu0 %v3502
    %3593 = vmatpush.bf16.msra.mxu0 %v3500
    %3594 = vmatmul.bf16.gmra.mxu0 %v3348
    %v3595 = vpop.f32.mrf.mxu0
    %v3596 = vadd.f32 %v3583, %v3595
    %v3597 = vpop.f32.mrf.mxu0
    %3598 = vdwg.mxu0
    %vm3599 = vcmp.gt.f32.partialorder %v3570, 0.0
    %vm3600 = vcmp.gt.f32.partialorder %v3596, 0.0
    %v3601 = vmul.f32 %v3570, 0.1
    %v3602 = vmul.f32 %v3596, 0.1
    %v3603 = vsel %vm3599, %v3570, %v3601
    %v3604 = vsel %vm3600, %v3596, %v3602
    %v3605 = vpack.c.bf16 %v3603, %v3603
    %v3606 = vpack.c.bf16 %v3604, %v3604
    %v3607 = vld [vmem:[#allocation13] sm:$0xf]
    %v3608 = vld [vmem:[#allocation13 + $0x4] sm:$0xf]
    %v3609 = vld [vmem:[#allocation13 + $0x8] sm:$0xf]
    %v3610 = vld [vmem:[#allocation13 + $0xc] sm:$0xf]
    %v3611 = vld [vmem:[#allocation13 + $0x10] sm:$0xf]
    %v3612 = vld [vmem:[#allocation13 + $0x14] sm:$0xf]
    %v3613 = vld [vmem:[#allocation13 + $0x18] sm:$0xf]
    %v3614 = vld [vmem:[#allocation13 + $0x1c] sm:$0xf]
    %v3615 = vld [vmem:[#allocation13 + $0x20] sm:$0xf]
    %v3616 = vld [vmem:[#allocation13 + $0x24] sm:$0xf]
    %v3617 = vld [vmem:[#allocation13 + $0x28] sm:$0xf]
    %v3618 = vld [vmem:[#allocation13 + $0x2c] sm:$0xf]
    %v3619 = vld [vmem:[#allocation13 + $0x30] sm:$0xf]
    %v3620 = vld [vmem:[#allocation13 + $0x34] sm:$0xf]
    %v3621 = vld [vmem:[#allocation13 + $0x38] sm:$0xf]
    %v3622 = vld [vmem:[#allocation13 + $0x3c] sm:$0xf]
    %v3623 = vld [vmem:[#allocation13 + $0x40] sm:$0xf]
    %v3624 = vld [vmem:[#allocation13 + $0x44] sm:$0xf]
    %v3625 = vld [vmem:[#allocation13 + $0x48] sm:$0xf]
    %v3626 = vld [vmem:[#allocation13 + $0x4c] sm:$0xf]
    %v3627 = vld [vmem:[#allocation13 + $0x50] sm:$0xf]
    %v3628 = vld [vmem:[#allocation13 + $0x54] sm:$0xf]
    %v3629 = vld [vmem:[#allocation13 + $0x58] sm:$0xf]
    %v3630 = vld [vmem:[#allocation13 + $0x5c] sm:$0xf]
    %v3631 = vld [vmem:[#allocation13 + $0x60] sm:$0xf]
    %v3632 = vld [vmem:[#allocation13 + $0x64] sm:$0xf]
    %v3633 = vld [vmem:[#allocation13 + $0x68] sm:$0xf]
    %v3634 = vld [vmem:[#allocation13 + $0x6c] sm:$0xf]
    %v3635 = vld [vmem:[#allocation13 + $0x70] sm:$0xf]
    %v3636 = vld [vmem:[#allocation13 + $0x74] sm:$0xf]
    %v3637 = vld [vmem:[#allocation13 + $0x78] sm:$0xf]
    %v3638 = vld [vmem:[#allocation13 + $0x7c] sm:$0xf]
    %v3639 = vld [vmem:[%s10] sm:$0x1]
    %v3641 = vperm.slane %v3639, 0
    %v3675 = vunpack.c.l.b16 %v3607
    %v3676 = vunpack.c.l.b16 %v3608
    %v3677 = vunpack.c.l.b16 %v3609
    %v3678 = vunpack.c.l.b16 %v3610
    %v3679 = vunpack.c.l.b16 %v3611
    %v3680 = vunpack.c.l.b16 %v3612
    %v3681 = vunpack.c.l.b16 %v3613
    %v3682 = vunpack.c.l.b16 %v3614
    %v3683 = vunpack.c.l.b16 %v3615
    %v3684 = vunpack.c.l.b16 %v3616
    %v3685 = vunpack.c.l.b16 %v3617
    %v3686 = vunpack.c.l.b16 %v3618
    %v3687 = vunpack.c.l.b16 %v3619
    %v3688 = vunpack.c.l.b16 %v3620
    %v3689 = vunpack.c.l.b16 %v3621
    %v3690 = vunpack.c.l.b16 %v3622
    %v3691 = vunpack.c.l.b16 %v3623
    %v3692 = vunpack.c.l.b16 %v3624
    %v3693 = vunpack.c.l.b16 %v3625
    %v3694 = vunpack.c.l.b16 %v3626
    %v3695 = vunpack.c.l.b16 %v3627
    %v3696 = vunpack.c.l.b16 %v3628
    %v3697 = vunpack.c.l.b16 %v3629
    %v3698 = vunpack.c.l.b16 %v3630
    %v3699 = vunpack.c.l.b16 %v3631
    %v3700 = vunpack.c.l.b16 %v3632
    %v3701 = vunpack.c.l.b16 %v3633
    %v3702 = vunpack.c.l.b16 %v3634
    %v3703 = vunpack.c.l.b16 %v3635
    %v3704 = vunpack.c.l.b16 %v3636
    %v3705 = vunpack.c.l.b16 %v3637
    %v3706 = vunpack.c.l.b16 %v3638
    %v3707 = vpack.c.b16 %v3676, %v3675
    %v3708 = vpack.c.b16 %v3678, %v3677
    %v3709 = vpack.c.b16 %v3680, %v3679
    %v3710 = vpack.c.b16 %v3682, %v3681
    %v3711 = vpack.c.b16 %v3684, %v3683
    %v3712 = vpack.c.b16 %v3686, %v3685
    %v3713 = vpack.c.b16 %v3688, %v3687
    %v3714 = vpack.c.b16 %v3690, %v3689
    %v3715 = vpack.c.b16 %v3692, %v3691
    %v3716 = vpack.c.b16 %v3694, %v3693
    %v3717 = vpack.c.b16 %v3696, %v3695
    %v3718 = vpack.c.b16 %v3698, %v3697
    %v3719 = vpack.c.b16 %v3700, %v3699
    %v3720 = vpack.c.b16 %v3702, %v3701
    %v3721 = vpack.c.b16 %v3704, %v3703
    %v3722 = vpack.c.b16 %v3706, %v3705
    %3739 = vmatpush.bf16.msra.mxu0 %v3714
    %3740 = vmatpush.bf16.msra.mxu0 %v3713
    %3741 = vmatpush.bf16.msra.mxu0 %v3712
    %3742 = vmatpush.bf16.msra.mxu0 %v3711
    %3743 = vmatpush.bf16.msra.mxu0 %v3710
    %3744 = vmatpush.bf16.msra.mxu0 %v3709
    %3745 = vmatpush.bf16.msra.mxu0 %v3708
    %3746 = vmatpush.bf16.msra.mxu0 %v3707
    %3747 = vmatmul.bf16.gmra.mxu0 %v3605
    %v3748 = vpop.f32.mrf.mxu0
    %v3749 = vadd.f32 %v3641, %v3748
    %v3750 = vpop.f32.mrf.mxu0
    %3751 = vdwg.mxu0
    %3752 = vmatpush.bf16.msra.mxu0 %v3722
    %3753 = vmatpush.bf16.msra.mxu0 %v3721
    %3754 = vmatpush.bf16.msra.mxu0 %v3720
    %3755 = vmatpush.bf16.msra.mxu0 %v3719
    %3756 = vmatpush.bf16.msra.mxu0 %v3718
    %3757 = vmatpush.bf16.msra.mxu0 %v3717
    %3758 = vmatpush.bf16.msra.mxu0 %v3716
    %3759 = vmatpush.bf16.msra.mxu0 %v3715
    %3760 = vmatmul.bf16.gmra.mxu0 %v3606
    %v3761 = vpop.f32.mrf.mxu0
    %v3762 = vadd.f32 %v3749, %v3761
    %v3763 = vpop.f32.mrf.mxu0
    %3764 = vdwg.mxu0
    %3765 = vst [vmem:[#allocation14] sm:$0x3] %v3762
    // Predicated region
    $region74: #{tpu_custom_call.1} parent=1 // pred_check
      _
    $region75: #{tpu_custom_call.1} parent=1 // pred_check_branch
      %3767 = sbr.rel (0) target = $region77
    $region76: #{tpu_custom_call.1} parent=1 // pred_region
      %3769 = vsyncadd [#allocation4], 0
      %s3771 = sshll.u32 [#allocation14], 4
      %s3772 = int_to_ptr.vmem [resolvable:$true] %s3771
      %s3773 = sshll.u32 %s11, 4
      %s3774 = int_to_ptr.hbm [resolvable:$true] %s3773
      %3776 = dma.vmem_to_hbm [thread:$0]  %s3772, 32, %s3774, [#allocation4]
    $region77: #{tpu_custom_call.1} parent=1 // pred_fallthru
      _
    // Predicated region
    $region78: #{tpu_custom_call.1} parent=1 // pred_check
      _
    $region79: #{tpu_custom_call.1} parent=1 // pred_check_branch
      %3778 = sbr.rel (0) target = $region81
    $region80: #{tpu_custom_call.1} parent=1 // pred_region
      %3780 = dma.done [#allocation4], 32
    $region81: #{tpu_custom_call.1} parent=1 // pred_fallthru
      _
    %3781 = vsyncpa [#allocation3], 1
    %3782 = vsyncpa [#allocation6], 1
    %3783 = vsyncpa [#allocation9], 1
    %3784 = vsyncpa [#allocation12], 1
    %3785 = vsyncpa [#allocation4], 1

</llo_original>
